<compile_context>
chip_gen: v7x
topology: tpu7x:2x2x1
jax: 0.10.0
libtpu: 0.0.40
codegen_flags: <defaults>
</compile_context>

<pallas_src>
import functools

import jax
import jax.numpy as jnp
from jax import lax
from jax.experimental import pallas as pl
from jax.experimental.pallas import tpu as pltpu


# ----------------------------- Pallas kernels ------------------------------ #

def conv1_fused_kernel(xp_ref, mask_ref, s1_ref, b1_ref, w_ref, b2_ref,
                       o_ref, a_scr, *, wp):
    """Fused BN1 -> ReLU -> 3x3 conv (implicit im2col, 9 taps) -> BN2 -> ReLU.

    xp:   (Cin, Nin)  bf16  zero-padded, flattened, channel-major input
    mask: (1, Nin)    f32   1 on real pixels, 0 on padding (re-zero after ReLU)
    w:    (9, Cout, Cin) bf16   BN2 scale pre-folded per output channel
    s1,b1:(Cin, 1) f32      b2: (Cout, 1) f32
    o:    (Cout, Nout) bf16     a_scr: (Cin, Nin) bf16 VMEM scratch
    """
    # Prologue: BN1 + ReLU in f32, re-zero the conv padding, store bf16 once.
    x = xp_ref[...].astype(jnp.float32)
    a = jnp.maximum(x * s1_ref[...] + b1_ref[...], 0.0) * mask_ref[...]
    a_scr[...] = a.astype(a_scr.dtype)

    n_out = o_ref.shape[1]
    acc = jnp.zeros(o_ref.shape, jnp.float32)
    for t in range(9):                        # static unroll: 9 MXU GEMMs
        dh, dw = divmod(t, 3)
        rhs = a_scr[:, pl.ds(dh * wp + dw, n_out)]      # flat-shifted view
        acc = acc + jnp.dot(w_ref[t], rhs, preferred_element_type=jnp.float32)
    # Epilogue: BN2 shift (scale already folded into w) + ReLU.
    o_ref[...] = jnp.maximum(acc + b2_ref[...], 0.0).astype(o_ref.dtype)


def conv2_fused_kernel(hp_ref, xs_ref, w2_ref, ws_ref, b3_ref, o_ref, *, wp):
    """Fused 3x3 conv (implicit im2col) + 1x1 shortcut (BN3 folded) + residual.

    hp: (Cout, Nin) bf16  zero-padded conv1 output      w2: (9, Cout, Cout) bf16
    xs: (Cin, Nout) bf16  strided input (padded coords) ws: (Cout, Cin) bf16
    b3: (Cout, 1)  f32
    o:  (Cout, Nout) bf16  == conv2(h) + bn3(conv1x1_stride(x))
    """
    n_out = o_ref.shape[1]
    # Shortcut + BN3 shift seeds the accumulator (residual add fused in).
    acc = jnp.dot(ws_ref[...], xs_ref[...],
                  preferred_element_type=jnp.float32) + b3_ref[...]
    for t in range(9):
        dh, dw = divmod(t, 3)
        rhs = hp_ref[:, pl.ds(dh * wp + dw, n_out)]
        acc = acc + jnp.dot(w2_ref[t], rhs, preferred_element_type=jnp.float32)
    o_ref[...] = acc.astype(o_ref.dtype)


def se_kernel(y_ref, w1_ref, w2_ref, o_ref):
    """Squeeze-Excitation: o = y * sigmoid(relu(mean_P(y) @ w1) @ w2)."""
    y = y_ref[...].astype(jnp.float32)                  # (B, C, P)
    pooled = jnp.mean(y, axis=-1)                       # (B, C)  lane reduce
    h = jnp.maximum(jnp.dot(pooled, w1_ref[...],
                            preferred_element_type=jnp.float32), 0.0)
    s = jax.nn.sigmoid(jnp.dot(h, w2_ref[...],
                               preferred_element_type=jnp.float32))
    o_ref[...] = y * s[:, :, None]


# ------------------------------ host wrapper -------------------------------- #

def _round_up(n, m):
    return (n + m - 1) // m * m


def _bn_affine(gamma, beta, mean, var, eps=1e-5):
    # TODO(synk): training-mode BatchNorm (batch statistics + running-stat
    # updates) is not implemented; inference-mode affine BN is used.
    scale = gamma / jnp.sqrt(var + eps)
    shift = beta - mean * scale
    return (scale.reshape(-1, 1).astype(jnp.float32),
            shift.reshape(-1, 1).astype(jnp.float32))


@functools.partial(jax.jit, static_argnames=("stride",))
def resnet_block_forward(x, params, *, stride):
    """x: (B, in_c, H, W) f32.  Returns (B, out_c, Ho, Wo) f32."""
    f32, bf16 = jnp.float32, jnp.bfloat16
    B, Cin, H, W = x.shape
    Cout = params["conv1_w"].shape[0]

    s1, b1 = _bn_affine(*params["bn1"])
    s2, b2 = _bn_affine(*params["bn2"])
    s3, b3 = _bn_affine(*params["bn3"])

    # ---------- kernel 1: BN1+ReLU -> conv3x3 -> BN2+ReLU (fused) -----------
    # TODO(synk): stride > 1 is handled by computing conv1 densely and
    # subsampling afterwards (s^2 extra MXU work on conv1 only); production
    # kernels should use a polyphase input split or strided pl.ds loads.
    Hp1, Wp1 = H + 2, W + 2
    n1_out = B * Hp1 * Wp1
    n1_in = _round_up(n1_out + 2 * Wp1 + 2, 128)

    xp = jnp.pad(x, ((0, 0), (0, 0), (1, 1), (1, 1)))            # zero pad
    xp = xp.transpose(1, 0, 2, 3).reshape(Cin, n1_out)           # chan-major flat
    xp = jnp.pad(xp, ((0, 0), (0, n1_in - n1_out))).astype(bf16)

    mask = jnp.pad(jnp.ones((1, 1, H, W), f32), ((0, 0), (0, 0), (1, 1), (1, 1)))
    mask = jnp.broadcast_to(mask, (1, B, Hp1, Wp1)).reshape(1, n1_out)
    mask = jnp.pad(mask, ((0, 0), (0, n1_in - n1_out)))

    # BN2 scale folded into conv1 weights; taps laid out (9, Cout, Cin).
    w1t = params["conv1_w"] * s2.reshape(Cout, 1, 1, 1)
    w1t = w1t.transpose(2, 3, 0, 1).reshape(9, Cout, Cin).astype(bf16)

    h_flat = pl.pallas_call(
        functools.partial(conv1_fused_kernel, wp=Wp1),
        out_shape=jax.ShapeDtypeStruct((Cout, n1_out), bf16),
        scratch_shapes=[pltpu.VMEM((Cin, n1_in), bf16)],
    )(xp, mask, s1, b1, w1t, b2)

    # Extract valid region and apply the conv1 stride.
    h = h_flat.reshape(Cout, B, Hp1, Wp1)[:, :, :H, :W]
    h = h[:, :, ::stride, ::stride]                              # (Cout,B,Ho,Wo)
    Ho, Wo = h.shape[2], h.shape[3]

    # ---------- kernel 2: conv3x3 + 1x1 shortcut (BN3) + residual add -------
    Hp2, Wp2 = Ho + 2, Wo + 2
    n2_out = B * Hp2 * Wp2
    n2_in = _round_up(n2_out + 2 * Wp2 + 2, 128)

    hp = jnp.pad(h, ((0, 0), (0, 0), (1, 1), (1, 1))).reshape(Cout, n2_out)
    hp = jnp.pad(hp, ((0, 0), (0, n2_in - n2_out)))

    w2t = params["conv2_w"].transpose(2, 3, 0, 1).reshape(9, Cout, Cout).astype(bf16)

    # Shortcut operand: strided input laid out in conv2's padded coordinates.
    xs = x[:, :, ::stride, ::stride].transpose(1, 0, 2, 3)       # (Cin,B,Ho,Wo)
    xs = jnp.pad(xs, ((0, 0), (0, 0), (0, Hp2 - Ho), (0, Wp2 - Wo)))
    xs = xs.reshape(Cin, n2_out).astype(bf16)
    ws = (params["convs_w"].reshape(Cout, Cin) * s3).astype(bf16)

    y_flat = pl.pallas_call(
        functools.partial(conv2_fused_kernel, wp=Wp2),
        out_shape=jax.ShapeDtypeStruct((Cout, n2_out), bf16),
    )(hp, xs, w2t, ws, b3)

    # ---------- kernel 3: Squeeze-Excitation on the compact activation ------
    P = Ho * Wo
    y = y_flat.reshape(Cout, B, Hp2, Wp2)[:, :, :Ho, :Wo]
    y = y.transpose(1, 0, 2, 3).reshape(B, Cout, P)              # batch-major

    se_w1 = params["se_w1"].T.astype(f32)   # PyTorch Linear stores (out, in)
    se_w2 = params["se_w2"].T.astype(f32)
    out = pl.pallas_call(
        se_kernel,
        out_shape=jax.ShapeDtypeStruct((B, Cout, P), f32),
    )(y, se_w1, se_w2)
    return out.reshape(B, Cout, Ho, Wo)


# ------------------------------ pure-JAX ref -------------------------------- #

def reference_forward(x, params, stride):
    dn = ("NCHW", "OIHW", "NCHW")
    hp = lax.Precision.HIGHEST

    def bn(y, gamma, beta, mean, var, eps=1e-5):
        return ((y - mean[None, :, None, None])
                / jnp.sqrt(var[None, :, None, None] + eps)
                * gamma[None, :, None, None] + beta[None, :, None, None])

    h = jax.nn.relu(bn(x, *params["bn1"]))
    h = lax.conv_general_dilated(h, params["conv1_w"], (stride, stride),
                                 ((1, 1), (1, 1)), dimension_numbers=dn,
                                 precision=hp)
    h = jax.nn.relu(bn(h, *params["bn2"]))
    h = lax.conv_general_dilated(h, params["conv2_w"], (1, 1),
                                 ((1, 1), (1, 1)), dimension_numbers=dn,
                                 precision=hp)
    s = lax.conv_general_dilated(x, params["convs_w"], (stride, stride),
                                 ((0, 0), (0, 0)), dimension_numbers=dn,
                                 precision=hp)
    s = bn(s, *params["bn3"])
    y = h + s
    pooled = y.mean(axis=(2, 3))
    e = jax.nn.sigmoid(jnp.maximum(pooled @ params["se_w1"].T, 0.0)
                       @ params["se_w2"].T)
    return y * e[:, :, None, None]


# ----------------------------------- main ----------------------------------- #

if __name__ == "__main__":
    B, in_c, out_c, H, W = 2, 8, 16, 16, 16
    stride, r = 1, 8

    key = jax.random.PRNGKey(0)
    ks = jax.random.split(key, 16)
    x = jax.random.normal(ks[0], (B, in_c, H, W), dtype=jnp.float32)

    def bn_params(k, c):
        k1, k2, k3, k4 = jax.random.split(k, 4)
        gamma = 1.0 + 0.1 * jax.random.normal(k1, (c,), dtype=jnp.float32)
        beta = 0.1 * jax.random.normal(k2, (c,), dtype=jnp.float32)
        mean = 0.1 * jax.random.normal(k3, (c,), dtype=jnp.float32)
        var = jax.random.uniform(k4, (c,), dtype=jnp.float32,
                                 minval=0.5, maxval=1.5)
        return (gamma, beta, mean, var)

    params = {
        "conv1_w": 0.1 * jax.random.normal(ks[1], (out_c, in_c, 3, 3), dtype=jnp.float32),
        "conv2_w": 0.1 * jax.random.normal(ks[2], (out_c, out_c, 3, 3), dtype=jnp.float32),
        "convs_w": 0.1 * jax.random.normal(ks[3], (out_c, in_c, 1, 1), dtype=jnp.float32),
        "bn1": bn_params(ks[4], in_c),
        "bn2": bn_params(ks[5], out_c),
        "bn3": bn_params(ks[6], out_c),
        # PyTorch nn.Linear weight layout is (out_features, in_features).
        "se_w1": 0.3 * jax.random.normal(ks[7], (out_c // r, out_c), dtype=jnp.float32),
        "se_w2": 0.3 * jax.random.normal(ks[8], (out_c, out_c // r), dtype=jnp.float32),
    }

    out = resnet_block_forward(x, params, stride=stride)
    out = jax.block_until_ready(out)

    ref = reference_forward(x, params, stride)
    assert out.shape == ref.shape, (out.shape, ref.shape)
    max_err = jnp.max(jnp.abs(out - ref))
    # Tolerance accounts for bf16 conv inputs/weights (f32 accumulation).
    assert jnp.allclose(out, ref, atol=2e-2, rtol=2e-2), \
        f"mismatch vs reference, max abs err={max_err}"
    print("KERNEL_OK")
</pallas_src>

<mosaic_0001>
module attributes {stable_mosaic.version = 11 : i64} {
  func.func @conv1_fused_kernel(%arg0: memref<8x768xbf16, #tpu.memory_space<vmem>>, %arg1: memref<1x768xf32, #tpu.memory_space<vmem>>, %arg2: memref<8x1xf32, #tpu.memory_space<vmem>>, %arg3: memref<8x1xf32, #tpu.memory_space<vmem>>, %arg4: memref<9x16x8xbf16, #tpu.memory_space<vmem>>, %arg5: memref<16x1xf32, #tpu.memory_space<vmem>>, %arg6: memref<16x648xbf16, #tpu.memory_space<vmem>>, %arg7: memref<8x768xbf16, #tpu.memory_space<vmem>>) attributes {dimension_semantics = [], scalar_prefetch = 0 : i64, scratch_operands = 1 : i64, tpu.core_type = #tpu.core_type<tc>} {
    %c0 = arith.constant 0 : index
    %c0_0 = arith.constant 0 : index
    %0 = vector.load %arg0[%c0, %c0_0] : memref<8x768xbf16, #tpu.memory_space<vmem>>, vector<8x768xbf16>
    %1 = arith.extf %0 : vector<8x768xbf16> to vector<8x768xf32>
    %c0_1 = arith.constant 0 : index
    %c0_2 = arith.constant 0 : index
    %2 = vector.load %arg2[%c0_1, %c0_2] : memref<8x1xf32, #tpu.memory_space<vmem>>, vector<8x1xf32>
    %3 = vector.broadcast %2 : vector<8x1xf32> to vector<8x768xf32>
    %4 = arith.mulf %1, %3 : vector<8x768xf32>
    %c0_3 = arith.constant 0 : index
    %c0_4 = arith.constant 0 : index
    %5 = vector.load %arg3[%c0_3, %c0_4] : memref<8x1xf32, #tpu.memory_space<vmem>>, vector<8x1xf32>
    %6 = vector.broadcast %5 : vector<8x1xf32> to vector<8x768xf32>
    %7 = arith.addf %4, %6 : vector<8x768xf32>
    %cst = arith.constant 0.000000e+00 : f32
    %8 = vector.broadcast %cst : f32 to vector<8x768xf32>
    %9 = arith.maximumf %7, %8 : vector<8x768xf32>
    %c0_5 = arith.constant 0 : index
    %c0_6 = arith.constant 0 : index
    %10 = vector.load %arg1[%c0_5, %c0_6] : memref<1x768xf32, #tpu.memory_space<vmem>>, vector<1x768xf32>
    %11 = vector.broadcast %10 : vector<1x768xf32> to vector<8x768xf32>
    %12 = arith.mulf %9, %11 : vector<8x768xf32>
    %13 = arith.truncf %12 : vector<8x768xf32> to vector<8x768xbf16>
    %c0_7 = arith.constant 0 : index
    %c0_8 = arith.constant 0 : index
    %14 = vector.load %arg7[%c0_7, %c0_8] : memref<8x768xbf16, #tpu.memory_space<vmem>>, vector<8x768xbf16>
    tpu.vector_store %arg7[%c0_7, %c0_8], %13 {strides = array<i32>} : memref<8x768xbf16, #tpu.memory_space<vmem>>, vector<8x768xbf16>,
    %cst_9 = arith.constant 0.000000e+00 : f32
    %15 = vector.broadcast %cst_9 : f32 to vector<16x648xf32>
    %c0_10 = arith.constant 0 : index
    %c0_11 = arith.constant 0 : index
    %16 = vector.load %arg7[%c0_10, %c0_11] : memref<8x768xbf16, #tpu.memory_space<vmem>>, vector<8x648xbf16>
    %c0_12 = arith.constant 0 : index
    %c0_13 = arith.constant 0 : index
    %c0_14 = arith.constant 0 : index
    %17 = vector.load %arg4[%c0_12, %c0_13, %c0_14] : memref<9x16x8xbf16, #tpu.memory_space<vmem>>, vector<1x16x8xbf16>
    %18 = vector.shape_cast %17 : vector<1x16x8xbf16> to vector<16x8xbf16>
    %cst_15 = arith.constant dense<0.000000e+00> : vector<16x648xf32>
    %19 = tpu.matmul %18, %16, %cst_15 {dimension_numbers = #tpu.dot_dimension_numbers<[1], [0], [0], [1], [0, 0, 1, 1], [], []>} : vector<16x8xbf16>, vector<8x648xbf16>, vector<16x648xf32> -> vector<16x648xf32>
    %20 = arith.addf %15, %19 : vector<16x648xf32>
    %c0_16 = arith.constant 0 : index
    %c1 = arith.constant 1 : index
    %21 = vector.load %arg7[%c0_16, %c1] : memref<8x768xbf16, #tpu.memory_space<vmem>>, vector<8x648xbf16>
    %c1_17 = arith.constant 1 : index
    %c0_18 = arith.constant 0 : index
    %c0_19 = arith.constant 0 : index
    %22 = vector.load %arg4[%c1_17, %c0_18, %c0_19] : memref<9x16x8xbf16, #tpu.memory_space<vmem>>, vector<1x16x8xbf16>
    %23 = vector.shape_cast %22 : vector<1x16x8xbf16> to vector<16x8xbf16>
    %cst_20 = arith.constant dense<0.000000e+00> : vector<16x648xf32>
    %24 = tpu.matmul %23, %21, %cst_20 {dimension_numbers = #tpu.dot_dimension_numbers<[1], [0], [0], [1], [0, 0, 1, 1], [], []>} : vector<16x8xbf16>, vector<8x648xbf16>, vector<16x648xf32> -> vector<16x648xf32>
    %25 = arith.addf %20, %24 : vector<16x648xf32>
    %c0_21 = arith.constant 0 : index
    %c2 = arith.constant 2 : index
    %26 = vector.load %arg7[%c0_21, %c2] : memref<8x768xbf16, #tpu.memory_space<vmem>>, vector<8x648xbf16>
    %c2_22 = arith.constant 2 : index
    %c0_23 = arith.constant 0 : index
    %c0_24 = arith.constant 0 : index
    %27 = vector.load %arg4[%c2_22, %c0_23, %c0_24] : memref<9x16x8xbf16, #tpu.memory_space<vmem>>, vector<1x16x8xbf16>
    %28 = vector.shape_cast %27 : vector<1x16x8xbf16> to vector<16x8xbf16>
    %cst_25 = arith.constant dense<0.000000e+00> : vector<16x648xf32>
    %29 = tpu.matmul %28, %26, %cst_25 {dimension_numbers = #tpu.dot_dimension_numbers<[1], [0], [0], [1], [0, 0, 1, 1], [], []>} : vector<16x8xbf16>, vector<8x648xbf16>, vector<16x648xf32> -> vector<16x648xf32>
    %30 = arith.addf %25, %29 : vector<16x648xf32>
    %c0_26 = arith.constant 0 : index
    %c18 = arith.constant 18 : index
    %31 = vector.load %arg7[%c0_26, %c18] : memref<8x768xbf16, #tpu.memory_space<vmem>>, vector<8x648xbf16>
    %c3 = arith.constant 3 : index
    %c0_27 = arith.constant 0 : index
    %c0_28 = arith.constant 0 : index
    %32 = vector.load %arg4[%c3, %c0_27, %c0_28] : memref<9x16x8xbf16, #tpu.memory_space<vmem>>, vector<1x16x8xbf16>
    %33 = vector.shape_cast %32 : vector<1x16x8xbf16> to vector<16x8xbf16>
    %cst_29 = arith.constant dense<0.000000e+00> : vector<16x648xf32>
    %34 = tpu.matmul %33, %31, %cst_29 {dimension_numbers = #tpu.dot_dimension_numbers<[1], [0], [0], [1], [0, 0, 1, 1], [], []>} : vector<16x8xbf16>, vector<8x648xbf16>, vector<16x648xf32> -> vector<16x648xf32>
    %35 = arith.addf %30, %34 : vector<16x648xf32>
    %c0_30 = arith.constant 0 : index
    %c19 = arith.constant 19 : index
    %36 = vector.load %arg7[%c0_30, %c19] : memref<8x768xbf16, #tpu.memory_space<vmem>>, vector<8x648xbf16>
    %c4 = arith.constant 4 : index
    %c0_31 = arith.constant 0 : index
    %c0_32 = arith.constant 0 : index
    %37 = vector.load %arg4[%c4, %c0_31, %c0_32] : memref<9x16x8xbf16, #tpu.memory_space<vmem>>, vector<1x16x8xbf16>
    %38 = vector.shape_cast %37 : vector<1x16x8xbf16> to vector<16x8xbf16>
    %cst_33 = arith.constant dense<0.000000e+00> : vector<16x648xf32>
    %39 = tpu.matmul %38, %36, %cst_33 {dimension_numbers = #tpu.dot_dimension_numbers<[1], [0], [0], [1], [0, 0, 1, 1], [], []>} : vector<16x8xbf16>, vector<8x648xbf16>, vector<16x648xf32> -> vector<16x648xf32>
    %40 = arith.addf %35, %39 : vector<16x648xf32>
    %c0_34 = arith.constant 0 : index
    %c20 = arith.constant 20 : index
    %41 = vector.load %arg7[%c0_34, %c20] : memref<8x768xbf16, #tpu.memory_space<vmem>>, vector<8x648xbf16>
    %c5 = arith.constant 5 : index
    %c0_35 = arith.constant 0 : index
    %c0_36 = arith.constant 0 : index
    %42 = vector.load %arg4[%c5, %c0_35, %c0_36] : memref<9x16x8xbf16, #tpu.memory_space<vmem>>, vector<1x16x8xbf16>
    %43 = vector.shape_cast %42 : vector<1x16x8xbf16> to vector<16x8xbf16>
    %cst_37 = arith.constant dense<0.000000e+00> : vector<16x648xf32>
    %44 = tpu.matmul %43, %41, %cst_37 {dimension_numbers = #tpu.dot_dimension_numbers<[1], [0], [0], [1], [0, 0, 1, 1], [], []>} : vector<16x8xbf16>, vector<8x648xbf16>, vector<16x648xf32> -> vector<16x648xf32>
    %45 = arith.addf %40, %44 : vector<16x648xf32>
    %c0_38 = arith.constant 0 : index
    %c36 = arith.constant 36 : index
    %46 = vector.load %arg7[%c0_38, %c36] : memref<8x768xbf16, #tpu.memory_space<vmem>>, vector<8x648xbf16>
    %c6 = arith.constant 6 : index
    %c0_39 = arith.constant 0 : index
    %c0_40 = arith.constant 0 : index
    %47 = vector.load %arg4[%c6, %c0_39, %c0_40] : memref<9x16x8xbf16, #tpu.memory_space<vmem>>, vector<1x16x8xbf16>
    %48 = vector.shape_cast %47 : vector<1x16x8xbf16> to vector<16x8xbf16>
    %cst_41 = arith.constant dense<0.000000e+00> : vector<16x648xf32>
    %49 = tpu.matmul %48, %46, %cst_41 {dimension_numbers = #tpu.dot_dimension_numbers<[1], [0], [0], [1], [0, 0, 1, 1], [], []>} : vector<16x8xbf16>, vector<8x648xbf16>, vector<16x648xf32> -> vector<16x648xf32>
    %50 = arith.addf %45, %49 : vector<16x648xf32>
    %c0_42 = arith.constant 0 : index
    %c37 = arith.constant 37 : index
    %51 = vector.load %arg7[%c0_42, %c37] : memref<8x768xbf16, #tpu.memory_space<vmem>>, vector<8x648xbf16>
    %c7 = arith.constant 7 : index
    %c0_43 = arith.constant 0 : index
    %c0_44 = arith.constant 0 : index
    %52 = vector.load %arg4[%c7, %c0_43, %c0_44] : memref<9x16x8xbf16, #tpu.memory_space<vmem>>, vector<1x16x8xbf16>
    %53 = vector.shape_cast %52 : vector<1x16x8xbf16> to vector<16x8xbf16>
    %cst_45 = arith.constant dense<0.000000e+00> : vector<16x648xf32>
    %54 = tpu.matmul %53, %51, %cst_45 {dimension_numbers = #tpu.dot_dimension_numbers<[1], [0], [0], [1], [0, 0, 1, 1], [], []>} : vector<16x8xbf16>, vector<8x648xbf16>, vector<16x648xf32> -> vector<16x648xf32>
    %55 = arith.addf %50, %54 : vector<16x648xf32>
    %c0_46 = arith.constant 0 : index
    %c38 = arith.constant 38 : index
    %56 = vector.load %arg7[%c0_46, %c38] : memref<8x768xbf16, #tpu.memory_space<vmem>>, vector<8x648xbf16>
    %c8 = arith.constant 8 : index
    %c0_47 = arith.constant 0 : index
    %c0_48 = arith.constant 0 : index
    %57 = vector.load %arg4[%c8, %c0_47, %c0_48] : memref<9x16x8xbf16, #tpu.memory_space<vmem>>, vector<1x16x8xbf16>
    %58 = vector.shape_cast %57 : vector<1x16x8xbf16> to vector<16x8xbf16>
    %cst_49 = arith.constant dense<0.000000e+00> : vector<16x648xf32>
    %59 = tpu.matmul %58, %56, %cst_49 {dimension_numbers = #tpu.dot_dimension_numbers<[1], [0], [0], [1], [0, 0, 1, 1], [], []>} : vector<16x8xbf16>, vector<8x648xbf16>, vector<16x648xf32> -> vector<16x648xf32>
    %60 = arith.addf %55, %59 : vector<16x648xf32>
    %c0_50 = arith.constant 0 : index
    %c0_51 = arith.constant 0 : index
    %61 = vector.load %arg5[%c0_50, %c0_51] : memref<16x1xf32, #tpu.memory_space<vmem>>, vector<16x1xf32>
    %62 = vector.broadcast %61 : vector<16x1xf32> to vector<16x648xf32>
    %63 = arith.addf %60, %62 : vector<16x648xf32>
    %cst_52 = arith.constant 0.000000e+00 : f32
    %64 = vector.broadcast %cst_52 : f32 to vector<16x648xf32>
    %65 = arith.maximumf %63, %64 : vector<16x648xf32>
    %66 = arith.truncf %65 : vector<16x648xf32> to vector<16x648xbf16>
    %c0_53 = arith.constant 0 : index
    %c0_54 = arith.constant 0 : index
    %67 = vector.load %arg6[%c0_53, %c0_54] : memref<16x648xbf16, #tpu.memory_space<vmem>>, vector<16x648xbf16>
    tpu.vector_store %arg6[%c0_53, %c0_54], %66 {strides = array<i32>} : memref<16x648xbf16, #tpu.memory_space<vmem>>, vector<16x648xbf16>,
    return
  }
}

module attributes {stable_mosaic.version = 11 : i64} {
  func.func @conv2_fused_kernel(%arg0: memref<16x768xbf16, #tpu.memory_space<vmem>>, %arg1: memref<8x648xbf16, #tpu.memory_space<vmem>>, %arg2: memref<9x16x16xbf16, #tpu.memory_space<vmem>>, %arg3: memref<16x8xbf16, #tpu.memory_space<vmem>>, %arg4: memref<16x1xf32, #tpu.memory_space<vmem>>, %arg5: memref<16x648xbf16, #tpu.memory_space<vmem>>) attributes {dimension_semantics = [], scalar_prefetch = 0 : i64, scratch_operands = 0 : i64, tpu.core_type = #tpu.core_type<tc>} {
    %c0 = arith.constant 0 : index
    %c0_0 = arith.constant 0 : index
    %0 = vector.load %arg3[%c0, %c0_0] : memref<16x8xbf16, #tpu.memory_space<vmem>>, vector<16x8xbf16>
    %c0_1 = arith.constant 0 : index
    %c0_2 = arith.constant 0 : index
    %1 = vector.load %arg1[%c0_1, %c0_2] : memref<8x648xbf16, #tpu.memory_space<vmem>>, vector<8x648xbf16>
    %cst = arith.constant dense<0.000000e+00> : vector<16x648xf32>
    %2 = tpu.matmul %0, %1, %cst {dimension_numbers = #tpu.dot_dimension_numbers<[1], [0], [0], [1], [0, 0, 1, 1], [], []>} : vector<16x8xbf16>, vector<8x648xbf16>, vector<16x648xf32> -> vector<16x648xf32>
    %c0_3 = arith.constant 0 : index
    %c0_4 = arith.constant 0 : index
    %3 = vector.load %arg4[%c0_3, %c0_4] : memref<16x1xf32, #tpu.memory_space<vmem>>, vector<16x1xf32>
    %4 = vector.broadcast %3 : vector<16x1xf32> to vector<16x648xf32>
    %5 = arith.addf %2, %4 : vector<16x648xf32>
    %c0_5 = arith.constant 0 : index
    %c0_6 = arith.constant 0 : index
    %6 = vector.load %arg0[%c0_5, %c0_6] : memref<16x768xbf16, #tpu.memory_space<vmem>>, vector<16x648xbf16>
    %c0_7 = arith.constant 0 : index
    %c0_8 = arith.constant 0 : index
    %c0_9 = arith.constant 0 : index
    %7 = vector.load %arg2[%c0_7, %c0_8, %c0_9] : memref<9x16x16xbf16, #tpu.memory_space<vmem>>, vector<1x16x16xbf16>
    %8 = vector.shape_cast %7 : vector<1x16x16xbf16> to vector<16x16xbf16>
    %cst_10 = arith.constant dense<0.000000e+00> : vector<16x648xf32>
    %9 = tpu.matmul %8, %6, %cst_10 {dimension_numbers = #tpu.dot_dimension_numbers<[1], [0], [0], [1], [0, 0, 1, 1], [], []>} : vector<16x16xbf16>, vector<16x648xbf16>, vector<16x648xf32> -> vector<16x648xf32>
    %10 = arith.addf %5, %9 : vector<16x648xf32>
    %c0_11 = arith.constant 0 : index
    %c1 = arith.constant 1 : index
    %11 = vector.load %arg0[%c0_11, %c1] : memref<16x768xbf16, #tpu.memory_space<vmem>>, vector<16x648xbf16>
    %c1_12 = arith.constant 1 : index
    %c0_13 = arith.constant 0 : index
    %c0_14 = arith.constant 0 : index
    %12 = vector.load %arg2[%c1_12, %c0_13, %c0_14] : memref<9x16x16xbf16, #tpu.memory_space<vmem>>, vector<1x16x16xbf16>
    %13 = vector.shape_cast %12 : vector<1x16x16xbf16> to vector<16x16xbf16>
    %cst_15 = arith.constant dense<0.000000e+00> : vector<16x648xf32>
    %14 = tpu.matmul %13, %11, %cst_15 {dimension_numbers = #tpu.dot_dimension_numbers<[1], [0], [0], [1], [0, 0, 1, 1], [], []>} : vector<16x16xbf16>, vector<16x648xbf16>, vector<16x648xf32> -> vector<16x648xf32>
    %15 = arith.addf %10, %14 : vector<16x648xf32>
    %c0_16 = arith.constant 0 : index
    %c2 = arith.constant 2 : index
    %16 = vector.load %arg0[%c0_16, %c2] : memref<16x768xbf16, #tpu.memory_space<vmem>>, vector<16x648xbf16>
    %c2_17 = arith.constant 2 : index
    %c0_18 = arith.constant 0 : index
    %c0_19 = arith.constant 0 : index
    %17 = vector.load %arg2[%c2_17, %c0_18, %c0_19] : memref<9x16x16xbf16, #tpu.memory_space<vmem>>, vector<1x16x16xbf16>
    %18 = vector.shape_cast %17 : vector<1x16x16xbf16> to vector<16x16xbf16>
    %cst_20 = arith.constant dense<0.000000e+00> : vector<16x648xf32>
    %19 = tpu.matmul %18, %16, %cst_20 {dimension_numbers = #tpu.dot_dimension_numbers<[1], [0], [0], [1], [0, 0, 1, 1], [], []>} : vector<16x16xbf16>, vector<16x648xbf16>, vector<16x648xf32> -> vector<16x648xf32>
    %20 = arith.addf %15, %19 : vector<16x648xf32>
    %c0_21 = arith.constant 0 : index
    %c18 = arith.constant 18 : index
    %21 = vector.load %arg0[%c0_21, %c18] : memref<16x768xbf16, #tpu.memory_space<vmem>>, vector<16x648xbf16>
    %c3 = arith.constant 3 : index
    %c0_22 = arith.constant 0 : index
    %c0_23 = arith.constant 0 : index
    %22 = vector.load %arg2[%c3, %c0_22, %c0_23] : memref<9x16x16xbf16, #tpu.memory_space<vmem>>, vector<1x16x16xbf16>
    %23 = vector.shape_cast %22 : vector<1x16x16xbf16> to vector<16x16xbf16>
    %cst_24 = arith.constant dense<0.000000e+00> : vector<16x648xf32>
    %24 = tpu.matmul %23, %21, %cst_24 {dimension_numbers = #tpu.dot_dimension_numbers<[1], [0], [0], [1], [0, 0, 1, 1], [], []>} : vector<16x16xbf16>, vector<16x648xbf16>, vector<16x648xf32> -> vector<16x648xf32>
    %25 = arith.addf %20, %24 : vector<16x648xf32>
    %c0_25 = arith.constant 0 : index
    %c19 = arith.constant 19 : index
    %26 = vector.load %arg0[%c0_25, %c19] : memref<16x768xbf16, #tpu.memory_space<vmem>>, vector<16x648xbf16>
    %c4 = arith.constant 4 : index
    %c0_26 = arith.constant 0 : index
    %c0_27 = arith.constant 0 : index
    %27 = vector.load %arg2[%c4, %c0_26, %c0_27] : memref<9x16x16xbf16, #tpu.memory_space<vmem>>, vector<1x16x16xbf16>
    %28 = vector.shape_cast %27 : vector<1x16x16xbf16> to vector<16x16xbf16>
    %cst_28 = arith.constant dense<0.000000e+00> : vector<16x648xf32>
    %29 = tpu.matmul %28, %26, %cst_28 {dimension_numbers = #tpu.dot_dimension_numbers<[1], [0], [0], [1], [0, 0, 1, 1], [], []>} : vector<16x16xbf16>, vector<16x648xbf16>, vector<16x648xf32> -> vector<16x648xf32>
    %30 = arith.addf %25, %29 : vector<16x648xf32>
    %c0_29 = arith.constant 0 : index
    %c20 = arith.constant 20 : index
    %31 = vector.load %arg0[%c0_29, %c20] : memref<16x768xbf16, #tpu.memory_space<vmem>>, vector<16x648xbf16>
    %c5 = arith.constant 5 : index
    %c0_30 = arith.constant 0 : index
    %c0_31 = arith.constant 0 : index
    %32 = vector.load %arg2[%c5, %c0_30, %c0_31] : memref<9x16x16xbf16, #tpu.memory_space<vmem>>, vector<1x16x16xbf16>
    %33 = vector.shape_cast %32 : vector<1x16x16xbf16> to vector<16x16xbf16>
    %cst_32 = arith.constant dense<0.000000e+00> : vector<16x648xf32>
    %34 = tpu.matmul %33, %31, %cst_32 {dimension_numbers = #tpu.dot_dimension_numbers<[1], [0], [0], [1], [0, 0, 1, 1], [], []>} : vector<16x16xbf16>, vector<16x648xbf16>, vector<16x648xf32> -> vector<16x648xf32>
    %35 = arith.addf %30, %34 : vector<16x648xf32>
    %c0_33 = arith.constant 0 : index
    %c36 = arith.constant 36 : index
    %36 = vector.load %arg0[%c0_33, %c36] : memref<16x768xbf16, #tpu.memory_space<vmem>>, vector<16x648xbf16>
    %c6 = arith.constant 6 : index
    %c0_34 = arith.constant 0 : index
    %c0_35 = arith.constant 0 : index
    %37 = vector.load %arg2[%c6, %c0_34, %c0_35] : memref<9x16x16xbf16, #tpu.memory_space<vmem>>, vector<1x16x16xbf16>
    %38 = vector.shape_cast %37 : vector<1x16x16xbf16> to vector<16x16xbf16>
    %cst_36 = arith.constant dense<0.000000e+00> : vector<16x648xf32>
    %39 = tpu.matmul %38, %36, %cst_36 {dimension_numbers = #tpu.dot_dimension_numbers<[1], [0], [0], [1], [0, 0, 1, 1], [], []>} : vector<16x16xbf16>, vector<16x648xbf16>, vector<16x648xf32> -> vector<16x648xf32>
    %40 = arith.addf %35, %39 : vector<16x648xf32>
    %c0_37 = arith.constant 0 : index
    %c37 = arith.constant 37 : index
    %41 = vector.load %arg0[%c0_37, %c37] : memref<16x768xbf16, #tpu.memory_space<vmem>>, vector<16x648xbf16>
    %c7 = arith.constant 7 : index
    %c0_38 = arith.constant 0 : index
    %c0_39 = arith.constant 0 : index
    %42 = vector.load %arg2[%c7, %c0_38, %c0_39] : memref<9x16x16xbf16, #tpu.memory_space<vmem>>, vector<1x16x16xbf16>
    %43 = vector.shape_cast %42 : vector<1x16x16xbf16> to vector<16x16xbf16>
    %cst_40 = arith.constant dense<0.000000e+00> : vector<16x648xf32>
    %44 = tpu.matmul %43, %41, %cst_40 {dimension_numbers = #tpu.dot_dimension_numbers<[1], [0], [0], [1], [0, 0, 1, 1], [], []>} : vector<16x16xbf16>, vector<16x648xbf16>, vector<16x648xf32> -> vector<16x648xf32>
    %45 = arith.addf %40, %44 : vector<16x648xf32>
    %c0_41 = arith.constant 0 : index
    %c38 = arith.constant 38 : index
    %46 = vector.load %arg0[%c0_41, %c38] : memref<16x768xbf16, #tpu.memory_space<vmem>>, vector<16x648xbf16>
    %c8 = arith.constant 8 : index
    %c0_42 = arith.constant 0 : index
    %c0_43 = arith.constant 0 : index
    %47 = vector.load %arg2[%c8, %c0_42, %c0_43] : memref<9x16x16xbf16, #tpu.memory_space<vmem>>, vector<1x16x16xbf16>
    %48 = vector.shape_cast %47 : vector<1x16x16xbf16> to vector<16x16xbf16>
    %cst_44 = arith.constant dense<0.000000e+00> : vector<16x648xf32>
    %49 = tpu.matmul %48, %46, %cst_44 {dimension_numbers = #tpu.dot_dimension_numbers<[1], [0], [0], [1], [0, 0, 1, 1], [], []>} : vector<16x16xbf16>, vector<16x648xbf16>, vector<16x648xf32> -> vector<16x648xf32>
    %50 = arith.addf %45, %49 : vector<16x648xf32>
    %51 = arith.truncf %50 : vector<16x648xf32> to vector<16x648xbf16>
    %c0_45 = arith.constant 0 : index
    %c0_46 = arith.constant 0 : index
    %52 = vector.load %arg5[%c0_45, %c0_46] : memref<16x648xbf16, #tpu.memory_space<vmem>>, vector<16x648xbf16>
    tpu.vector_store %arg5[%c0_45, %c0_46], %51 {strides = array<i32>} : memref<16x648xbf16, #tpu.memory_space<vmem>>, vector<16x648xbf16>,
    return
  }
}

module attributes {stable_mosaic.version = 11 : i64} {
  func.func @se_kernel(%arg0: memref<2x16x256xbf16, #tpu.memory_space<vmem>>, %arg1: memref<16x2xf32, #tpu.memory_space<vmem>>, %arg2: memref<2x16xf32, #tpu.memory_space<vmem>>, %arg3: memref<2x16x256xf32, #tpu.memory_space<vmem>>) attributes {dimension_semantics = [], scalar_prefetch = 0 : i64, scratch_operands = 0 : i64, tpu.core_type = #tpu.core_type<tc>} {
    %c0 = arith.constant 0 : index
    %c0_0 = arith.constant 0 : index
    %c0_1 = arith.constant 0 : index
    %0 = vector.load %arg0[%c0, %c0_0, %c0_1] : memref<2x16x256xbf16, #tpu.memory_space<vmem>>, vector<2x16x256xbf16>
    %1 = arith.extf %0 : vector<2x16x256xbf16> to vector<2x16x256xf32>
    %cst = arith.constant dense<0.000000e+00> : vector<2x16xf32>
    %2 = vector.multi_reduction <add>, %1, %cst [2] : vector<2x16x256xf32> to vector<2x16xf32>
    %cst_2 = arith.constant 2.560000e+02 : f32
    %3 = vector.broadcast %cst_2 : f32 to vector<2x16xf32>
    %4 = arith.divf %2, %3 : vector<2x16xf32>
    %c0_3 = arith.constant 0 : index
    %c0_4 = arith.constant 0 : index
    %5 = vector.load %arg1[%c0_3, %c0_4] : memref<16x2xf32, #tpu.memory_space<vmem>>, vector<16x2xf32>
    %cst_5 = arith.constant dense<0.000000e+00> : vector<2x2xf32>
    %6 = tpu.matmul %4, %5, %cst_5 {dimension_numbers = #tpu.dot_dimension_numbers<[1], [0], [0], [1], [0, 0, 1, 1], [], []>} : vector<2x16xf32>, vector<16x2xf32>, vector<2x2xf32> -> vector<2x2xf32>
    %cst_6 = arith.constant 0.000000e+00 : f32
    %7 = vector.broadcast %cst_6 : f32 to vector<2x2xf32>
    %8 = arith.maximumf %6, %7 : vector<2x2xf32>
    %c0_7 = arith.constant 0 : index
    %c0_8 = arith.constant 0 : index
    %9 = vector.load %arg2[%c0_7, %c0_8] : memref<2x16xf32, #tpu.memory_space<vmem>>, vector<2x16xf32>
    %cst_9 = arith.constant dense<0.000000e+00> : vector<2x16xf32>
    %10 = tpu.matmul %8, %9, %cst_9 {dimension_numbers = #tpu.dot_dimension_numbers<[1], [0], [0], [1], [0, 0, 1, 1], [], []>} : vector<2x2xf32>, vector<2x16xf32>, vector<2x16xf32> -> vector<2x16xf32>
    %11 = arith.negf %10 : vector<2x16xf32>
    %12 = math.exp %11 : vector<2x16xf32>
    %cst_10 = arith.constant 1.000000e+00 : f32
    %13 = vector.broadcast %cst_10 : f32 to vector<2x16xf32>
    %14 = arith.addf %13, %12 : vector<2x16xf32>
    %15 = arith.divf %13, %14 : vector<2x16xf32>
    %16 = vector.shape_cast %15 : vector<2x16xf32> to vector<2x16x1xf32>
    %17 = vector.broadcast %16 : vector<2x16x1xf32> to vector<2x16x256xf32>
    %18 = arith.mulf %1, %17 : vector<2x16x256xf32>
    %c0_11 = arith.constant 0 : index
    %c0_12 = arith.constant 0 : index
    %c0_13 = arith.constant 0 : index
    %19 = vector.load %arg3[%c0_11, %c0_12, %c0_13] : memref<2x16x256xf32, #tpu.memory_space<vmem>>, vector<2x16x256xf32>
    tpu.vector_store %arg3[%c0_11, %c0_12, %c0_13], %18 {strides = array<i32>} : memref<2x16x256xf32, #tpu.memory_space<vmem>>, vector<2x16x256xf32>,
    return
  }
}

</mosaic_0001>

<llo_original>
// kernel: resnet_block_forward.3
$region0: #{resnet_block_forward.3}
  #allocation0 [shape = 'u32[]', space=smem, size = 0x4, offset = 0x4, fixed_abs, tag = 'smem constant byte address 0x4 - core index']
  #allocation1 [shape = 'u32[144,128]{1,0:T(1,128)}', space=vmem, size = 0x12000, scoped, tag = 'internal scratch']
  #allocation2 [shape = 'bf16[8,768]{1,0:T(8,128)(2,1)}', space=vmem, size = 0x3000, scoped, tag = 'scratch operand']
  %s0 = inlined_call_operand.vmem [shape: bf16[8,768], index: 0, kind: input, shape index: {}]
  %s1 = inlined_call_operand.vmem [shape: f32[1,768], index: 1, kind: input, shape index: {}]
  %s2 = inlined_call_operand.vmem [shape: f32[8,1], index: 2, kind: input, shape index: {}]
  %s3 = inlined_call_operand.vmem [shape: f32[8,1], index: 3, kind: input, shape index: {}]
  %s4 = inlined_call_operand.vmem [shape: bf16[9,16,8], index: 4, kind: input, shape index: {}]
  %s5 = inlined_call_operand.vmem [shape: f32[16,1], index: 5, kind: input, shape index: {}]
  %s6 = inlined_call_operand.vmem [shape: bf16[16,648], index: 6, kind: output, shape index: {}]
  %s7 = sld [smem:[#allocation0]]
  $region34: #{resnet_block_forward.3} parent=0
    _
  %s9 = ssub.s32 1, %s7
  %s10 = scalar_select 0, %s9, %s7
  // Predicated region
  $region2: #{resnet_block_forward.3} parent=0 // pred_check
    _
  $region3: #{resnet_block_forward.3} parent=0 // pred_check_branch
    %12 = sbr.rel (0) target = $region5
  $region4: #{resnet_block_forward.3} parent=0 // pred_region
    _
  $region5: #{resnet_block_forward.3} parent=0 // pred_fallthru
    _
  // Predicated region
  $region6: #{resnet_block_forward.3} parent=0 // pred_check
    _
  $region7: #{resnet_block_forward.3} parent=0 // pred_check_branch
    %14 = sbr.rel (0) target = $region9
  $region8: #{resnet_block_forward.3} parent=0 // pred_region
    _
  $region9: #{resnet_block_forward.3} parent=0 // pred_fallthru
    _
  // Predicated region
  $region10: #{resnet_block_forward.3} parent=0 // pred_check
    _
  $region11: #{resnet_block_forward.3} parent=0 // pred_check_branch
    %16 = sbr.rel (0) target = $region13
  $region12: #{resnet_block_forward.3} parent=0 // pred_region
    _
  $region13: #{resnet_block_forward.3} parent=0 // pred_fallthru
    _
  // Predicated region
  $region14: #{resnet_block_forward.3} parent=0 // pred_check
    _
  $region15: #{resnet_block_forward.3} parent=0 // pred_check_branch
    %18 = sbr.rel (0) target = $region17
  $region16: #{resnet_block_forward.3} parent=0 // pred_region
    _
  $region17: #{resnet_block_forward.3} parent=0 // pred_fallthru
    _
  // Predicated region
  $region18: #{resnet_block_forward.3} parent=0 // pred_check
    _
  $region19: #{resnet_block_forward.3} parent=0 // pred_check_branch
    %20 = sbr.rel (0) target = $region21
  $region20: #{resnet_block_forward.3} parent=0 // pred_region
    _
  $region21: #{resnet_block_forward.3} parent=0 // pred_fallthru
    _
  // Predicated region
  $region22: #{resnet_block_forward.3} parent=0 // pred_check
    _
  $region23: #{resnet_block_forward.3} parent=0 // pred_check_branch
    %22 = sbr.rel (0) target = $region25
  $region24: #{resnet_block_forward.3} parent=0 // pred_region
    _
  $region25: #{resnet_block_forward.3} parent=0 // pred_fallthru
    _
  %v24 = vld [vmem:[%s0] sm:$0xff]
  %v25 = vld [vmem:[%s0 + $0x8] sm:$0xff]
  %v26 = vld [vmem:[%s0 + $0x10] sm:$0xff]
  %v27 = vunpack.c.l.bf16 %v24
  %v28 = vunpack.c.h.bf16 %v24
  %v29 = vunpack.c.l.bf16 %v25
  %v30 = vunpack.c.h.bf16 %v25
  %v31 = vunpack.c.l.bf16 %v26
  %v32 = vunpack.c.h.bf16 %v26
  %v33 = vld [vmem:[%s2] sm:$0xff]
  %35 = vset.pattern.permute.xlu0 0
  %36 = vperm.xlu0 %35, %v33
  %v37 = vpop.permute.xlu0 %36
  %v39 = vmul.f32 %v27, %v37
  %v40 = vmul.f32 %v28, %v37
  %v41 = vmul.f32 %v29, %v37
  %v42 = vmul.f32 %v30, %v37
  %v43 = vmul.f32 %v31, %v37
  %v44 = vmul.f32 %v32, %v37
  %v45 = vld [vmem:[%s3] sm:$0xff]
  %47 = vset.pattern.permute.xlu0 0
  %48 = vperm.xlu0 %47, %v45
  %v49 = vpop.permute.xlu0 %48
  %v51 = vadd.f32 %v39, %v49
  %v52 = vadd.f32 %v40, %v49
  %v53 = vadd.f32 %v41, %v49
  %v54 = vadd.f32 %v42, %v49
  %v55 = vadd.f32 %v43, %v49
  %v56 = vadd.f32 %v44, %v49
  %v57 = vmax.f32 %v51, 0.0
  %v58 = vmax.f32 %v52, 0.0
  %v59 = vmax.f32 %v53, 0.0
  %v60 = vmax.f32 %v54, 0.0
  %v61 = vmax.f32 %v55, 0.0
  %v62 = vmax.f32 %v56, 0.0
  %v63 = vld [vmem:[%s1] sm:$0x3f]
  %v65 = vlaneseq
  %v66 = vshrl.u32 %v65, 7
  %v67 = vsub.s32 0, %v66
  %v68 = vrot.slane %v63, %v67
  %v69 = vlaneseq
  %v70 = vshrl.u32 %v69, 7
  %v71 = vsub.s32 1, %v70
  %v72 = vrot.slane %v63, %v71
  %v73 = vlaneseq
  %v74 = vshrl.u32 %v73, 7
  %v75 = vsub.s32 2, %v74
  %v76 = vrot.slane %v63, %v75
  %v77 = vlaneseq
  %v78 = vshrl.u32 %v77, 7
  %v79 = vsub.s32 3, %v78
  %v80 = vrot.slane %v63, %v79
  %v81 = vlaneseq
  %v82 = vshrl.u32 %v81, 7
  %v83 = vsub.s32 4, %v82
  %v84 = vrot.slane %v63, %v83
  %v85 = vlaneseq
  %v86 = vshrl.u32 %v85, 7
  %v87 = vsub.s32 5, %v86
  %v88 = vrot.slane %v63, %v87
  %v95 = vmul.f32 %v57, %v68
  %v96 = vmul.f32 %v58, %v72
  %v97 = vmul.f32 %v59, %v76
  %v98 = vmul.f32 %v60, %v80
  %v99 = vmul.f32 %v61, %v84
  %v100 = vmul.f32 %v62, %v88
  %v101 = vpack.c.bf16 %v95, %v95
  %v102 = vpack.c.bf16 %v96, %v96
  %v103 = vpack.c.bf16 %v97, %v97
  %v104 = vpack.c.bf16 %v98, %v98
  %v105 = vpack.c.bf16 %v99, %v99
  %v106 = vpack.c.bf16 %v100, %v100
  %v113 = vunpack.c.l.b16 %v101
  %v114 = vunpack.c.l.b16 %v102
  %v115 = vunpack.c.l.b16 %v103
  %v116 = vunpack.c.l.b16 %v104
  %v117 = vunpack.c.l.b16 %v105
  %v118 = vunpack.c.l.b16 %v106
  %v119 = vpack.c.b16 %v114, %v113
  %v120 = vpack.c.b16 %v116, %v115
  %v121 = vpack.c.b16 %v118, %v117
  %125 = vst [vmem:[#allocation2] sm:$0xff] %v119
  %126 = vst [vmem:[#allocation2 + $0x8] sm:$0xff] %v120
  %127 = vst [vmem:[#allocation2 + $0x10] sm:$0xff] %v121
  %v128 = vld [vmem:[#allocation2] sm:$0xff]
  %v129 = vld [vmem:[#allocation2 + $0x8] sm:$0xff]
  %v130 = vld [vmem:[#allocation2 + $0x10] sm:$0xff]
  %v131 = vld [vmem:[%s4] sm:$0xf]
  %v132 = vld [vmem:[%s4 + $0x4] sm:$0xf]
  %s133 = scalar_lea.vmem %s4, 8
  %v134 = vld [vmem:[%s133] sm:$0xf]
  %v135 = vld [vmem:[%s133 + $0x4] sm:$0xf]
  %v138 = vunpack.c.l.b16 %v134
  %v139 = vunpack.c.l.b16 %v135
  %v140 = vpack.c.b16 %v139, %v138
  %v144 = vunpack.c.l.b16 %v128
  %v145 = vunpack.c.h.b16 %v128
  %v146 = vunpack.c.l.b16 %v129
  %v147 = vunpack.c.h.b16 %v129
  %v148 = vunpack.c.l.b16 %v130
  %v149 = vunpack.c.h.b16 %v130
  %v150 = vpack.c.b16 %v144, %v144
  %v151 = vpack.c.b16 %v145, %v145
  %v152 = vpack.c.b16 %v146, %v146
  %v153 = vpack.c.b16 %v147, %v147
  %v154 = vpack.c.b16 %v148, %v148
  %v155 = vpack.c.b16 %v149, %v149
  %156 = vrot.lane.b32.xlu0 %v150, 127
  %v157 = vpop.permute.xlu0 %156
  %158 = vrot.lane.b32.xlu0 %v151, 127
  %v159 = vpop.permute.xlu0 %158
  %160 = vrot.lane.b32.xlu0 %v152, 127
  %v161 = vpop.permute.xlu0 %160
  %162 = vrot.lane.b32.xlu0 %v153, 127
  %v163 = vpop.permute.xlu0 %162
  %164 = vrot.lane.b32.xlu0 %v154, 127
  %v165 = vpop.permute.xlu0 %164
  %166 = vrot.lane.b32.xlu0 %v155, 127
  %v167 = vpop.permute.xlu0 %166
  %vm168 = vcmask 1039360
  %v169 = vsel %vm168, %v157, %v159
  %v170 = vsel %vm168, %v159, %v161
  %v171 = vsel %vm168, %v161, %v163
  %v172 = vsel %vm168, %v163, %v165
  %v173 = vsel %vm168, %v165, %v167
  %vm174 = vcmask 64512
  %v176 = vsel %vm174, %v140, 0
  %vm178 = vcmask 1043456
  %v180 = vsel %vm178, %v169, 0
  %v183 = vsel %vm178, %v170, 0
  %v186 = vsel %vm178, %v171, 0
  %v189 = vsel %vm178, %v172, 0
  %v192 = vsel %vm178, %v173, 0
  %v195 = vsel %vm178, %v167, 0
  %197 = vmatprep.subr.bf16.mxu0 %v183
  %198 = vmatpush1.bf16.msra.mxu0 %v180
  %199 = vmatprep.subr.bf16.mxu0 0
  %200 = vmatpush1.bf16.msra.mxu0 0
  %201 = vmatprep.subr.bf16.mxu0 0
  %202 = vmatpush1.bf16.msra.mxu0 0
  %203 = vmatprep.subr.bf16.mxu0 0
  %204 = vmatpush1.bf16.msra.mxu0 0
  %205 = vmatprep.subr.bf16.mxu0 0
  %206 = vmatpush1.bf16.msra.mxu0 0
  %207 = vmatprep.subr.bf16.mxu0 0
  %208 = vmatpush1.bf16.msra.mxu0 0
  %209 = vmatprep.subr.bf16.mxu0 0
  %210 = vmatpush1.bf16.msra.mxu0 0
  %211 = vmatprep.subr.bf16.mxu0 0
  %212 = vmatpush1.bf16.msra.mxu0 0
  %213 = vmatprep.subr.bf16.mxu0 0
  %214 = vmatpush1.bf16.msra.mxu0 0
  %215 = vmatprep.subr.bf16.mxu0 0
  %216 = vmatpush1.bf16.msra.mxu0 0
  %217 = vmatprep.subr.bf16.mxu0 0
  %218 = vmatpush1.bf16.msra.mxu0 0
  %219 = vmatprep.subr.bf16.mxu0 0
  %220 = vmatpush1.bf16.msra.mxu0 0
  %221 = vmatprep.subr.bf16.mxu0 0
  %222 = vmatpush1.bf16.msra.mxu0 0
  %223 = vmatprep.subr.bf16.mxu0 0
  %224 = vmatpush1.bf16.msra.mxu0 0
  %225 = vmatprep.subr.bf16.mxu0 0
  %226 = vmatpush1.bf16.msra.mxu0 0
  %227 = vmatprep.subr.bf16.mxu0 0
  %228 = vmatpush1.bf16.msra.mxu0 0
  %229 = vmatprep.mubr.bf16.mxu0 0
  %230 = vmatmul.mubr.bf16.gmra.mrb[0].mxu0 %v176
  %v231 = vpop.f32.mrb[0].mxu0
  %v232 = vadd.f32 0.0, %v231
  %v233 = vpop.f32.mrb[0].mxu0
  %v234 = vadd.f32 0.0, %v233
  %v235 = vpop.f32.mrb[0].mxu0
  %v236 = vadd.f32 0.0, %v235
  %v237 = vpop.f32.mrb[0].mxu0
  %v238 = vadd.f32 0.0, %v237
  %239 = vdwg.mxu0
  %240 = vmatprep.subr.bf16.mxu0 %v189
  %241 = vmatpush1.bf16.msra.mxu0 %v186
  %242 = vmatprep.subr.bf16.mxu0 0
  %243 = vmatpush1.bf16.msra.mxu0 0
  %244 = vmatprep.subr.bf16.mxu0 0
  %245 = vmatpush1.bf16.msra.mxu0 0
  %246 = vmatprep.subr.bf16.mxu0 0
  %247 = vmatpush1.bf16.msra.mxu0 0
  %248 = vmatprep.subr.bf16.mxu0 0
  %249 = vmatpush1.bf16.msra.mxu0 0
  %250 = vmatprep.subr.bf16.mxu0 0
  %251 = vmatpush1.bf16.msra.mxu0 0
  %252 = vmatprep.subr.bf16.mxu0 0
  %253 = vmatpush1.bf16.msra.mxu0 0
  %254 = vmatprep.subr.bf16.mxu0 0
  %255 = vmatpush1.bf16.msra.mxu0 0
  %256 = vmatprep.subr.bf16.mxu0 0
  %257 = vmatpush1.bf16.msra.mxu0 0
  %258 = vmatprep.subr.bf16.mxu0 0
  %259 = vmatpush1.bf16.msra.mxu0 0
  %260 = vmatprep.subr.bf16.mxu0 0
  %261 = vmatpush1.bf16.msra.mxu0 0
  %262 = vmatprep.subr.bf16.mxu0 0
  %263 = vmatpush1.bf16.msra.mxu0 0
  %264 = vmatprep.subr.bf16.mxu0 0
  %265 = vmatpush1.bf16.msra.mxu0 0
  %266 = vmatprep.subr.bf16.mxu0 0
  %267 = vmatpush1.bf16.msra.mxu0 0
  %268 = vmatprep.subr.bf16.mxu0 0
  %269 = vmatpush1.bf16.msra.mxu0 0
  %270 = vmatprep.subr.bf16.mxu0 0
  %271 = vmatpush1.bf16.msra.mxu0 0
  %272 = vmatprep.mubr.bf16.mxu0 0
  %273 = vmatmul.mubr.bf16.gmra.mrb[0].mxu0 %v176
  %v274 = vpop.f32.mrb[0].mxu0
  %v275 = vadd.f32 0.0, %v274
  %v276 = vpop.f32.mrb[0].mxu0
  %v277 = vadd.f32 0.0, %v276
  %v278 = vpop.f32.mrb[0].mxu0
  %v279 = vadd.f32 0.0, %v278
  %v280 = vpop.f32.mrb[0].mxu0
  %v281 = vadd.f32 0.0, %v280
  %282 = vdwg.mxu0
  %283 = vmatprep.subr.bf16.mxu0 %v195
  %284 = vmatpush1.bf16.msra.mxu0 %v192
  %285 = vmatprep.subr.bf16.mxu0 0
  %286 = vmatpush1.bf16.msra.mxu0 0
  %287 = vmatprep.subr.bf16.mxu0 0
  %288 = vmatpush1.bf16.msra.mxu0 0
  %289 = vmatprep.subr.bf16.mxu0 0
  %290 = vmatpush1.bf16.msra.mxu0 0
  %291 = vmatprep.subr.bf16.mxu0 0
  %292 = vmatpush1.bf16.msra.mxu0 0
  %293 = vmatprep.subr.bf16.mxu0 0
  %294 = vmatpush1.bf16.msra.mxu0 0
  %295 = vmatprep.subr.bf16.mxu0 0
  %296 = vmatpush1.bf16.msra.mxu0 0
  %297 = vmatprep.subr.bf16.mxu0 0
  %298 = vmatpush1.bf16.msra.mxu0 0
  %299 = vmatprep.subr.bf16.mxu0 0
  %300 = vmatpush1.bf16.msra.mxu0 0
  %301 = vmatprep.subr.bf16.mxu0 0
  %302 = vmatpush1.bf16.msra.mxu0 0
  %303 = vmatprep.subr.bf16.mxu0 0
  %304 = vmatpush1.bf16.msra.mxu0 0
  %305 = vmatprep.subr.bf16.mxu0 0
  %306 = vmatpush1.bf16.msra.mxu0 0
  %307 = vmatprep.subr.bf16.mxu0 0
  %308 = vmatpush1.bf16.msra.mxu0 0
  %309 = vmatprep.subr.bf16.mxu0 0
  %310 = vmatpush1.bf16.msra.mxu0 0
  %311 = vmatprep.subr.bf16.mxu0 0
  %312 = vmatpush1.bf16.msra.mxu0 0
  %313 = vmatprep.subr.bf16.mxu0 0
  %314 = vmatpush1.bf16.msra.mxu0 0
  %315 = vmatprep.mubr.bf16.mxu0 0
  %316 = vmatmul.mubr.bf16.gmra.mrb[0].mxu0 %v176
  %v317 = vpop.f32.mrb[0].mxu0
  %v318 = vadd.f32 0.0, %v317
  %v319 = vpop.f32.mrb[0].mxu0
  %v320 = vadd.f32 0.0, %v319
  %v321 = vpop.f32.mrb[0].mxu0
  %v322 = vadd.f32 0.0, %v321
  %v323 = vpop.f32.mrb[0].mxu0
  %v324 = vadd.f32 0.0, %v323
  %325 = vdwg.mxu0
  %v328 = vunpack.c.l.b16 %v131
  %v329 = vunpack.c.l.b16 %v132
  %v330 = vpack.c.b16 %v329, %v328
  %v332 = vsel %vm174, %v330, 0
  %v335 = vsel %vm178, %v150, 0
  %v338 = vsel %vm178, %v151, 0
  %v341 = vsel %vm178, %v152, 0
  %v344 = vsel %vm178, %v153, 0
  %v347 = vsel %vm178, %v154, 0
  %v350 = vsel %vm178, %v155, 0
  %352 = vmatprep.subr.bf16.mxu0 %v338
  %353 = vmatpush1.bf16.msra.mxu0 %v335
  %354 = vmatprep.subr.bf16.mxu0 0
  %355 = vmatpush1.bf16.msra.mxu0 0
  %356 = vmatprep.subr.bf16.mxu0 0
  %357 = vmatpush1.bf16.msra.mxu0 0
  %358 = vmatprep.subr.bf16.mxu0 0
  %359 = vmatpush1.bf16.msra.mxu0 0
  %360 = vmatprep.subr.bf16.mxu0 0
  %361 = vmatpush1.bf16.msra.mxu0 0
  %362 = vmatprep.subr.bf16.mxu0 0
  %363 = vmatpush1.bf16.msra.mxu0 0
  %364 = vmatprep.subr.bf16.mxu0 0
  %365 = vmatpush1.bf16.msra.mxu0 0
  %366 = vmatprep.subr.bf16.mxu0 0
  %367 = vmatpush1.bf16.msra.mxu0 0
  %368 = vmatprep.subr.bf16.mxu0 0
  %369 = vmatpush1.bf16.msra.mxu0 0
  %370 = vmatprep.subr.bf16.mxu0 0
  %371 = vmatpush1.bf16.msra.mxu0 0
  %372 = vmatprep.subr.bf16.mxu0 0
  %373 = vmatpush1.bf16.msra.mxu0 0
  %374 = vmatprep.subr.bf16.mxu0 0
  %375 = vmatpush1.bf16.msra.mxu0 0
  %376 = vmatprep.subr.bf16.mxu0 0
  %377 = vmatpush1.bf16.msra.mxu0 0
  %378 = vmatprep.subr.bf16.mxu0 0
  %379 = vmatpush1.bf16.msra.mxu0 0
  %380 = vmatprep.subr.bf16.mxu0 0
  %381 = vmatpush1.bf16.msra.mxu0 0
  %382 = vmatprep.subr.bf16.mxu0 0
  %383 = vmatpush1.bf16.msra.mxu0 0
  %384 = vmatprep.mubr.bf16.mxu0 0
  %385 = vmatmul.mubr.bf16.gmra.mrb[0].mxu0 %v332
  %v386 = vpop.f32.mrb[0].mxu0
  %v387 = vadd.f32 %v232, %v386
  %v388 = vpop.f32.mrb[0].mxu0
  %v389 = vadd.f32 %v234, %v388
  %v390 = vpop.f32.mrb[0].mxu0
  %v391 = vadd.f32 %v236, %v390
  %v392 = vpop.f32.mrb[0].mxu0
  %v393 = vadd.f32 %v238, %v392
  %394 = vdwg.mxu0
  %395 = vmatprep.subr.bf16.mxu0 %v344
  %396 = vmatpush1.bf16.msra.mxu0 %v341
  %397 = vmatprep.subr.bf16.mxu0 0
  %398 = vmatpush1.bf16.msra.mxu0 0
  %399 = vmatprep.subr.bf16.mxu0 0
  %400 = vmatpush1.bf16.msra.mxu0 0
  %401 = vmatprep.subr.bf16.mxu0 0
  %402 = vmatpush1.bf16.msra.mxu0 0
  %403 = vmatprep.subr.bf16.mxu0 0
  %404 = vmatpush1.bf16.msra.mxu0 0
  %405 = vmatprep.subr.bf16.mxu0 0
  %406 = vmatpush1.bf16.msra.mxu0 0
  %407 = vmatprep.subr.bf16.mxu0 0
  %408 = vmatpush1.bf16.msra.mxu0 0
  %409 = vmatprep.subr.bf16.mxu0 0
  %410 = vmatpush1.bf16.msra.mxu0 0
  %411 = vmatprep.subr.bf16.mxu0 0
  %412 = vmatpush1.bf16.msra.mxu0 0
  %413 = vmatprep.subr.bf16.mxu0 0
  %414 = vmatpush1.bf16.msra.mxu0 0
  %415 = vmatprep.subr.bf16.mxu0 0
  %416 = vmatpush1.bf16.msra.mxu0 0
  %417 = vmatprep.subr.bf16.mxu0 0
  %418 = vmatpush1.bf16.msra.mxu0 0
  %419 = vmatprep.subr.bf16.mxu0 0
  %420 = vmatpush1.bf16.msra.mxu0 0
  %421 = vmatprep.subr.bf16.mxu0 0
  %422 = vmatpush1.bf16.msra.mxu0 0
  %423 = vmatprep.subr.bf16.mxu0 0
  %424 = vmatpush1.bf16.msra.mxu0 0
  %425 = vmatprep.subr.bf16.mxu0 0
  %426 = vmatpush1.bf16.msra.mxu0 0
  %427 = vmatprep.mubr.bf16.mxu0 0
  %428 = vmatmul.mubr.bf16.gmra.mrb[0].mxu0 %v332
  %v429 = vpop.f32.mrb[0].mxu0
  %v430 = vadd.f32 %v275, %v429
  %v431 = vpop.f32.mrb[0].mxu0
  %v432 = vadd.f32 %v277, %v431
  %v433 = vpop.f32.mrb[0].mxu0
  %v434 = vadd.f32 %v279, %v433
  %v435 = vpop.f32.mrb[0].mxu0
  %v436 = vadd.f32 %v281, %v435
  %437 = vdwg.mxu0
  %438 = vmatprep.subr.bf16.mxu0 %v350
  %439 = vmatpush1.bf16.msra.mxu0 %v347
  %440 = vmatprep.subr.bf16.mxu0 0
  %441 = vmatpush1.bf16.msra.mxu0 0
  %442 = vmatprep.subr.bf16.mxu0 0
  %443 = vmatpush1.bf16.msra.mxu0 0
  %444 = vmatprep.subr.bf16.mxu0 0
  %445 = vmatpush1.bf16.msra.mxu0 0
  %446 = vmatprep.subr.bf16.mxu0 0
  %447 = vmatpush1.bf16.msra.mxu0 0
  %448 = vmatprep.subr.bf16.mxu0 0
  %449 = vmatpush1.bf16.msra.mxu0 0
  %450 = vmatprep.subr.bf16.mxu0 0
  %451 = vmatpush1.bf16.msra.mxu0 0
  %452 = vmatprep.subr.bf16.mxu0 0
  %453 = vmatpush1.bf16.msra.mxu0 0
  %454 = vmatprep.subr.bf16.mxu0 0
  %455 = vmatpush1.bf16.msra.mxu0 0
  %456 = vmatprep.subr.bf16.mxu0 0
  %457 = vmatpush1.bf16.msra.mxu0 0
  %458 = vmatprep.subr.bf16.mxu0 0
  %459 = vmatpush1.bf16.msra.mxu0 0
  %460 = vmatprep.subr.bf16.mxu0 0
  %461 = vmatpush1.bf16.msra.mxu0 0
  %462 = vmatprep.subr.bf16.mxu0 0
  %463 = vmatpush1.bf16.msra.mxu0 0
  %464 = vmatprep.subr.bf16.mxu0 0
  %465 = vmatpush1.bf16.msra.mxu0 0
  %466 = vmatprep.subr.bf16.mxu0 0
  %467 = vmatpush1.bf16.msra.mxu0 0
  %468 = vmatprep.subr.bf16.mxu0 0
  %469 = vmatpush1.bf16.msra.mxu0 0
  %470 = vmatprep.mubr.bf16.mxu0 0
  %471 = vmatmul.mubr.bf16.gmra.mrb[0].mxu0 %v332
  %v472 = vpop.f32.mrb[0].mxu0
  %v473 = vadd.f32 %v318, %v472
  %v474 = vpop.f32.mrb[0].mxu0
  %v475 = vadd.f32 %v320, %v474
  %v476 = vpop.f32.mrb[0].mxu0
  %v477 = vadd.f32 %v322, %v476
  %v478 = vpop.f32.mrb[0].mxu0
  %v479 = vadd.f32 %v324, %v478
  %480 = vdwg.mxu0
  %s481 = scalar_lea.vmem %s4, 16
  %v482 = vld [vmem:[%s481] sm:$0xf]
  %v483 = vld [vmem:[%s481 + $0x4] sm:$0xf]
  %v486 = vunpack.c.l.b16 %v482
  %v487 = vunpack.c.l.b16 %v483
  %v488 = vpack.c.b16 %v487, %v486
  %489 = vrot.lane.b32.xlu0 %v150, 126
  %v490 = vpop.permute.xlu0 %489
  %491 = vrot.lane.b32.xlu0 %v151, 126
  %v492 = vpop.permute.xlu0 %491
  %493 = vrot.lane.b32.xlu0 %v152, 126
  %v494 = vpop.permute.xlu0 %493
  %495 = vrot.lane.b32.xlu0 %v153, 126
  %v496 = vpop.permute.xlu0 %495
  %497 = vrot.lane.b32.xlu0 %v154, 126
  %v498 = vpop.permute.xlu0 %497
  %499 = vrot.lane.b32.xlu0 %v155, 126
  %v500 = vpop.permute.xlu0 %499
  %vm501 = vcmask 1031168
  %v502 = vsel %vm501, %v490, %v492
  %v503 = vsel %vm501, %v492, %v494
  %v504 = vsel %vm501, %v494, %v496
  %v505 = vsel %vm501, %v496, %v498
  %v506 = vsel %vm501, %v498, %v500
  %v508 = vsel %vm174, %v488, 0
  %v511 = vsel %vm178, %v502, 0
  %v514 = vsel %vm178, %v503, 0
  %v517 = vsel %vm178, %v504, 0
  %v520 = vsel %vm178, %v505, 0
  %v523 = vsel %vm178, %v506, 0
  %v526 = vsel %vm178, %v500, 0
  %528 = vmatprep.subr.bf16.mxu0 %v514
  %529 = vmatpush1.bf16.msra.mxu0 %v511
  %530 = vmatprep.subr.bf16.mxu0 0
  %531 = vmatpush1.bf16.msra.mxu0 0
  %532 = vmatprep.subr.bf16.mxu0 0
  %533 = vmatpush1.bf16.msra.mxu0 0
  %534 = vmatprep.subr.bf16.mxu0 0
  %535 = vmatpush1.bf16.msra.mxu0 0
  %536 = vmatprep.subr.bf16.mxu0 0
  %537 = vmatpush1.bf16.msra.mxu0 0
  %538 = vmatprep.subr.bf16.mxu0 0
  %539 = vmatpush1.bf16.msra.mxu0 0
  %540 = vmatprep.subr.bf16.mxu0 0
  %541 = vmatpush1.bf16.msra.mxu0 0
  %542 = vmatprep.subr.bf16.mxu0 0
  %543 = vmatpush1.bf16.msra.mxu0 0
  %544 = vmatprep.subr.bf16.mxu0 0
  %545 = vmatpush1.bf16.msra.mxu0 0
  %546 = vmatprep.subr.bf16.mxu0 0
  %547 = vmatpush1.bf16.msra.mxu0 0
  %548 = vmatprep.subr.bf16.mxu0 0
  %549 = vmatpush1.bf16.msra.mxu0 0
  %550 = vmatprep.subr.bf16.mxu0 0
  %551 = vmatpush1.bf16.msra.mxu0 0
  %552 = vmatprep.subr.bf16.mxu0 0
  %553 = vmatpush1.bf16.msra.mxu0 0
  %554 = vmatprep.subr.bf16.mxu0 0
  %555 = vmatpush1.bf16.msra.mxu0 0
  %556 = vmatprep.subr.bf16.mxu0 0
  %557 = vmatpush1.bf16.msra.mxu0 0
  %558 = vmatprep.subr.bf16.mxu0 0
  %559 = vmatpush1.bf16.msra.mxu0 0
  %560 = vmatprep.mubr.bf16.mxu0 0
  %561 = vmatmul.mubr.bf16.gmra.mrb[0].mxu0 %v508
  %v562 = vpop.f32.mrb[0].mxu0
  %v563 = vadd.f32 0.0, %v562
  %v564 = vpop.f32.mrb[0].mxu0
  %v565 = vadd.f32 0.0, %v564
  %v566 = vpop.f32.mrb[0].mxu0
  %v567 = vadd.f32 0.0, %v566
  %v568 = vpop.f32.mrb[0].mxu0
  %v569 = vadd.f32 0.0, %v568
  %570 = vdwg.mxu0
  %571 = vmatprep.subr.bf16.mxu0 %v520
  %572 = vmatpush1.bf16.msra.mxu0 %v517
  %573 = vmatprep.subr.bf16.mxu0 0
  %574 = vmatpush1.bf16.msra.mxu0 0
  %575 = vmatprep.subr.bf16.mxu0 0
  %576 = vmatpush1.bf16.msra.mxu0 0
  %577 = vmatprep.subr.bf16.mxu0 0
  %578 = vmatpush1.bf16.msra.mxu0 0
  %579 = vmatprep.subr.bf16.mxu0 0
  %580 = vmatpush1.bf16.msra.mxu0 0
  %581 = vmatprep.subr.bf16.mxu0 0
  %582 = vmatpush1.bf16.msra.mxu0 0
  %583 = vmatprep.subr.bf16.mxu0 0
  %584 = vmatpush1.bf16.msra.mxu0 0
  %585 = vmatprep.subr.bf16.mxu0 0
  %586 = vmatpush1.bf16.msra.mxu0 0
  %587 = vmatprep.subr.bf16.mxu0 0
  %588 = vmatpush1.bf16.msra.mxu0 0
  %589 = vmatprep.subr.bf16.mxu0 0
  %590 = vmatpush1.bf16.msra.mxu0 0
  %591 = vmatprep.subr.bf16.mxu0 0
  %592 = vmatpush1.bf16.msra.mxu0 0
  %593 = vmatprep.subr.bf16.mxu0 0
  %594 = vmatpush1.bf16.msra.mxu0 0
  %595 = vmatprep.subr.bf16.mxu0 0
  %596 = vmatpush1.bf16.msra.mxu0 0
  %597 = vmatprep.subr.bf16.mxu0 0
  %598 = vmatpush1.bf16.msra.mxu0 0
  %599 = vmatprep.subr.bf16.mxu0 0
  %600 = vmatpush1.bf16.msra.mxu0 0
  %601 = vmatprep.subr.bf16.mxu0 0
  %602 = vmatpush1.bf16.msra.mxu0 0
  %603 = vmatprep.mubr.bf16.mxu0 0
  %604 = vmatmul.mubr.bf16.gmra.mrb[0].mxu0 %v508
  %v605 = vpop.f32.mrb[0].mxu0
  %v606 = vadd.f32 0.0, %v605
  %v607 = vpop.f32.mrb[0].mxu0
  %v608 = vadd.f32 0.0, %v607
  %v609 = vpop.f32.mrb[0].mxu0
  %v610 = vadd.f32 0.0, %v609
  %v611 = vpop.f32.mrb[0].mxu0
  %v612 = vadd.f32 0.0, %v611
  %613 = vdwg.mxu0
  %614 = vmatprep.subr.bf16.mxu0 %v526
  %615 = vmatpush1.bf16.msra.mxu0 %v523
  %616 = vmatprep.subr.bf16.mxu0 0
  %617 = vmatpush1.bf16.msra.mxu0 0
  %618 = vmatprep.subr.bf16.mxu0 0
  %619 = vmatpush1.bf16.msra.mxu0 0
  %620 = vmatprep.subr.bf16.mxu0 0
  %621 = vmatpush1.bf16.msra.mxu0 0
  %622 = vmatprep.subr.bf16.mxu0 0
  %623 = vmatpush1.bf16.msra.mxu0 0
  %624 = vmatprep.subr.bf16.mxu0 0
  %625 = vmatpush1.bf16.msra.mxu0 0
  %626 = vmatprep.subr.bf16.mxu0 0
  %627 = vmatpush1.bf16.msra.mxu0 0
  %628 = vmatprep.subr.bf16.mxu0 0
  %629 = vmatpush1.bf16.msra.mxu0 0
  %630 = vmatprep.subr.bf16.mxu0 0
  %631 = vmatpush1.bf16.msra.mxu0 0
  %632 = vmatprep.subr.bf16.mxu0 0
  %633 = vmatpush1.bf16.msra.mxu0 0
  %634 = vmatprep.subr.bf16.mxu0 0
  %635 = vmatpush1.bf16.msra.mxu0 0
  %636 = vmatprep.subr.bf16.mxu0 0
  %637 = vmatpush1.bf16.msra.mxu0 0
  %638 = vmatprep.subr.bf16.mxu0 0
  %639 = vmatpush1.bf16.msra.mxu0 0
  %640 = vmatprep.subr.bf16.mxu0 0
  %641 = vmatpush1.bf16.msra.mxu0 0
  %642 = vmatprep.subr.bf16.mxu0 0
  %643 = vmatpush1.bf16.msra.mxu0 0
  %644 = vmatprep.subr.bf16.mxu0 0
  %645 = vmatpush1.bf16.msra.mxu0 0
  %646 = vmatprep.mubr.bf16.mxu0 0
  %647 = vmatmul.mubr.bf16.gmra.mrb[0].mxu0 %v508
  %v648 = vpop.f32.mrb[0].mxu0
  %v649 = vadd.f32 0.0, %v648
  %v650 = vpop.f32.mrb[0].mxu0
  %v651 = vadd.f32 0.0, %v650
  %v652 = vpop.f32.mrb[0].mxu0
  %v653 = vadd.f32 0.0, %v652
  %v654 = vpop.f32.mrb[0].mxu0
  %v655 = vadd.f32 0.0, %v654
  %656 = vdwg.mxu0
  %v657 = vadd.f32 %v387, %v563
  %v658 = vadd.f32 %v389, %v565
  %v659 = vadd.f32 %v430, %v606
  %v660 = vadd.f32 %v432, %v608
  %v661 = vadd.f32 %v473, %v649
  %v662 = vadd.f32 %v475, %v651
  %v663 = vadd.f32 %v391, %v567
  %v664 = vadd.f32 %v393, %v569
  %v665 = vadd.f32 %v434, %v610
  %v666 = vadd.f32 %v436, %v612
  %v667 = vadd.f32 %v477, %v653
  %v668 = vadd.f32 %v479, %v655
  %s669 = scalar_lea.vmem %s4, 24
  %v670 = vld [vmem:[%s669] sm:$0xf]
  %v671 = vld [vmem:[%s669 + $0x4] sm:$0xf]
  %v674 = vunpack.c.l.b16 %v670
  %v675 = vunpack.c.l.b16 %v671
  %v676 = vpack.c.b16 %v675, %v674
  %677 = vrot.lane.b32.xlu0 %v150, 110
  %v678 = vpop.permute.xlu0 %677
  %679 = vrot.lane.b32.xlu0 %v151, 110
  %v680 = vpop.permute.xlu0 %679
  %681 = vrot.lane.b32.xlu0 %v152, 110
  %v682 = vpop.permute.xlu0 %681
  %683 = vrot.lane.b32.xlu0 %v153, 110
  %v684 = vpop.permute.xlu0 %683
  %685 = vrot.lane.b32.xlu0 %v154, 110
  %v686 = vpop.permute.xlu0 %685
  %687 = vrot.lane.b32.xlu0 %v155, 110
  %v688 = vpop.permute.xlu0 %687
  %vm689 = vcmask 900096
  %v690 = vsel %vm689, %v678, %v680
  %v691 = vsel %vm689, %v680, %v682
  %v692 = vsel %vm689, %v682, %v684
  %v693 = vsel %vm689, %v684, %v686
  %v694 = vsel %vm689, %v686, %v688
  %v696 = vsel %vm174, %v676, 0
  %v699 = vsel %vm178, %v690, 0
  %v702 = vsel %vm178, %v691, 0
  %v705 = vsel %vm178, %v692, 0
  %v708 = vsel %vm178, %v693, 0
  %v711 = vsel %vm178, %v694, 0
  %v714 = vsel %vm178, %v688, 0
  %716 = vmatprep.subr.bf16.mxu0 %v702
  %717 = vmatpush1.bf16.msra.mxu0 %v699
  %718 = vmatprep.subr.bf16.mxu0 0
  %719 = vmatpush1.bf16.msra.mxu0 0
  %720 = vmatprep.subr.bf16.mxu0 0
  %721 = vmatpush1.bf16.msra.mxu0 0
  %722 = vmatprep.subr.bf16.mxu0 0
  %723 = vmatpush1.bf16.msra.mxu0 0
  %724 = vmatprep.subr.bf16.mxu0 0
  %725 = vmatpush1.bf16.msra.mxu0 0
  %726 = vmatprep.subr.bf16.mxu0 0
  %727 = vmatpush1.bf16.msra.mxu0 0
  %728 = vmatprep.subr.bf16.mxu0 0
  %729 = vmatpush1.bf16.msra.mxu0 0
  %730 = vmatprep.subr.bf16.mxu0 0
  %731 = vmatpush1.bf16.msra.mxu0 0
  %732 = vmatprep.subr.bf16.mxu0 0
  %733 = vmatpush1.bf16.msra.mxu0 0
  %734 = vmatprep.subr.bf16.mxu0 0
  %735 = vmatpush1.bf16.msra.mxu0 0
  %736 = vmatprep.subr.bf16.mxu0 0
  %737 = vmatpush1.bf16.msra.mxu0 0
  %738 = vmatprep.subr.bf16.mxu0 0
  %739 = vmatpush1.bf16.msra.mxu0 0
  %740 = vmatprep.subr.bf16.mxu0 0
  %741 = vmatpush1.bf16.msra.mxu0 0
  %742 = vmatprep.subr.bf16.mxu0 0
  %743 = vmatpush1.bf16.msra.mxu0 0
  %744 = vmatprep.subr.bf16.mxu0 0
  %745 = vmatpush1.bf16.msra.mxu0 0
  %746 = vmatprep.subr.bf16.mxu0 0
  %747 = vmatpush1.bf16.msra.mxu0 0
  %748 = vmatprep.mubr.bf16.mxu0 0
  %749 = vmatmul.mubr.bf16.gmra.mrb[0].mxu0 %v696
  %v750 = vpop.f32.mrb[0].mxu0
  %v751 = vadd.f32 0.0, %v750
  %v752 = vpop.f32.mrb[0].mxu0
  %v753 = vadd.f32 0.0, %v752
  %v754 = vpop.f32.mrb[0].mxu0
  %v755 = vadd.f32 0.0, %v754
  %v756 = vpop.f32.mrb[0].mxu0
  %v757 = vadd.f32 0.0, %v756
  %758 = vdwg.mxu0
  %759 = vmatprep.subr.bf16.mxu0 %v708
  %760 = vmatpush1.bf16.msra.mxu0 %v705
  %761 = vmatprep.subr.bf16.mxu0 0
  %762 = vmatpush1.bf16.msra.mxu0 0
  %763 = vmatprep.subr.bf16.mxu0 0
  %764 = vmatpush1.bf16.msra.mxu0 0
  %765 = vmatprep.subr.bf16.mxu0 0
  %766 = vmatpush1.bf16.msra.mxu0 0
  %767 = vmatprep.subr.bf16.mxu0 0
  %768 = vmatpush1.bf16.msra.mxu0 0
  %769 = vmatprep.subr.bf16.mxu0 0
  %770 = vmatpush1.bf16.msra.mxu0 0
  %771 = vmatprep.subr.bf16.mxu0 0
  %772 = vmatpush1.bf16.msra.mxu0 0
  %773 = vmatprep.subr.bf16.mxu0 0
  %774 = vmatpush1.bf16.msra.mxu0 0
  %775 = vmatprep.subr.bf16.mxu0 0
  %776 = vmatpush1.bf16.msra.mxu0 0
  %777 = vmatprep.subr.bf16.mxu0 0
  %778 = vmatpush1.bf16.msra.mxu0 0
  %779 = vmatprep.subr.bf16.mxu0 0
  %780 = vmatpush1.bf16.msra.mxu0 0
  %781 = vmatprep.subr.bf16.mxu0 0
  %782 = vmatpush1.bf16.msra.mxu0 0
  %783 = vmatprep.subr.bf16.mxu0 0
  %784 = vmatpush1.bf16.msra.mxu0 0
  %785 = vmatprep.subr.bf16.mxu0 0
  %786 = vmatpush1.bf16.msra.mxu0 0
  %787 = vmatprep.subr.bf16.mxu0 0
  %788 = vmatpush1.bf16.msra.mxu0 0
  %789 = vmatprep.subr.bf16.mxu0 0
  %790 = vmatpush1.bf16.msra.mxu0 0
  %791 = vmatprep.mubr.bf16.mxu0 0
  %792 = vmatmul.mubr.bf16.gmra.mrb[0].mxu0 %v696
  %v793 = vpop.f32.mrb[0].mxu0
  %v794 = vadd.f32 0.0, %v793
  %v795 = vpop.f32.mrb[0].mxu0
  %v796 = vadd.f32 0.0, %v795
  %v797 = vpop.f32.mrb[0].mxu0
  %v798 = vadd.f32 0.0, %v797
  %v799 = vpop.f32.mrb[0].mxu0
  %v800 = vadd.f32 0.0, %v799
  %801 = vdwg.mxu0
  %802 = vmatprep.subr.bf16.mxu0 %v714
  %803 = vmatpush1.bf16.msra.mxu0 %v711
  %804 = vmatprep.subr.bf16.mxu0 0
  %805 = vmatpush1.bf16.msra.mxu0 0
  %806 = vmatprep.subr.bf16.mxu0 0
  %807 = vmatpush1.bf16.msra.mxu0 0
  %808 = vmatprep.subr.bf16.mxu0 0
  %809 = vmatpush1.bf16.msra.mxu0 0
  %810 = vmatprep.subr.bf16.mxu0 0
  %811 = vmatpush1.bf16.msra.mxu0 0
  %812 = vmatprep.subr.bf16.mxu0 0
  %813 = vmatpush1.bf16.msra.mxu0 0
  %814 = vmatprep.subr.bf16.mxu0 0
  %815 = vmatpush1.bf16.msra.mxu0 0
  %816 = vmatprep.subr.bf16.mxu0 0
  %817 = vmatpush1.bf16.msra.mxu0 0
  %818 = vmatprep.subr.bf16.mxu0 0
  %819 = vmatpush1.bf16.msra.mxu0 0
  %820 = vmatprep.subr.bf16.mxu0 0
  %821 = vmatpush1.bf16.msra.mxu0 0
  %822 = vmatprep.subr.bf16.mxu0 0
  %823 = vmatpush1.bf16.msra.mxu0 0
  %824 = vmatprep.subr.bf16.mxu0 0
  %825 = vmatpush1.bf16.msra.mxu0 0
  %826 = vmatprep.subr.bf16.mxu0 0
  %827 = vmatpush1.bf16.msra.mxu0 0
  %828 = vmatprep.subr.bf16.mxu0 0
  %829 = vmatpush1.bf16.msra.mxu0 0
  %830 = vmatprep.subr.bf16.mxu0 0
  %831 = vmatpush1.bf16.msra.mxu0 0
  %832 = vmatprep.subr.bf16.mxu0 0
  %833 = vmatpush1.bf16.msra.mxu0 0
  %834 = vmatprep.mubr.bf16.mxu0 0
  %835 = vmatmul.mubr.bf16.gmra.mrb[0].mxu0 %v696
  %v836 = vpop.f32.mrb[0].mxu0
  %v837 = vadd.f32 0.0, %v836
  %v838 = vpop.f32.mrb[0].mxu0
  %v839 = vadd.f32 0.0, %v838
  %v840 = vpop.f32.mrb[0].mxu0
  %v841 = vadd.f32 0.0, %v840
  %v842 = vpop.f32.mrb[0].mxu0
  %v843 = vadd.f32 0.0, %v842
  %844 = vdwg.mxu0
  %v845 = vadd.f32 %v657, %v751
  %v846 = vadd.f32 %v658, %v753
  %v847 = vadd.f32 %v659, %v794
  %v848 = vadd.f32 %v660, %v796
  %v849 = vadd.f32 %v661, %v837
  %v850 = vadd.f32 %v662, %v839
  %v851 = vadd.f32 %v663, %v755
  %v852 = vadd.f32 %v664, %v757
  %v853 = vadd.f32 %v665, %v798
  %v854 = vadd.f32 %v666, %v800
  %v855 = vadd.f32 %v667, %v841
  %v856 = vadd.f32 %v668, %v843
  %s857 = scalar_lea.vmem %s4, 32
  %v858 = vld [vmem:[%s857] sm:$0xf]
  %v859 = vld [vmem:[%s857 + $0x4] sm:$0xf]
  %v862 = vunpack.c.l.b16 %v858
  %v863 = vunpack.c.l.b16 %v859
  %v864 = vpack.c.b16 %v863, %v862
  %865 = vrot.lane.b32.xlu0 %v150, 109
  %v866 = vpop.permute.xlu0 %865
  %867 = vrot.lane.b32.xlu0 %v151, 109
  %v868 = vpop.permute.xlu0 %867
  %869 = vrot.lane.b32.xlu0 %v152, 109
  %v870 = vpop.permute.xlu0 %869
  %871 = vrot.lane.b32.xlu0 %v153, 109
  %v872 = vpop.permute.xlu0 %871
  %873 = vrot.lane.b32.xlu0 %v154, 109
  %v874 = vpop.permute.xlu0 %873
  %875 = vrot.lane.b32.xlu0 %v155, 109
  %v876 = vpop.permute.xlu0 %875
  %vm877 = vcmask 891904
  %v878 = vsel %vm877, %v866, %v868
  %v879 = vsel %vm877, %v868, %v870
  %v880 = vsel %vm877, %v870, %v872
  %v881 = vsel %vm877, %v872, %v874
  %v882 = vsel %vm877, %v874, %v876
  %v884 = vsel %vm174, %v864, 0
  %v887 = vsel %vm178, %v878, 0
  %v890 = vsel %vm178, %v879, 0
  %v893 = vsel %vm178, %v880, 0
  %v896 = vsel %vm178, %v881, 0
  %v899 = vsel %vm178, %v882, 0
  %v902 = vsel %vm178, %v876, 0
  %904 = vmatprep.subr.bf16.mxu0 %v890
  %905 = vmatpush1.bf16.msra.mxu0 %v887
  %906 = vmatprep.subr.bf16.mxu0 0
  %907 = vmatpush1.bf16.msra.mxu0 0
  %908 = vmatprep.subr.bf16.mxu0 0
  %909 = vmatpush1.bf16.msra.mxu0 0
  %910 = vmatprep.subr.bf16.mxu0 0
  %911 = vmatpush1.bf16.msra.mxu0 0
  %912 = vmatprep.subr.bf16.mxu0 0
  %913 = vmatpush1.bf16.msra.mxu0 0
  %914 = vmatprep.subr.bf16.mxu0 0
  %915 = vmatpush1.bf16.msra.mxu0 0
  %916 = vmatprep.subr.bf16.mxu0 0
  %917 = vmatpush1.bf16.msra.mxu0 0
  %918 = vmatprep.subr.bf16.mxu0 0
  %919 = vmatpush1.bf16.msra.mxu0 0
  %920 = vmatprep.subr.bf16.mxu0 0
  %921 = vmatpush1.bf16.msra.mxu0 0
  %922 = vmatprep.subr.bf16.mxu0 0
  %923 = vmatpush1.bf16.msra.mxu0 0
  %924 = vmatprep.subr.bf16.mxu0 0
  %925 = vmatpush1.bf16.msra.mxu0 0
  %926 = vmatprep.subr.bf16.mxu0 0
  %927 = vmatpush1.bf16.msra.mxu0 0
  %928 = vmatprep.subr.bf16.mxu0 0
  %929 = vmatpush1.bf16.msra.mxu0 0
  %930 = vmatprep.subr.bf16.mxu0 0
  %931 = vmatpush1.bf16.msra.mxu0 0
  %932 = vmatprep.subr.bf16.mxu0 0
  %933 = vmatpush1.bf16.msra.mxu0 0
  %934 = vmatprep.subr.bf16.mxu0 0
  %935 = vmatpush1.bf16.msra.mxu0 0
  %936 = vmatprep.mubr.bf16.mxu0 0
  %937 = vmatmul.mubr.bf16.gmra.mrb[0].mxu0 %v884
  %v938 = vpop.f32.mrb[0].mxu0
  %v939 = vadd.f32 0.0, %v938
  %v940 = vpop.f32.mrb[0].mxu0
  %v941 = vadd.f32 0.0, %v940
  %v942 = vpop.f32.mrb[0].mxu0
  %v943 = vadd.f32 0.0, %v942
  %v944 = vpop.f32.mrb[0].mxu0
  %v945 = vadd.f32 0.0, %v944
  %946 = vdwg.mxu0
  %947 = vmatprep.subr.bf16.mxu0 %v896
  %948 = vmatpush1.bf16.msra.mxu0 %v893
  %949 = vmatprep.subr.bf16.mxu0 0
  %950 = vmatpush1.bf16.msra.mxu0 0
  %951 = vmatprep.subr.bf16.mxu0 0
  %952 = vmatpush1.bf16.msra.mxu0 0
  %953 = vmatprep.subr.bf16.mxu0 0
  %954 = vmatpush1.bf16.msra.mxu0 0
  %955 = vmatprep.subr.bf16.mxu0 0
  %956 = vmatpush1.bf16.msra.mxu0 0
  %957 = vmatprep.subr.bf16.mxu0 0
  %958 = vmatpush1.bf16.msra.mxu0 0
  %959 = vmatprep.subr.bf16.mxu0 0
  %960 = vmatpush1.bf16.msra.mxu0 0
  %961 = vmatprep.subr.bf16.mxu0 0
  %962 = vmatpush1.bf16.msra.mxu0 0
  %963 = vmatprep.subr.bf16.mxu0 0
  %964 = vmatpush1.bf16.msra.mxu0 0
  %965 = vmatprep.subr.bf16.mxu0 0
  %966 = vmatpush1.bf16.msra.mxu0 0
  %967 = vmatprep.subr.bf16.mxu0 0
  %968 = vmatpush1.bf16.msra.mxu0 0
  %969 = vmatprep.subr.bf16.mxu0 0
  %970 = vmatpush1.bf16.msra.mxu0 0
  %971 = vmatprep.subr.bf16.mxu0 0
  %972 = vmatpush1.bf16.msra.mxu0 0
  %973 = vmatprep.subr.bf16.mxu0 0
  %974 = vmatpush1.bf16.msra.mxu0 0
  %975 = vmatprep.subr.bf16.mxu0 0
  %976 = vmatpush1.bf16.msra.mxu0 0
  %977 = vmatprep.subr.bf16.mxu0 0
  %978 = vmatpush1.bf16.msra.mxu0 0
  %979 = vmatprep.mubr.bf16.mxu0 0
  %980 = vmatmul.mubr.bf16.gmra.mrb[0].mxu0 %v884
  %v981 = vpop.f32.mrb[0].mxu0
  %v982 = vadd.f32 0.0, %v981
  %v983 = vpop.f32.mrb[0].mxu0
  %v984 = vadd.f32 0.0, %v983
  %v985 = vpop.f32.mrb[0].mxu0
  %v986 = vadd.f32 0.0, %v985
  %v987 = vpop.f32.mrb[0].mxu0
  %v988 = vadd.f32 0.0, %v987
  %989 = vdwg.mxu0
  %990 = vmatprep.subr.bf16.mxu0 %v902
  %991 = vmatpush1.bf16.msra.mxu0 %v899
  %992 = vmatprep.subr.bf16.mxu0 0
  %993 = vmatpush1.bf16.msra.mxu0 0
  %994 = vmatprep.subr.bf16.mxu0 0
  %995 = vmatpush1.bf16.msra.mxu0 0
  %996 = vmatprep.subr.bf16.mxu0 0
  %997 = vmatpush1.bf16.msra.mxu0 0
  %998 = vmatprep.subr.bf16.mxu0 0
  %999 = vmatpush1.bf16.msra.mxu0 0
  %1000 = vmatprep.subr.bf16.mxu0 0
  %1001 = vmatpush1.bf16.msra.mxu0 0
  %1002 = vmatprep.subr.bf16.mxu0 0
  %1003 = vmatpush1.bf16.msra.mxu0 0
  %1004 = vmatprep.subr.bf16.mxu0 0
  %1005 = vmatpush1.bf16.msra.mxu0 0
  %1006 = vmatprep.subr.bf16.mxu0 0
  %1007 = vmatpush1.bf16.msra.mxu0 0
  %1008 = vmatprep.subr.bf16.mxu0 0
  %1009 = vmatpush1.bf16.msra.mxu0 0
  %1010 = vmatprep.subr.bf16.mxu0 0
  %1011 = vmatpush1.bf16.msra.mxu0 0
  %1012 = vmatprep.subr.bf16.mxu0 0
  %1013 = vmatpush1.bf16.msra.mxu0 0
  %1014 = vmatprep.subr.bf16.mxu0 0
  %1015 = vmatpush1.bf16.msra.mxu0 0
  %1016 = vmatprep.subr.bf16.mxu0 0
  %1017 = vmatpush1.bf16.msra.mxu0 0
  %1018 = vmatprep.subr.bf16.mxu0 0
  %1019 = vmatpush1.bf16.msra.mxu0 0
  %1020 = vmatprep.subr.bf16.mxu0 0
  %1021 = vmatpush1.bf16.msra.mxu0 0
  %1022 = vmatprep.mubr.bf16.mxu0 0
  %1023 = vmatmul.mubr.bf16.gmra.mrb[0].mxu0 %v884
  %v1024 = vpop.f32.mrb[0].mxu0
  %v1025 = vadd.f32 0.0, %v1024
  %v1026 = vpop.f32.mrb[0].mxu0
  %v1027 = vadd.f32 0.0, %v1026
  %v1028 = vpop.f32.mrb[0].mxu0
  %v1029 = vadd.f32 0.0, %v1028
  %v1030 = vpop.f32.mrb[0].mxu0
  %v1031 = vadd.f32 0.0, %v1030
  %1032 = vdwg.mxu0
  %v1033 = vadd.f32 %v845, %v939
  %v1034 = vadd.f32 %v846, %v941
  %v1035 = vadd.f32 %v847, %v982
  %v1036 = vadd.f32 %v848, %v984
  %v1037 = vadd.f32 %v849, %v1025
  %v1038 = vadd.f32 %v850, %v1027
  %v1039 = vadd.f32 %v851, %v943
  %v1040 = vadd.f32 %v852, %v945
  %v1041 = vadd.f32 %v853, %v986
  %v1042 = vadd.f32 %v854, %v988
  %v1043 = vadd.f32 %v855, %v1029
  %v1044 = vadd.f32 %v856, %v1031
  %s1045 = scalar_lea.vmem %s4, 40
  %v1046 = vld [vmem:[%s1045] sm:$0xf]
  %v1047 = vld [vmem:[%s1045 + $0x4] sm:$0xf]
  %v1050 = vunpack.c.l.b16 %v1046
  %v1051 = vunpack.c.l.b16 %v1047
  %v1052 = vpack.c.b16 %v1051, %v1050
  %1053 = vrot.lane.b32.xlu0 %v150, 108
  %v1054 = vpop.permute.xlu0 %1053
  %1055 = vrot.lane.b32.xlu0 %v151, 108
  %v1056 = vpop.permute.xlu0 %1055
  %1057 = vrot.lane.b32.xlu0 %v152, 108
  %v1058 = vpop.permute.xlu0 %1057
  %1059 = vrot.lane.b32.xlu0 %v153, 108
  %v1060 = vpop.permute.xlu0 %1059
  %1061 = vrot.lane.b32.xlu0 %v154, 108
  %v1062 = vpop.permute.xlu0 %1061
  %1063 = vrot.lane.b32.xlu0 %v155, 108
  %v1064 = vpop.permute.xlu0 %1063
  %vm1065 = vcmask 883712
  %v1066 = vsel %vm1065, %v1054, %v1056
  %v1067 = vsel %vm1065, %v1056, %v1058
  %v1068 = vsel %vm1065, %v1058, %v1060
  %v1069 = vsel %vm1065, %v1060, %v1062
  %v1070 = vsel %vm1065, %v1062, %v1064
  %v1072 = vsel %vm174, %v1052, 0
  %v1075 = vsel %vm178, %v1066, 0
  %v1078 = vsel %vm178, %v1067, 0
  %v1081 = vsel %vm178, %v1068, 0
  %v1084 = vsel %vm178, %v1069, 0
  %v1087 = vsel %vm178, %v1070, 0
  %v1090 = vsel %vm178, %v1064, 0
  %1092 = vmatprep.subr.bf16.mxu0 %v1078
  %1093 = vmatpush1.bf16.msra.mxu0 %v1075
  %1094 = vmatprep.subr.bf16.mxu0 0
  %1095 = vmatpush1.bf16.msra.mxu0 0
  %1096 = vmatprep.subr.bf16.mxu0 0
  %1097 = vmatpush1.bf16.msra.mxu0 0
  %1098 = vmatprep.subr.bf16.mxu0 0
  %1099 = vmatpush1.bf16.msra.mxu0 0
  %1100 = vmatprep.subr.bf16.mxu0 0
  %1101 = vmatpush1.bf16.msra.mxu0 0
  %1102 = vmatprep.subr.bf16.mxu0 0
  %1103 = vmatpush1.bf16.msra.mxu0 0
  %1104 = vmatprep.subr.bf16.mxu0 0
  %1105 = vmatpush1.bf16.msra.mxu0 0
  %1106 = vmatprep.subr.bf16.mxu0 0
  %1107 = vmatpush1.bf16.msra.mxu0 0
  %1108 = vmatprep.subr.bf16.mxu0 0
  %1109 = vmatpush1.bf16.msra.mxu0 0
  %1110 = vmatprep.subr.bf16.mxu0 0
  %1111 = vmatpush1.bf16.msra.mxu0 0
  %1112 = vmatprep.subr.bf16.mxu0 0
  %1113 = vmatpush1.bf16.msra.mxu0 0
  %1114 = vmatprep.subr.bf16.mxu0 0
  %1115 = vmatpush1.bf16.msra.mxu0 0
  %1116 = vmatprep.subr.bf16.mxu0 0
  %1117 = vmatpush1.bf16.msra.mxu0 0
  %1118 = vmatprep.subr.bf16.mxu0 0
  %1119 = vmatpush1.bf16.msra.mxu0 0
  %1120 = vmatprep.subr.bf16.mxu0 0
  %1121 = vmatpush1.bf16.msra.mxu0 0
  %1122 = vmatprep.subr.bf16.mxu0 0
  %1123 = vmatpush1.bf16.msra.mxu0 0
  %1124 = vmatprep.mubr.bf16.mxu0 0
  %1125 = vmatmul.mubr.bf16.gmra.mrb[0].mxu0 %v1072
  %v1126 = vpop.f32.mrb[0].mxu0
  %v1127 = vadd.f32 0.0, %v1126
  %v1128 = vpop.f32.mrb[0].mxu0
  %v1129 = vadd.f32 0.0, %v1128
  %v1130 = vpop.f32.mrb[0].mxu0
  %v1131 = vadd.f32 0.0, %v1130
  %v1132 = vpop.f32.mrb[0].mxu0
  %v1133 = vadd.f32 0.0, %v1132
  %1134 = vdwg.mxu0
  %1135 = vmatprep.subr.bf16.mxu0 %v1084
  %1136 = vmatpush1.bf16.msra.mxu0 %v1081
  %1137 = vmatprep.subr.bf16.mxu0 0
  %1138 = vmatpush1.bf16.msra.mxu0 0
  %1139 = vmatprep.subr.bf16.mxu0 0
  %1140 = vmatpush1.bf16.msra.mxu0 0
  %1141 = vmatprep.subr.bf16.mxu0 0
  %1142 = vmatpush1.bf16.msra.mxu0 0
  %1143 = vmatprep.subr.bf16.mxu0 0
  %1144 = vmatpush1.bf16.msra.mxu0 0
  %1145 = vmatprep.subr.bf16.mxu0 0
  %1146 = vmatpush1.bf16.msra.mxu0 0
  %1147 = vmatprep.subr.bf16.mxu0 0
  %1148 = vmatpush1.bf16.msra.mxu0 0
  %1149 = vmatprep.subr.bf16.mxu0 0
  %1150 = vmatpush1.bf16.msra.mxu0 0
  %1151 = vmatprep.subr.bf16.mxu0 0
  %1152 = vmatpush1.bf16.msra.mxu0 0
  %1153 = vmatprep.subr.bf16.mxu0 0
  %1154 = vmatpush1.bf16.msra.mxu0 0
  %1155 = vmatprep.subr.bf16.mxu0 0
  %1156 = vmatpush1.bf16.msra.mxu0 0
  %1157 = vmatprep.subr.bf16.mxu0 0
  %1158 = vmatpush1.bf16.msra.mxu0 0
  %1159 = vmatprep.subr.bf16.mxu0 0
  %1160 = vmatpush1.bf16.msra.mxu0 0
  %1161 = vmatprep.subr.bf16.mxu0 0
  %1162 = vmatpush1.bf16.msra.mxu0 0
  %1163 = vmatprep.subr.bf16.mxu0 0
  %1164 = vmatpush1.bf16.msra.mxu0 0
  %1165 = vmatprep.subr.bf16.mxu0 0
  %1166 = vmatpush1.bf16.msra.mxu0 0
  %1167 = vmatprep.mubr.bf16.mxu0 0
  %1168 = vmatmul.mubr.bf16.gmra.mrb[0].mxu0 %v1072
  %v1169 = vpop.f32.mrb[0].mxu0
  %v1170 = vadd.f32 0.0, %v1169
  %v1171 = vpop.f32.mrb[0].mxu0
  %v1172 = vadd.f32 0.0, %v1171
  %v1173 = vpop.f32.mrb[0].mxu0
  %v1174 = vadd.f32 0.0, %v1173
  %v1175 = vpop.f32.mrb[0].mxu0
  %v1176 = vadd.f32 0.0, %v1175
  %1177 = vdwg.mxu0
  %1178 = vmatprep.subr.bf16.mxu0 %v1090
  %1179 = vmatpush1.bf16.msra.mxu0 %v1087
  %1180 = vmatprep.subr.bf16.mxu0 0
  %1181 = vmatpush1.bf16.msra.mxu0 0
  %1182 = vmatprep.subr.bf16.mxu0 0
  %1183 = vmatpush1.bf16.msra.mxu0 0
  %1184 = vmatprep.subr.bf16.mxu0 0
  %1185 = vmatpush1.bf16.msra.mxu0 0
  %1186 = vmatprep.subr.bf16.mxu0 0
  %1187 = vmatpush1.bf16.msra.mxu0 0
  %1188 = vmatprep.subr.bf16.mxu0 0
  %1189 = vmatpush1.bf16.msra.mxu0 0
  %1190 = vmatprep.subr.bf16.mxu0 0
  %1191 = vmatpush1.bf16.msra.mxu0 0
  %1192 = vmatprep.subr.bf16.mxu0 0
  %1193 = vmatpush1.bf16.msra.mxu0 0
  %1194 = vmatprep.subr.bf16.mxu0 0
  %1195 = vmatpush1.bf16.msra.mxu0 0
  %1196 = vmatprep.subr.bf16.mxu0 0
  %1197 = vmatpush1.bf16.msra.mxu0 0
  %1198 = vmatprep.subr.bf16.mxu0 0
  %1199 = vmatpush1.bf16.msra.mxu0 0
  %1200 = vmatprep.subr.bf16.mxu0 0
  %1201 = vmatpush1.bf16.msra.mxu0 0
  %1202 = vmatprep.subr.bf16.mxu0 0
  %1203 = vmatpush1.bf16.msra.mxu0 0
  %1204 = vmatprep.subr.bf16.mxu0 0
  %1205 = vmatpush1.bf16.msra.mxu0 0
  %1206 = vmatprep.subr.bf16.mxu0 0
  %1207 = vmatpush1.bf16.msra.mxu0 0
  %1208 = vmatprep.subr.bf16.mxu0 0
  %1209 = vmatpush1.bf16.msra.mxu0 0
  %1210 = vmatprep.mubr.bf16.mxu0 0
  %1211 = vmatmul.mubr.bf16.gmra.mrb[0].mxu0 %v1072
  %v1212 = vpop.f32.mrb[0].mxu0
  %v1213 = vadd.f32 0.0, %v1212
  %v1214 = vpop.f32.mrb[0].mxu0
  %v1215 = vadd.f32 0.0, %v1214
  %v1216 = vpop.f32.mrb[0].mxu0
  %v1217 = vadd.f32 0.0, %v1216
  %v1218 = vpop.f32.mrb[0].mxu0
  %v1219 = vadd.f32 0.0, %v1218
  %1220 = vdwg.mxu0
  %v1221 = vadd.f32 %v1033, %v1127
  %v1222 = vadd.f32 %v1034, %v1129
  %v1223 = vadd.f32 %v1035, %v1170
  %v1224 = vadd.f32 %v1036, %v1172
  %v1225 = vadd.f32 %v1037, %v1213
  %v1226 = vadd.f32 %v1038, %v1215
  %v1227 = vadd.f32 %v1039, %v1131
  %v1228 = vadd.f32 %v1040, %v1133
  %v1229 = vadd.f32 %v1041, %v1174
  %v1230 = vadd.f32 %v1042, %v1176
  %v1231 = vadd.f32 %v1043, %v1217
  %v1232 = vadd.f32 %v1044, %v1219
  %s1233 = scalar_lea.vmem %s4, 48
  %v1234 = vld [vmem:[%s1233] sm:$0xf]
  %v1235 = vld [vmem:[%s1233 + $0x4] sm:$0xf]
  %v1238 = vunpack.c.l.b16 %v1234
  %v1239 = vunpack.c.l.b16 %v1235
  %v1240 = vpack.c.b16 %v1239, %v1238
  %1241 = vrot.lane.b32.xlu0 %v150, 92
  %v1242 = vpop.permute.xlu0 %1241
  %1243 = vrot.lane.b32.xlu0 %v151, 92
  %v1244 = vpop.permute.xlu0 %1243
  %1245 = vrot.lane.b32.xlu0 %v152, 92
  %v1246 = vpop.permute.xlu0 %1245
  %1247 = vrot.lane.b32.xlu0 %v153, 92
  %v1248 = vpop.permute.xlu0 %1247
  %1249 = vrot.lane.b32.xlu0 %v154, 92
  %v1250 = vpop.permute.xlu0 %1249
  %1251 = vrot.lane.b32.xlu0 %v155, 92
  %v1252 = vpop.permute.xlu0 %1251
  %vm1253 = vcmask 752640
  %v1254 = vsel %vm1253, %v1242, %v1244
  %v1255 = vsel %vm1253, %v1244, %v1246
  %v1256 = vsel %vm1253, %v1246, %v1248
  %v1257 = vsel %vm1253, %v1248, %v1250
  %v1258 = vsel %vm1253, %v1250, %v1252
  %v1260 = vsel %vm174, %v1240, 0
  %v1263 = vsel %vm178, %v1254, 0
  %v1266 = vsel %vm178, %v1255, 0
  %v1269 = vsel %vm178, %v1256, 0
  %v1272 = vsel %vm178, %v1257, 0
  %v1275 = vsel %vm178, %v1258, 0
  %v1278 = vsel %vm178, %v1252, 0
  %1280 = vmatprep.subr.bf16.mxu0 %v1266
  %1281 = vmatpush1.bf16.msra.mxu0 %v1263
  %1282 = vmatprep.subr.bf16.mxu0 0
  %1283 = vmatpush1.bf16.msra.mxu0 0
  %1284 = vmatprep.subr.bf16.mxu0 0
  %1285 = vmatpush1.bf16.msra.mxu0 0
  %1286 = vmatprep.subr.bf16.mxu0 0
  %1287 = vmatpush1.bf16.msra.mxu0 0
  %1288 = vmatprep.subr.bf16.mxu0 0
  %1289 = vmatpush1.bf16.msra.mxu0 0
  %1290 = vmatprep.subr.bf16.mxu0 0
  %1291 = vmatpush1.bf16.msra.mxu0 0
  %1292 = vmatprep.subr.bf16.mxu0 0
  %1293 = vmatpush1.bf16.msra.mxu0 0
  %1294 = vmatprep.subr.bf16.mxu0 0
  %1295 = vmatpush1.bf16.msra.mxu0 0
  %1296 = vmatprep.subr.bf16.mxu0 0
  %1297 = vmatpush1.bf16.msra.mxu0 0
  %1298 = vmatprep.subr.bf16.mxu0 0
  %1299 = vmatpush1.bf16.msra.mxu0 0
  %1300 = vmatprep.subr.bf16.mxu0 0
  %1301 = vmatpush1.bf16.msra.mxu0 0
  %1302 = vmatprep.subr.bf16.mxu0 0
  %1303 = vmatpush1.bf16.msra.mxu0 0
  %1304 = vmatprep.subr.bf16.mxu0 0
  %1305 = vmatpush1.bf16.msra.mxu0 0
  %1306 = vmatprep.subr.bf16.mxu0 0
  %1307 = vmatpush1.bf16.msra.mxu0 0
  %1308 = vmatprep.subr.bf16.mxu0 0
  %1309 = vmatpush1.bf16.msra.mxu0 0
  %1310 = vmatprep.subr.bf16.mxu0 0
  %1311 = vmatpush1.bf16.msra.mxu0 0
  %1312 = vmatprep.mubr.bf16.mxu0 0
  %1313 = vmatmul.mubr.bf16.gmra.mrb[0].mxu0 %v1260
  %v1314 = vpop.f32.mrb[0].mxu0
  %v1315 = vadd.f32 0.0, %v1314
  %v1316 = vpop.f32.mrb[0].mxu0
  %v1317 = vadd.f32 0.0, %v1316
  %v1318 = vpop.f32.mrb[0].mxu0
  %v1319 = vadd.f32 0.0, %v1318
  %v1320 = vpop.f32.mrb[0].mxu0
  %v1321 = vadd.f32 0.0, %v1320
  %1322 = vdwg.mxu0
  %1323 = vmatprep.subr.bf16.mxu0 %v1272
  %1324 = vmatpush1.bf16.msra.mxu0 %v1269
  %1325 = vmatprep.subr.bf16.mxu0 0
  %1326 = vmatpush1.bf16.msra.mxu0 0
  %1327 = vmatprep.subr.bf16.mxu0 0
  %1328 = vmatpush1.bf16.msra.mxu0 0
  %1329 = vmatprep.subr.bf16.mxu0 0
  %1330 = vmatpush1.bf16.msra.mxu0 0
  %1331 = vmatprep.subr.bf16.mxu0 0
  %1332 = vmatpush1.bf16.msra.mxu0 0
  %1333 = vmatprep.subr.bf16.mxu0 0
  %1334 = vmatpush1.bf16.msra.mxu0 0
  %1335 = vmatprep.subr.bf16.mxu0 0
  %1336 = vmatpush1.bf16.msra.mxu0 0
  %1337 = vmatprep.subr.bf16.mxu0 0
  %1338 = vmatpush1.bf16.msra.mxu0 0
  %1339 = vmatprep.subr.bf16.mxu0 0
  %1340 = vmatpush1.bf16.msra.mxu0 0
  %1341 = vmatprep.subr.bf16.mxu0 0
  %1342 = vmatpush1.bf16.msra.mxu0 0
  %1343 = vmatprep.subr.bf16.mxu0 0
  %1344 = vmatpush1.bf16.msra.mxu0 0
  %1345 = vmatprep.subr.bf16.mxu0 0
  %1346 = vmatpush1.bf16.msra.mxu0 0
  %1347 = vmatprep.subr.bf16.mxu0 0
  %1348 = vmatpush1.bf16.msra.mxu0 0
  %1349 = vmatprep.subr.bf16.mxu0 0
  %1350 = vmatpush1.bf16.msra.mxu0 0
  %1351 = vmatprep.subr.bf16.mxu0 0
  %1352 = vmatpush1.bf16.msra.mxu0 0
  %1353 = vmatprep.subr.bf16.mxu0 0
  %1354 = vmatpush1.bf16.msra.mxu0 0
  %1355 = vmatprep.mubr.bf16.mxu0 0
  %1356 = vmatmul.mubr.bf16.gmra.mrb[0].mxu0 %v1260
  %v1357 = vpop.f32.mrb[0].mxu0
  %v1358 = vadd.f32 0.0, %v1357
  %v1359 = vpop.f32.mrb[0].mxu0
  %v1360 = vadd.f32 0.0, %v1359
  %v1361 = vpop.f32.mrb[0].mxu0
  %v1362 = vadd.f32 0.0, %v1361
  %v1363 = vpop.f32.mrb[0].mxu0
  %v1364 = vadd.f32 0.0, %v1363
  %1365 = vdwg.mxu0
  %1366 = vmatprep.subr.bf16.mxu0 %v1278
  %1367 = vmatpush1.bf16.msra.mxu0 %v1275
  %1368 = vmatprep.subr.bf16.mxu0 0
  %1369 = vmatpush1.bf16.msra.mxu0 0
  %1370 = vmatprep.subr.bf16.mxu0 0
  %1371 = vmatpush1.bf16.msra.mxu0 0
  %1372 = vmatprep.subr.bf16.mxu0 0
  %1373 = vmatpush1.bf16.msra.mxu0 0
  %1374 = vmatprep.subr.bf16.mxu0 0
  %1375 = vmatpush1.bf16.msra.mxu0 0
  %1376 = vmatprep.subr.bf16.mxu0 0
  %1377 = vmatpush1.bf16.msra.mxu0 0
  %1378 = vmatprep.subr.bf16.mxu0 0
  %1379 = vmatpush1.bf16.msra.mxu0 0
  %1380 = vmatprep.subr.bf16.mxu0 0
  %1381 = vmatpush1.bf16.msra.mxu0 0
  %1382 = vmatprep.subr.bf16.mxu0 0
  %1383 = vmatpush1.bf16.msra.mxu0 0
  %1384 = vmatprep.subr.bf16.mxu0 0
  %1385 = vmatpush1.bf16.msra.mxu0 0
  %1386 = vmatprep.subr.bf16.mxu0 0
  %1387 = vmatpush1.bf16.msra.mxu0 0
  %1388 = vmatprep.subr.bf16.mxu0 0
  %1389 = vmatpush1.bf16.msra.mxu0 0
  %1390 = vmatprep.subr.bf16.mxu0 0
  %1391 = vmatpush1.bf16.msra.mxu0 0
  %1392 = vmatprep.subr.bf16.mxu0 0
  %1393 = vmatpush1.bf16.msra.mxu0 0
  %1394 = vmatprep.subr.bf16.mxu0 0
  %1395 = vmatpush1.bf16.msra.mxu0 0
  %1396 = vmatprep.subr.bf16.mxu0 0
  %1397 = vmatpush1.bf16.msra.mxu0 0
  %1398 = vmatprep.mubr.bf16.mxu0 0
  %1399 = vmatmul.mubr.bf16.gmra.mrb[0].mxu0 %v1260
  %v1400 = vpop.f32.mrb[0].mxu0
  %v1401 = vadd.f32 0.0, %v1400
  %v1402 = vpop.f32.mrb[0].mxu0
  %v1403 = vadd.f32 0.0, %v1402
  %v1404 = vpop.f32.mrb[0].mxu0
  %v1405 = vadd.f32 0.0, %v1404
  %v1406 = vpop.f32.mrb[0].mxu0
  %v1407 = vadd.f32 0.0, %v1406
  %1408 = vdwg.mxu0
  %v1409 = vadd.f32 %v1221, %v1315
  %v1410 = vadd.f32 %v1222, %v1317
  %v1411 = vadd.f32 %v1223, %v1358
  %v1412 = vadd.f32 %v1224, %v1360
  %v1413 = vadd.f32 %v1225, %v1401
  %v1414 = vadd.f32 %v1226, %v1403
  %v1415 = vadd.f32 %v1227, %v1319
  %v1416 = vadd.f32 %v1228, %v1321
  %v1417 = vadd.f32 %v1229, %v1362
  %v1418 = vadd.f32 %v1230, %v1364
  %v1419 = vadd.f32 %v1231, %v1405
  %v1420 = vadd.f32 %v1232, %v1407
  %s1421 = scalar_lea.vmem %s4, 56
  %v1422 = vld [vmem:[%s1421] sm:$0xf]
  %v1423 = vld [vmem:[%s1421 + $0x4] sm:$0xf]
  %v1426 = vunpack.c.l.b16 %v1422
  %v1427 = vunpack.c.l.b16 %v1423
  %v1428 = vpack.c.b16 %v1427, %v1426
  %1429 = vrot.lane.b32.xlu0 %v150, 91
  %v1430 = vpop.permute.xlu0 %1429
  %1431 = vrot.lane.b32.xlu0 %v151, 91
  %v1432 = vpop.permute.xlu0 %1431
  %1433 = vrot.lane.b32.xlu0 %v152, 91
  %v1434 = vpop.permute.xlu0 %1433
  %1435 = vrot.lane.b32.xlu0 %v153, 91
  %v1436 = vpop.permute.xlu0 %1435
  %1437 = vrot.lane.b32.xlu0 %v154, 91
  %v1438 = vpop.permute.xlu0 %1437
  %1439 = vrot.lane.b32.xlu0 %v155, 91
  %v1440 = vpop.permute.xlu0 %1439
  %vm1441 = vcmask 744448
  %v1442 = vsel %vm1441, %v1430, %v1432
  %v1443 = vsel %vm1441, %v1432, %v1434
  %v1444 = vsel %vm1441, %v1434, %v1436
  %v1445 = vsel %vm1441, %v1436, %v1438
  %v1446 = vsel %vm1441, %v1438, %v1440
  %v1448 = vsel %vm174, %v1428, 0
  %v1451 = vsel %vm178, %v1442, 0
  %v1454 = vsel %vm178, %v1443, 0
  %v1457 = vsel %vm178, %v1444, 0
  %v1460 = vsel %vm178, %v1445, 0
  %v1463 = vsel %vm178, %v1446, 0
  %v1466 = vsel %vm178, %v1440, 0
  %1468 = vmatprep.subr.bf16.mxu0 %v1454
  %1469 = vmatpush1.bf16.msra.mxu0 %v1451
  %1470 = vmatprep.subr.bf16.mxu0 0
  %1471 = vmatpush1.bf16.msra.mxu0 0
  %1472 = vmatprep.subr.bf16.mxu0 0
  %1473 = vmatpush1.bf16.msra.mxu0 0
  %1474 = vmatprep.subr.bf16.mxu0 0
  %1475 = vmatpush1.bf16.msra.mxu0 0
  %1476 = vmatprep.subr.bf16.mxu0 0
  %1477 = vmatpush1.bf16.msra.mxu0 0
  %1478 = vmatprep.subr.bf16.mxu0 0
  %1479 = vmatpush1.bf16.msra.mxu0 0
  %1480 = vmatprep.subr.bf16.mxu0 0
  %1481 = vmatpush1.bf16.msra.mxu0 0
  %1482 = vmatprep.subr.bf16.mxu0 0
  %1483 = vmatpush1.bf16.msra.mxu0 0
  %1484 = vmatprep.subr.bf16.mxu0 0
  %1485 = vmatpush1.bf16.msra.mxu0 0
  %1486 = vmatprep.subr.bf16.mxu0 0
  %1487 = vmatpush1.bf16.msra.mxu0 0
  %1488 = vmatprep.subr.bf16.mxu0 0
  %1489 = vmatpush1.bf16.msra.mxu0 0
  %1490 = vmatprep.subr.bf16.mxu0 0
  %1491 = vmatpush1.bf16.msra.mxu0 0
  %1492 = vmatprep.subr.bf16.mxu0 0
  %1493 = vmatpush1.bf16.msra.mxu0 0
  %1494 = vmatprep.subr.bf16.mxu0 0
  %1495 = vmatpush1.bf16.msra.mxu0 0
  %1496 = vmatprep.subr.bf16.mxu0 0
  %1497 = vmatpush1.bf16.msra.mxu0 0
  %1498 = vmatprep.subr.bf16.mxu0 0
  %1499 = vmatpush1.bf16.msra.mxu0 0
  %1500 = vmatprep.mubr.bf16.mxu0 0
  %1501 = vmatmul.mubr.bf16.gmra.mrb[0].mxu0 %v1448
  %v1502 = vpop.f32.mrb[0].mxu0
  %v1503 = vadd.f32 0.0, %v1502
  %v1504 = vpop.f32.mrb[0].mxu0
  %v1505 = vadd.f32 0.0, %v1504
  %v1506 = vpop.f32.mrb[0].mxu0
  %v1507 = vadd.f32 0.0, %v1506
  %v1508 = vpop.f32.mrb[0].mxu0
  %v1509 = vadd.f32 0.0, %v1508
  %1510 = vdwg.mxu0
  %1511 = vmatprep.subr.bf16.mxu0 %v1460
  %1512 = vmatpush1.bf16.msra.mxu0 %v1457
  %1513 = vmatprep.subr.bf16.mxu0 0
  %1514 = vmatpush1.bf16.msra.mxu0 0
  %1515 = vmatprep.subr.bf16.mxu0 0
  %1516 = vmatpush1.bf16.msra.mxu0 0
  %1517 = vmatprep.subr.bf16.mxu0 0
  %1518 = vmatpush1.bf16.msra.mxu0 0
  %1519 = vmatprep.subr.bf16.mxu0 0
  %1520 = vmatpush1.bf16.msra.mxu0 0
  %1521 = vmatprep.subr.bf16.mxu0 0
  %1522 = vmatpush1.bf16.msra.mxu0 0
  %1523 = vmatprep.subr.bf16.mxu0 0
  %1524 = vmatpush1.bf16.msra.mxu0 0
  %1525 = vmatprep.subr.bf16.mxu0 0
  %1526 = vmatpush1.bf16.msra.mxu0 0
  %1527 = vmatprep.subr.bf16.mxu0 0
  %1528 = vmatpush1.bf16.msra.mxu0 0
  %1529 = vmatprep.subr.bf16.mxu0 0
  %1530 = vmatpush1.bf16.msra.mxu0 0
  %1531 = vmatprep.subr.bf16.mxu0 0
  %1532 = vmatpush1.bf16.msra.mxu0 0
  %1533 = vmatprep.subr.bf16.mxu0 0
  %1534 = vmatpush1.bf16.msra.mxu0 0
  %1535 = vmatprep.subr.bf16.mxu0 0
  %1536 = vmatpush1.bf16.msra.mxu0 0
  %1537 = vmatprep.subr.bf16.mxu0 0
  %1538 = vmatpush1.bf16.msra.mxu0 0
  %1539 = vmatprep.subr.bf16.mxu0 0
  %1540 = vmatpush1.bf16.msra.mxu0 0
  %1541 = vmatprep.subr.bf16.mxu0 0
  %1542 = vmatpush1.bf16.msra.mxu0 0
  %1543 = vmatprep.mubr.bf16.mxu0 0
  %1544 = vmatmul.mubr.bf16.gmra.mrb[0].mxu0 %v1448
  %v1545 = vpop.f32.mrb[0].mxu0
  %v1546 = vadd.f32 0.0, %v1545
  %v1547 = vpop.f32.mrb[0].mxu0
  %v1548 = vadd.f32 0.0, %v1547
  %v1549 = vpop.f32.mrb[0].mxu0
  %v1550 = vadd.f32 0.0, %v1549
  %v1551 = vpop.f32.mrb[0].mxu0
  %v1552 = vadd.f32 0.0, %v1551
  %1553 = vdwg.mxu0
  %1554 = vmatprep.subr.bf16.mxu0 %v1466
  %1555 = vmatpush1.bf16.msra.mxu0 %v1463
  %1556 = vmatprep.subr.bf16.mxu0 0
  %1557 = vmatpush1.bf16.msra.mxu0 0
  %1558 = vmatprep.subr.bf16.mxu0 0
  %1559 = vmatpush1.bf16.msra.mxu0 0
  %1560 = vmatprep.subr.bf16.mxu0 0
  %1561 = vmatpush1.bf16.msra.mxu0 0
  %1562 = vmatprep.subr.bf16.mxu0 0
  %1563 = vmatpush1.bf16.msra.mxu0 0
  %1564 = vmatprep.subr.bf16.mxu0 0
  %1565 = vmatpush1.bf16.msra.mxu0 0
  %1566 = vmatprep.subr.bf16.mxu0 0
  %1567 = vmatpush1.bf16.msra.mxu0 0
  %1568 = vmatprep.subr.bf16.mxu0 0
  %1569 = vmatpush1.bf16.msra.mxu0 0
  %1570 = vmatprep.subr.bf16.mxu0 0
  %1571 = vmatpush1.bf16.msra.mxu0 0
  %1572 = vmatprep.subr.bf16.mxu0 0
  %1573 = vmatpush1.bf16.msra.mxu0 0
  %1574 = vmatprep.subr.bf16.mxu0 0
  %1575 = vmatpush1.bf16.msra.mxu0 0
  %1576 = vmatprep.subr.bf16.mxu0 0
  %1577 = vmatpush1.bf16.msra.mxu0 0
  %1578 = vmatprep.subr.bf16.mxu0 0
  %1579 = vmatpush1.bf16.msra.mxu0 0
  %1580 = vmatprep.subr.bf16.mxu0 0
  %1581 = vmatpush1.bf16.msra.mxu0 0
  %1582 = vmatprep.subr.bf16.mxu0 0
  %1583 = vmatpush1.bf16.msra.mxu0 0
  %1584 = vmatprep.subr.bf16.mxu0 0
  %1585 = vmatpush1.bf16.msra.mxu0 0
  %1586 = vmatprep.mubr.bf16.mxu0 0
  %1587 = vmatmul.mubr.bf16.gmra.mrb[0].mxu0 %v1448
  %v1588 = vpop.f32.mrb[0].mxu0
  %v1589 = vadd.f32 0.0, %v1588
  %v1590 = vpop.f32.mrb[0].mxu0
  %v1591 = vadd.f32 0.0, %v1590
  %v1592 = vpop.f32.mrb[0].mxu0
  %v1593 = vadd.f32 0.0, %v1592
  %v1594 = vpop.f32.mrb[0].mxu0
  %v1595 = vadd.f32 0.0, %v1594
  %1596 = vdwg.mxu0
  %v1597 = vadd.f32 %v1409, %v1503
  %v1598 = vadd.f32 %v1410, %v1505
  %v1599 = vadd.f32 %v1411, %v1546
  %v1600 = vadd.f32 %v1412, %v1548
  %v1601 = vadd.f32 %v1413, %v1589
  %v1602 = vadd.f32 %v1414, %v1591
  %v1603 = vadd.f32 %v1415, %v1507
  %v1604 = vadd.f32 %v1416, %v1509
  %v1605 = vadd.f32 %v1417, %v1550
  %v1606 = vadd.f32 %v1418, %v1552
  %v1607 = vadd.f32 %v1419, %v1593
  %v1608 = vadd.f32 %v1420, %v1595
  %s1609 = scalar_lea.vmem %s4, 64
  %v1610 = vld [vmem:[%s1609] sm:$0xf]
  %v1611 = vld [vmem:[%s1609 + $0x4] sm:$0xf]
  %v1614 = vunpack.c.l.b16 %v1610
  %v1615 = vunpack.c.l.b16 %v1611
  %v1616 = vpack.c.b16 %v1615, %v1614
  %1617 = vrot.lane.b32.xlu0 %v150, 90
  %v1618 = vpop.permute.xlu0 %1617
  %1619 = vrot.lane.b32.xlu0 %v151, 90
  %v1620 = vpop.permute.xlu0 %1619
  %1621 = vrot.lane.b32.xlu0 %v152, 90
  %v1622 = vpop.permute.xlu0 %1621
  %1623 = vrot.lane.b32.xlu0 %v153, 90
  %v1624 = vpop.permute.xlu0 %1623
  %1625 = vrot.lane.b32.xlu0 %v154, 90
  %v1626 = vpop.permute.xlu0 %1625
  %1627 = vrot.lane.b32.xlu0 %v155, 90
  %v1628 = vpop.permute.xlu0 %1627
  %vm1629 = vcmask 736256
  %v1630 = vsel %vm1629, %v1618, %v1620
  %v1631 = vsel %vm1629, %v1620, %v1622
  %v1632 = vsel %vm1629, %v1622, %v1624
  %v1633 = vsel %vm1629, %v1624, %v1626
  %v1634 = vsel %vm1629, %v1626, %v1628
  %v1636 = vsel %vm174, %v1616, 0
  %v1639 = vsel %vm178, %v1630, 0
  %v1642 = vsel %vm178, %v1631, 0
  %v1645 = vsel %vm178, %v1632, 0
  %v1648 = vsel %vm178, %v1633, 0
  %v1651 = vsel %vm178, %v1634, 0
  %v1654 = vsel %vm178, %v1628, 0
  %1656 = vmatprep.subr.bf16.mxu0 %v1642
  %1657 = vmatpush1.bf16.msra.mxu0 %v1639
  %1658 = vmatprep.subr.bf16.mxu0 0
  %1659 = vmatpush1.bf16.msra.mxu0 0
  %1660 = vmatprep.subr.bf16.mxu0 0
  %1661 = vmatpush1.bf16.msra.mxu0 0
  %1662 = vmatprep.subr.bf16.mxu0 0
  %1663 = vmatpush1.bf16.msra.mxu0 0
  %1664 = vmatprep.subr.bf16.mxu0 0
  %1665 = vmatpush1.bf16.msra.mxu0 0
  %1666 = vmatprep.subr.bf16.mxu0 0
  %1667 = vmatpush1.bf16.msra.mxu0 0
  %1668 = vmatprep.subr.bf16.mxu0 0
  %1669 = vmatpush1.bf16.msra.mxu0 0
  %1670 = vmatprep.subr.bf16.mxu0 0
  %1671 = vmatpush1.bf16.msra.mxu0 0
  %1672 = vmatprep.subr.bf16.mxu0 0
  %1673 = vmatpush1.bf16.msra.mxu0 0
  %1674 = vmatprep.subr.bf16.mxu0 0
  %1675 = vmatpush1.bf16.msra.mxu0 0
  %1676 = vmatprep.subr.bf16.mxu0 0
  %1677 = vmatpush1.bf16.msra.mxu0 0
  %1678 = vmatprep.subr.bf16.mxu0 0
  %1679 = vmatpush1.bf16.msra.mxu0 0
  %1680 = vmatprep.subr.bf16.mxu0 0
  %1681 = vmatpush1.bf16.msra.mxu0 0
  %1682 = vmatprep.subr.bf16.mxu0 0
  %1683 = vmatpush1.bf16.msra.mxu0 0
  %1684 = vmatprep.subr.bf16.mxu0 0
  %1685 = vmatpush1.bf16.msra.mxu0 0
  %1686 = vmatprep.subr.bf16.mxu0 0
  %1687 = vmatpush1.bf16.msra.mxu0 0
  %1688 = vmatprep.mubr.bf16.mxu0 0
  %1689 = vmatmul.mubr.bf16.gmra.mrb[0].mxu0 %v1636
  %v1690 = vpop.f32.mrb[0].mxu0
  %v1691 = vadd.f32 0.0, %v1690
  %v1692 = vpop.f32.mrb[0].mxu0
  %v1693 = vadd.f32 0.0, %v1692
  %v1694 = vpop.f32.mrb[0].mxu0
  %v1695 = vadd.f32 0.0, %v1694
  %v1696 = vpop.f32.mrb[0].mxu0
  %v1697 = vadd.f32 0.0, %v1696
  %1698 = vdwg.mxu0
  %1699 = vmatprep.subr.bf16.mxu0 %v1648
  %1700 = vmatpush1.bf16.msra.mxu0 %v1645
  %1701 = vmatprep.subr.bf16.mxu0 0
  %1702 = vmatpush1.bf16.msra.mxu0 0
  %1703 = vmatprep.subr.bf16.mxu0 0
  %1704 = vmatpush1.bf16.msra.mxu0 0
  %1705 = vmatprep.subr.bf16.mxu0 0
  %1706 = vmatpush1.bf16.msra.mxu0 0
  %1707 = vmatprep.subr.bf16.mxu0 0
  %1708 = vmatpush1.bf16.msra.mxu0 0
  %1709 = vmatprep.subr.bf16.mxu0 0
  %1710 = vmatpush1.bf16.msra.mxu0 0
  %1711 = vmatprep.subr.bf16.mxu0 0
  %1712 = vmatpush1.bf16.msra.mxu0 0
  %1713 = vmatprep.subr.bf16.mxu0 0
  %1714 = vmatpush1.bf16.msra.mxu0 0
  %1715 = vmatprep.subr.bf16.mxu0 0
  %1716 = vmatpush1.bf16.msra.mxu0 0
  %1717 = vmatprep.subr.bf16.mxu0 0
  %1718 = vmatpush1.bf16.msra.mxu0 0
  %1719 = vmatprep.subr.bf16.mxu0 0
  %1720 = vmatpush1.bf16.msra.mxu0 0
  %1721 = vmatprep.subr.bf16.mxu0 0
  %1722 = vmatpush1.bf16.msra.mxu0 0
  %1723 = vmatprep.subr.bf16.mxu0 0
  %1724 = vmatpush1.bf16.msra.mxu0 0
  %1725 = vmatprep.subr.bf16.mxu0 0
  %1726 = vmatpush1.bf16.msra.mxu0 0
  %1727 = vmatprep.subr.bf16.mxu0 0
  %1728 = vmatpush1.bf16.msra.mxu0 0
  %1729 = vmatprep.subr.bf16.mxu0 0
  %1730 = vmatpush1.bf16.msra.mxu0 0
  %1731 = vmatprep.mubr.bf16.mxu0 0
  %1732 = vmatmul.mubr.bf16.gmra.mrb[0].mxu0 %v1636
  %v1733 = vpop.f32.mrb[0].mxu0
  %v1734 = vadd.f32 0.0, %v1733
  %v1735 = vpop.f32.mrb[0].mxu0
  %v1736 = vadd.f32 0.0, %v1735
  %v1737 = vpop.f32.mrb[0].mxu0
  %v1738 = vadd.f32 0.0, %v1737
  %v1739 = vpop.f32.mrb[0].mxu0
  %v1740 = vadd.f32 0.0, %v1739
  %1741 = vdwg.mxu0
  %1742 = vmatprep.subr.bf16.mxu0 %v1654
  %1743 = vmatpush1.bf16.msra.mxu0 %v1651
  %1744 = vmatprep.subr.bf16.mxu0 0
  %1745 = vmatpush1.bf16.msra.mxu0 0
  %1746 = vmatprep.subr.bf16.mxu0 0
  %1747 = vmatpush1.bf16.msra.mxu0 0
  %1748 = vmatprep.subr.bf16.mxu0 0
  %1749 = vmatpush1.bf16.msra.mxu0 0
  %1750 = vmatprep.subr.bf16.mxu0 0
  %1751 = vmatpush1.bf16.msra.mxu0 0
  %1752 = vmatprep.subr.bf16.mxu0 0
  %1753 = vmatpush1.bf16.msra.mxu0 0
  %1754 = vmatprep.subr.bf16.mxu0 0
  %1755 = vmatpush1.bf16.msra.mxu0 0
  %1756 = vmatprep.subr.bf16.mxu0 0
  %1757 = vmatpush1.bf16.msra.mxu0 0
  %1758 = vmatprep.subr.bf16.mxu0 0
  %1759 = vmatpush1.bf16.msra.mxu0 0
  %1760 = vmatprep.subr.bf16.mxu0 0
  %1761 = vmatpush1.bf16.msra.mxu0 0
  %1762 = vmatprep.subr.bf16.mxu0 0
  %1763 = vmatpush1.bf16.msra.mxu0 0
  %1764 = vmatprep.subr.bf16.mxu0 0
  %1765 = vmatpush1.bf16.msra.mxu0 0
  %1766 = vmatprep.subr.bf16.mxu0 0
  %1767 = vmatpush1.bf16.msra.mxu0 0
  %1768 = vmatprep.subr.bf16.mxu0 0
  %1769 = vmatpush1.bf16.msra.mxu0 0
  %1770 = vmatprep.subr.bf16.mxu0 0
  %1771 = vmatpush1.bf16.msra.mxu0 0
  %1772 = vmatprep.subr.bf16.mxu0 0
  %1773 = vmatpush1.bf16.msra.mxu0 0
  %1774 = vmatprep.mubr.bf16.mxu0 0
  %1775 = vmatmul.mubr.bf16.gmra.mrb[0].mxu0 %v1636
  %v1776 = vpop.f32.mrb[0].mxu0
  %v1777 = vadd.f32 0.0, %v1776
  %v1778 = vpop.f32.mrb[0].mxu0
  %v1779 = vadd.f32 0.0, %v1778
  %v1780 = vpop.f32.mrb[0].mxu0
  %v1781 = vadd.f32 0.0, %v1780
  %v1782 = vpop.f32.mrb[0].mxu0
  %v1783 = vadd.f32 0.0, %v1782
  %1784 = vdwg.mxu0
  %v1785 = vadd.f32 %v1597, %v1691
  %v1786 = vadd.f32 %v1598, %v1693
  %v1787 = vadd.f32 %v1599, %v1734
  %v1788 = vadd.f32 %v1600, %v1736
  %v1789 = vadd.f32 %v1601, %v1777
  %v1790 = vadd.f32 %v1602, %v1779
  %v1791 = vadd.f32 %v1603, %v1695
  %v1792 = vadd.f32 %v1604, %v1697
  %v1793 = vadd.f32 %v1605, %v1738
  %v1794 = vadd.f32 %v1606, %v1740
  %v1795 = vadd.f32 %v1607, %v1781
  %v1796 = vadd.f32 %v1608, %v1783
  %v1797 = vld [vmem:[%s5] sm:$0xff]
  %v1798 = vld [vmem:[%s5 + $0x8] sm:$0xff]
  %1800 = vset.pattern.permute.xlu0 0
  %1801 = vperm.xlu0 %1800, %v1797
  %v1802 = vpop.permute.xlu0 %1801
  %1805 = vset.pattern.permute.xlu0 0
  %1806 = vperm.xlu0 %1805, %v1798
  %v1807 = vpop.permute.xlu0 %1806
  %v1809 = vadd.f32 %v1785, %v1802
  %v1810 = vadd.f32 %v1786, %v1802
  %v1811 = vadd.f32 %v1787, %v1802
  %v1812 = vadd.f32 %v1788, %v1802
  %v1813 = vadd.f32 %v1789, %v1802
  %v1814 = vadd.f32 %v1790, %v1802
  %v1815 = vadd.f32 %v1791, %v1807
  %v1816 = vadd.f32 %v1792, %v1807
  %v1817 = vadd.f32 %v1793, %v1807
  %v1818 = vadd.f32 %v1794, %v1807
  %v1819 = vadd.f32 %v1795, %v1807
  %v1820 = vadd.f32 %v1796, %v1807
  %v1821 = vmax.f32 %v1809, 0.0
  %v1822 = vmax.f32 %v1810, 0.0
  %v1823 = vmax.f32 %v1811, 0.0
  %v1824 = vmax.f32 %v1812, 0.0
  %v1825 = vmax.f32 %v1813, 0.0
  %v1826 = vmax.f32 %v1814, 0.0
  %v1827 = vmax.f32 %v1815, 0.0
  %v1828 = vmax.f32 %v1816, 0.0
  %v1829 = vmax.f32 %v1817, 0.0
  %v1830 = vmax.f32 %v1818, 0.0
  %v1831 = vmax.f32 %v1819, 0.0
  %v1832 = vmax.f32 %v1820, 0.0
  %v1833 = vpack.c.bf16 %v1827, %v1821
  %v1834 = vpack.c.bf16 %v1828, %v1822
  %v1835 = vpack.c.bf16 %v1829, %v1823
  %v1836 = vpack.c.bf16 %v1830, %v1824
  %v1837 = vpack.c.bf16 %v1831, %v1825
  %v1838 = vpack.c.bf16 %v1832, %v1826
  %v1845 = vunpack.c.l.b16 %v1833
  %v1846 = vunpack.c.l.b16 %v1834
  %v1847 = vunpack.c.l.b16 %v1835
  %v1848 = vunpack.c.l.b16 %v1836
  %v1849 = vunpack.c.l.b16 %v1837
  %v1850 = vunpack.c.l.b16 %v1838
  %v1851 = vunpack.c.h.b16 %v1833
  %v1852 = vunpack.c.h.b16 %v1834
  %v1853 = vunpack.c.h.b16 %v1835
  %v1854 = vunpack.c.h.b16 %v1836
  %v1855 = vunpack.c.h.b16 %v1837
  %v1856 = vunpack.c.h.b16 %v1838
  %v1857 = vpack.c.b16 %v1846, %v1845
  %v1858 = vpack.c.b16 %v1848, %v1847
  %v1859 = vpack.c.b16 %v1850, %v1849
  %v1860 = vpack.c.b16 %v1852, %v1851
  %v1861 = vpack.c.b16 %v1854, %v1853
  %v1862 = vpack.c.b16 %v1856, %v1855
  %1869 = vst [vmem:[%s6] sm:$0xff] %v1857
  %1870 = vst [vmem:[%s6 + $0x8] sm:$0xff] %v1858
  %vm1871 = vcmask 64516
  %vm1872 = vmor %vm1871, %vm178
  %1873 = vst.msk [vmem:[%s6 + $0x10] sm:$0xff] %vm1872, %v1859
  %1874 = vst [vmem:[%s6 + $0x18] sm:$0xff] %v1860
  %1875 = vst [vmem:[%s6 + $0x20] sm:$0xff] %v1861
  %1876 = vst.msk [vmem:[%s6 + $0x28] sm:$0xff] %vm1872, %v1862
  // Predicated region
  $region26: #{resnet_block_forward.3} parent=0 // pred_check
    _
  $region27: #{resnet_block_forward.3} parent=0 // pred_check_branch
    %1878 = sbr.rel (0) target = $region29
  $region28: #{resnet_block_forward.3} parent=0 // pred_region
    _
  $region29: #{resnet_block_forward.3} parent=0 // pred_fallthru
    _
  // Predicated region
  $region30: #{resnet_block_forward.3} parent=0 // pred_check
    _
  $region31: #{resnet_block_forward.3} parent=0 // pred_check_branch
    %1880 = sbr.rel (0) target = $region33
  $region32: #{resnet_block_forward.3} parent=0 // pred_region
    _
  $region33: #{resnet_block_forward.3} parent=0 // pred_fallthru
    _

// kernel: resnet_block_forward.5
$region0: #{resnet_block_forward.5}
  #allocation0 [shape = 'u32[]', space=smem, size = 0x4, offset = 0x4, fixed_abs, tag = 'smem constant byte address 0x4 - core index']
  #allocation1 [shape = 'u32[144,128]{1,0:T(1,128)}', space=vmem, size = 0x12000, scoped, tag = 'internal scratch']
  %s0 = inlined_call_operand.vmem [shape: bf16[2,16,256], index: 0, kind: input, shape index: {}]
  %s1 = inlined_call_operand.vmem [shape: f32[16,2], index: 1, kind: input, shape index: {}]
  %s2 = inlined_call_operand.vmem [shape: f32[2,16], index: 2, kind: input, shape index: {}]
  %s3 = inlined_call_operand.vmem [shape: f32[2,16,256], index: 3, kind: output, shape index: {}]
  %s4 = sld [smem:[#allocation0]]
  $region22: #{resnet_block_forward.5} parent=0
    _
  %s6 = ssub.s32 1, %s4
  %s7 = scalar_select 0, %s6, %s4
  // Predicated region
  $region2: #{resnet_block_forward.5} parent=0 // pred_check
    _
  $region3: #{resnet_block_forward.5} parent=0 // pred_check_branch
    %9 = sbr.rel (0) target = $region5
  $region4: #{resnet_block_forward.5} parent=0 // pred_region
    _
  $region5: #{resnet_block_forward.5} parent=0 // pred_fallthru
    _
  // Predicated region
  $region6: #{resnet_block_forward.5} parent=0 // pred_check
    _
  $region7: #{resnet_block_forward.5} parent=0 // pred_check_branch
    %11 = sbr.rel (0) target = $region9
  $region8: #{resnet_block_forward.5} parent=0 // pred_region
    _
  $region9: #{resnet_block_forward.5} parent=0 // pred_fallthru
    _
  // Predicated region
  $region10: #{resnet_block_forward.5} parent=0 // pred_check
    _
  $region11: #{resnet_block_forward.5} parent=0 // pred_check_branch
    %13 = sbr.rel (0) target = $region13
  $region12: #{resnet_block_forward.5} parent=0 // pred_region
    _
  $region13: #{resnet_block_forward.5} parent=0 // pred_fallthru
    _
  %v14 = vld [vmem:[%s0] sm:$0xff]
  %v15 = vld [vmem:[%s0 + $0x8] sm:$0xff]
  %v16 = vld [vmem:[%s0 + $0x10] sm:$0xff]
  %v17 = vld [vmem:[%s0 + $0x18] sm:$0xff]
  %v18 = vunpack.c.l.bf16 %v14
  %v19 = vunpack.c.h.bf16 %v14
  %v20 = vunpack.c.l.bf16 %v15
  %v21 = vunpack.c.h.bf16 %v15
  %v22 = vunpack.c.l.bf16 %v16
  %v23 = vunpack.c.h.bf16 %v16
  %v24 = vunpack.c.l.bf16 %v17
  %v25 = vunpack.c.h.bf16 %v17
  %v26 = vadd.f32 %v18, %v19
  %27 = vadd.xlane.f32.xlu0 %v26
  %v28 = vpop.xlane.xlu0 %27
  %v29 = vadd.f32 %v20, %v21
  %30 = vadd.xlane.f32.xlu0 %v29
  %v31 = vpop.xlane.xlu0 %30
  %v32 = vadd.f32 %v22, %v23
  %33 = vadd.xlane.f32.xlu0 %v32
  %v34 = vpop.xlane.xlu0 %33
  %v35 = vadd.f32 %v24, %v25
  %36 = vadd.xlane.f32.xlu0 %v35
  %v37 = vpop.xlane.xlu0 %36
  %v38 = vrcp.pop 256.0
  %v39 = vmul.f32 %v28, %v38
  %v40 = vmul.f32 %v31, %v38
  %v41 = vmul.f32 %v34, %v38
  %v42 = vmul.f32 %v37, %v38
  %v43 = vld [vmem:[%s1] sm:$0xff]
  %v44 = vld [vmem:[%s1 + $0x8] sm:$0xff]
  %v49 = vlaneseq
  %v50 = vand.u32 %v49, 127
  %v51 = vlaneseq
  %v52 = vshrl.u32 %v51, 7
  %v53 = vsub.s32 %v50, %v52
  %v54 = vrot.slane %v39, %v53
  %v55 = vadd.s32 %v50, 4294967288
  %v56 = vlaneseq
  %v57 = vshrl.u32 %v56, 7
  %v58 = vsub.s32 %v55, %v57
  %v59 = vrot.slane %v40, %v58
  %vm60 = vcmask 130112
  %v61 = vsel %vm60, %v59, %v54
  %v62 = vlaneseq
  %v63 = vshrl.u32 %v62, 7
  %v64 = vsub.s32 %v50, %v63
  %v65 = vrot.slane %v41, %v64
  %v66 = vlaneseq
  %v67 = vshrl.u32 %v66, 7
  %v68 = vsub.s32 %v55, %v67
  %v69 = vrot.slane %v42, %v68
  %v70 = vsel %vm60, %v69, %v65
  %vm71 = vcmask 1041409
  %v72 = vsel %vm71, %v70, %v61
  %vm73 = vcmask 130048
  %v74 = vsel %vm73, %v72, 0
  %76 = vmatprep.subr.mxu0 0.0
  %77 = vmatpush1.msra.mxu0 %v43
  %78 = vmatprep.subr.mxu0 0.0
  %79 = vmatpush1.msra.mxu0 %v44
  %80 = vmatprep.subr.mxu0 0.0
  %81 = vmatpush1.msra.mxu0 0.0
  %82 = vmatprep.subr.mxu0 0.0
  %83 = vmatpush1.msra.mxu0 0.0
  %84 = vmatprep.subr.mxu0 0.0
  %85 = vmatpush1.msra.mxu0 0.0
  %86 = vmatprep.subr.mxu0 0.0
  %87 = vmatpush1.msra.mxu0 0.0
  %88 = vmatprep.subr.mxu0 0.0
  %89 = vmatpush1.msra.mxu0 0.0
  %90 = vmatprep.subr.mxu0 0.0
  %91 = vmatpush1.msra.mxu0 0.0
  %92 = vmatprep.subr.mxu0 0.0
  %93 = vmatpush1.msra.mxu0 0.0
  %94 = vmatprep.subr.mxu0 0.0
  %95 = vmatpush1.msra.mxu0 0.0
  %96 = vmatprep.subr.mxu0 0.0
  %97 = vmatpush1.msra.mxu0 0.0
  %98 = vmatprep.subr.mxu0 0.0
  %99 = vmatpush1.msra.mxu0 0.0
  %100 = vmatprep.subr.mxu0 0.0
  %101 = vmatpush1.msra.mxu0 0.0
  %102 = vmatprep.subr.mxu0 0.0
  %103 = vmatpush1.msra.mxu0 0.0
  %104 = vmatprep.subr.mxu0 0.0
  %105 = vmatpush1.msra.mxu0 0.0
  %106 = vmatprep.subr.mxu0 0.0
  %107 = vmatpush1.msra.mxu0 0.0
  %108 = vmatprep.subr.mxu0 0.0
  %109 = vmatpush1.msra.mxu0 0.0
  %110 = vmatprep.subr.mxu0 0.0
  %111 = vmatpush1.msra.mxu0 0.0
  %112 = vmatprep.subr.mxu0 0.0
  %113 = vmatpush1.msra.mxu0 0.0
  %114 = vmatprep.subr.mxu0 0.0
  %115 = vmatpush1.msra.mxu0 0.0
  %116 = vmatprep.subr.mxu0 0.0
  %117 = vmatpush1.msra.mxu0 0.0
  %118 = vmatprep.subr.mxu0 0.0
  %119 = vmatpush1.msra.mxu0 0.0
  %120 = vmatprep.subr.mxu0 0.0
  %121 = vmatpush1.msra.mxu0 0.0
  %122 = vmatprep.subr.mxu0 0.0
  %123 = vmatpush1.msra.mxu0 0.0
  %124 = vmatprep.subr.mxu0 0.0
  %125 = vmatpush1.msra.mxu0 0.0
  %126 = vmatprep.subr.mxu0 0.0
  %127 = vmatpush1.msra.mxu0 0.0
  %128 = vmatprep.subr.mxu0 0.0
  %129 = vmatpush1.msra.mxu0 0.0
  %130 = vmatprep.subr.mxu0 0.0
  %131 = vmatpush1.msra.mxu0 0.0
  %132 = vmatprep.subr.mxu0 0.0
  %133 = vmatpush1.msra.mxu0 0.0
  %134 = vmatprep.subr.mxu0 0.0
  %135 = vmatpush1.msra.mxu0 0.0
  %136 = vmatprep.subr.mxu0 0.0
  %137 = vmatpush1.msra.mxu0 0.0
  %138 = vmatprep.subr.mxu0 0.0
  %139 = vmatpush1.msra.mxu0 0.0
  %140 = vmatprep.mubr.f32.mxu0 0.0
  %141 = vmatmul.mubr.f32.gmra.mrb[0].mxu0 %v74
  %v142 = vpop.f32.mrb[0].mxu0
  %v143 = vadd.f32 0.0, %v142
  %v144 = vpop.f32.mrb[0].mxu0
  %145 = vdwg.mxu0
  %v146 = vmax.f32 %v143, 0.0
  %v147 = vld [vmem:[%s2] sm:$0x3]
  %vm148 = vcmask 15360
  %v150 = vsel %vm148, %v146, 0
  %vm152 = vcmask 1041408
  %v154 = vsel %vm152, %v147, 0
  %156 = vmatprep.subr.mxu0 0.0
  %157 = vmatpush1.msra.mxu0 %v154
  %158 = vmatprep.subr.mxu0 0.0
  %159 = vmatpush1.msra.mxu0 0.0
  %160 = vmatprep.subr.mxu0 0.0
  %161 = vmatpush1.msra.mxu0 0.0
  %162 = vmatprep.subr.mxu0 0.0
  %163 = vmatpush1.msra.mxu0 0.0
  %164 = vmatprep.subr.mxu0 0.0
  %165 = vmatpush1.msra.mxu0 0.0
  %166 = vmatprep.subr.mxu0 0.0
  %167 = vmatpush1.msra.mxu0 0.0
  %168 = vmatprep.subr.mxu0 0.0
  %169 = vmatpush1.msra.mxu0 0.0
  %170 = vmatprep.subr.mxu0 0.0
  %171 = vmatpush1.msra.mxu0 0.0
  %172 = vmatprep.subr.mxu0 0.0
  %173 = vmatpush1.msra.mxu0 0.0
  %174 = vmatprep.subr.mxu0 0.0
  %175 = vmatpush1.msra.mxu0 0.0
  %176 = vmatprep.subr.mxu0 0.0
  %177 = vmatpush1.msra.mxu0 0.0
  %178 = vmatprep.subr.mxu0 0.0
  %179 = vmatpush1.msra.mxu0 0.0
  %180 = vmatprep.subr.mxu0 0.0
  %181 = vmatpush1.msra.mxu0 0.0
  %182 = vmatprep.subr.mxu0 0.0
  %183 = vmatpush1.msra.mxu0 0.0
  %184 = vmatprep.subr.mxu0 0.0
  %185 = vmatpush1.msra.mxu0 0.0
  %186 = vmatprep.subr.mxu0 0.0
  %187 = vmatpush1.msra.mxu0 0.0
  %188 = vmatprep.subr.mxu0 0.0
  %189 = vmatpush1.msra.mxu0 0.0
  %190 = vmatprep.subr.mxu0 0.0
  %191 = vmatpush1.msra.mxu0 0.0
  %192 = vmatprep.subr.mxu0 0.0
  %193 = vmatpush1.msra.mxu0 0.0
  %194 = vmatprep.subr.mxu0 0.0
  %195 = vmatpush1.msra.mxu0 0.0
  %196 = vmatprep.subr.mxu0 0.0
  %197 = vmatpush1.msra.mxu0 0.0
  %198 = vmatprep.subr.mxu0 0.0
  %199 = vmatpush1.msra.mxu0 0.0
  %200 = vmatprep.subr.mxu0 0.0
  %201 = vmatpush1.msra.mxu0 0.0
  %202 = vmatprep.subr.mxu0 0.0
  %203 = vmatpush1.msra.mxu0 0.0
  %204 = vmatprep.subr.mxu0 0.0
  %205 = vmatpush1.msra.mxu0 0.0
  %206 = vmatprep.subr.mxu0 0.0
  %207 = vmatpush1.msra.mxu0 0.0
  %208 = vmatprep.subr.mxu0 0.0
  %209 = vmatpush1.msra.mxu0 0.0
  %210 = vmatprep.subr.mxu0 0.0
  %211 = vmatpush1.msra.mxu0 0.0
  %212 = vmatprep.subr.mxu0 0.0
  %213 = vmatpush1.msra.mxu0 0.0
  %214 = vmatprep.subr.mxu0 0.0
  %215 = vmatpush1.msra.mxu0 0.0
  %216 = vmatprep.subr.mxu0 0.0
  %217 = vmatpush1.msra.mxu0 0.0
  %218 = vmatprep.subr.mxu0 0.0
  %219 = vmatpush1.msra.mxu0 0.0
  %220 = vmatprep.mubr.f32.mxu0 0.0
  %221 = vmatmul.mubr.f32.gmra.mrb[0].mxu0 %v150
  %v222 = vpop.f32.mrb[0].mxu0
  %v223 = vadd.f32 0.0, %v222
  %v224 = vpop.f32.mrb[0].mxu0
  %225 = vdwg.mxu0
  %v226 = vxor.u32 %v223, 2147483648
  %v227 = vmul.f32 %v226, 1.442695
  %v228 = vpow.pop %v227
  %v229 = vadd.f32 %v228, 1.0
  %v230 = vrcp.pop %v229
  %v231 = vmul.f32 1.0, %v230
  %v232 = vlaneseq
  %v233 = vshrl.u32 %v232, 7
  %v234 = vsub.s32 0, %v233
  %v235 = vrot.slane %v231, %v234
  %237 = vbcast.lane.b32.xlu0 %v235, 256
  %v238 = vpop.permute.xlu0 %237
  %s240 = sor.u32 256, 8
  %241 = vbcast.lane.b32.xlu0 %v235, %s240
  %v242 = vpop.permute.xlu0 %241
  %v243 = vlaneseq
  %v244 = vshrl.u32 %v243, 7
  %v245 = vsub.s32 1, %v244
  %v246 = vrot.slane %v231, %v245
  %248 = vbcast.lane.b32.xlu0 %v246, 256
  %v249 = vpop.permute.xlu0 %248
  %s251 = sor.u32 256, 8
  %252 = vbcast.lane.b32.xlu0 %v246, %s251
  %v253 = vpop.permute.xlu0 %252
  %v254 = vmul.f32 %v18, %v238
  %v255 = vmul.f32 %v19, %v238
  %v256 = vmul.f32 %v20, %v242
  %v257 = vmul.f32 %v21, %v242
  %v258 = vmul.f32 %v22, %v249
  %v259 = vmul.f32 %v23, %v249
  %v260 = vmul.f32 %v24, %v253
  %v261 = vmul.f32 %v25, %v253
  %262 = vst [vmem:[%s3] sm:$0xff] %v254
  %263 = vst [vmem:[%s3 + $0x8] sm:$0xff] %v255
  %264 = vst [vmem:[%s3 + $0x10] sm:$0xff] %v256
  %265 = vst [vmem:[%s3 + $0x18] sm:$0xff] %v257
  %266 = vst [vmem:[%s3 + $0x20] sm:$0xff] %v258
  %267 = vst [vmem:[%s3 + $0x28] sm:$0xff] %v259
  %268 = vst [vmem:[%s3 + $0x30] sm:$0xff] %v260
  %269 = vst [vmem:[%s3 + $0x38] sm:$0xff] %v261
  // Predicated region
  $region14: #{resnet_block_forward.5} parent=0 // pred_check
    _
  $region15: #{resnet_block_forward.5} parent=0 // pred_check_branch
    %271 = sbr.rel (0) target = $region17
  $region16: #{resnet_block_forward.5} parent=0 // pred_region
    _
  $region17: #{resnet_block_forward.5} parent=0 // pred_fallthru
    _
  // Predicated region
  $region18: #{resnet_block_forward.5} parent=0 // pred_check
    _
  $region19: #{resnet_block_forward.5} parent=0 // pred_check_branch
    %273 = sbr.rel (0) target = $region21
  $region20: #{resnet_block_forward.5} parent=0 // pred_region
    _
  $region21: #{resnet_block_forward.5} parent=0 // pred_fallthru
    _

// kernel: resnet_block_forward.4
$region0: #{resnet_block_forward.4}
  #allocation0 [shape = 'u32[]', space=smem, size = 0x4, offset = 0x4, fixed_abs, tag = 'smem constant byte address 0x4 - core index']
  #allocation1 [shape = 'u32[144,128]{1,0:T(1,128)}', space=vmem, size = 0x12000, scoped, tag = 'internal scratch']
  %s0 = inlined_call_operand.vmem [shape: bf16[16,768], index: 0, kind: input, shape index: {}]
  %s1 = inlined_call_operand.vmem [shape: bf16[8,648], index: 1, kind: input, shape index: {}]
  %s2 = inlined_call_operand.vmem [shape: bf16[9,16,16], index: 2, kind: input, shape index: {}]
  %s3 = inlined_call_operand.vmem [shape: bf16[16,8], index: 3, kind: input, shape index: {}]
  %s4 = inlined_call_operand.vmem [shape: f32[16,1], index: 4, kind: input, shape index: {}]
  %s5 = inlined_call_operand.vmem [shape: bf16[16,648], index: 5, kind: output, shape index: {}]
  %s6 = sld [smem:[#allocation0]]
  $region30: #{resnet_block_forward.4} parent=0
    _
  %s8 = ssub.s32 1, %s6
  %s9 = scalar_select 0, %s8, %s6
  // Predicated region
  $region2: #{resnet_block_forward.4} parent=0 // pred_check
    _
  $region3: #{resnet_block_forward.4} parent=0 // pred_check_branch
    %11 = sbr.rel (0) target = $region5
  $region4: #{resnet_block_forward.4} parent=0 // pred_region
    _
  $region5: #{resnet_block_forward.4} parent=0 // pred_fallthru
    _
  // Predicated region
  $region6: #{resnet_block_forward.4} parent=0 // pred_check
    _
  $region7: #{resnet_block_forward.4} parent=0 // pred_check_branch
    %13 = sbr.rel (0) target = $region9
  $region8: #{resnet_block_forward.4} parent=0 // pred_region
    _
  $region9: #{resnet_block_forward.4} parent=0 // pred_fallthru
    _
  // Predicated region
  $region10: #{resnet_block_forward.4} parent=0 // pred_check
    _
  $region11: #{resnet_block_forward.4} parent=0 // pred_check_branch
    %15 = sbr.rel (0) target = $region13
  $region12: #{resnet_block_forward.4} parent=0 // pred_region
    _
  $region13: #{resnet_block_forward.4} parent=0 // pred_fallthru
    _
  // Predicated region
  $region14: #{resnet_block_forward.4} parent=0 // pred_check
    _
  $region15: #{resnet_block_forward.4} parent=0 // pred_check_branch
    %17 = sbr.rel (0) target = $region17
  $region16: #{resnet_block_forward.4} parent=0 // pred_region
    _
  $region17: #{resnet_block_forward.4} parent=0 // pred_fallthru
    _
  // Predicated region
  $region18: #{resnet_block_forward.4} parent=0 // pred_check
    _
  $region19: #{resnet_block_forward.4} parent=0 // pred_check_branch
    %19 = sbr.rel (0) target = $region21
  $region20: #{resnet_block_forward.4} parent=0 // pred_region
    _
  $region21: #{resnet_block_forward.4} parent=0 // pred_fallthru
    _
  %v21 = vld [vmem:[%s3] sm:$0xf]
  %v22 = vld [vmem:[%s3 + $0x4] sm:$0xf]
  %v23 = vld [vmem:[%s1] sm:$0xff]
  %v24 = vld [vmem:[%s1 + $0x8] sm:$0xff]
  %v25 = vld [vmem:[%s1 + $0x10] sm:$0xff]
  %v26 = vld [vmem:[%s4] sm:$0xff]
  %v27 = vld [vmem:[%s4 + $0x8] sm:$0xff]
  %29 = vset.pattern.permute.xlu0 0
  %30 = vperm.xlu0 %29, %v26
  %v31 = vpop.permute.xlu0 %30
  %34 = vset.pattern.permute.xlu0 0
  %35 = vperm.xlu0 %34, %v27
  %v36 = vpop.permute.xlu0 %35
  %v40 = vunpack.c.l.b16 %v21
  %v41 = vunpack.c.l.b16 %v22
  %v42 = vpack.c.b16 %v41, %v40
  %v46 = vunpack.c.l.b16 %v23
  %v47 = vunpack.c.h.b16 %v23
  %v48 = vunpack.c.l.b16 %v24
  %v49 = vunpack.c.h.b16 %v24
  %v50 = vunpack.c.l.b16 %v25
  %v51 = vunpack.c.h.b16 %v25
  %v52 = vpack.c.b16 %v46, %v46
  %v53 = vpack.c.b16 %v47, %v47
  %v54 = vpack.c.b16 %v48, %v48
  %v55 = vpack.c.b16 %v49, %v49
  %v56 = vpack.c.b16 %v50, %v50
  %v57 = vpack.c.b16 %v51, %v51
  %vm58 = vcmask 64512
  %v60 = vsel %vm58, %v42, 0
  %vm62 = vcmask 1043456
  %v64 = vsel %vm62, %v52, 0
  %v67 = vsel %vm62, %v53, 0
  %v70 = vsel %vm62, %v54, 0
  %v73 = vsel %vm62, %v55, 0
  %v76 = vsel %vm62, %v56, 0
  %v79 = vsel %vm62, %v57, 0
  %81 = vmatprep.subr.bf16.mxu0 %v67
  %82 = vmatpush1.bf16.msra.mxu0 %v64
  %83 = vmatprep.subr.bf16.mxu0 0
  %84 = vmatpush1.bf16.msra.mxu0 0
  %85 = vmatprep.subr.bf16.mxu0 0
  %86 = vmatpush1.bf16.msra.mxu0 0
  %87 = vmatprep.subr.bf16.mxu0 0
  %88 = vmatpush1.bf16.msra.mxu0 0
  %89 = vmatprep.subr.bf16.mxu0 0
  %90 = vmatpush1.bf16.msra.mxu0 0
  %91 = vmatprep.subr.bf16.mxu0 0
  %92 = vmatpush1.bf16.msra.mxu0 0
  %93 = vmatprep.subr.bf16.mxu0 0
  %94 = vmatpush1.bf16.msra.mxu0 0
  %95 = vmatprep.subr.bf16.mxu0 0
  %96 = vmatpush1.bf16.msra.mxu0 0
  %97 = vmatprep.subr.bf16.mxu0 0
  %98 = vmatpush1.bf16.msra.mxu0 0
  %99 = vmatprep.subr.bf16.mxu0 0
  %100 = vmatpush1.bf16.msra.mxu0 0
  %101 = vmatprep.subr.bf16.mxu0 0
  %102 = vmatpush1.bf16.msra.mxu0 0
  %103 = vmatprep.subr.bf16.mxu0 0
  %104 = vmatpush1.bf16.msra.mxu0 0
  %105 = vmatprep.subr.bf16.mxu0 0
  %106 = vmatpush1.bf16.msra.mxu0 0
  %107 = vmatprep.subr.bf16.mxu0 0
  %108 = vmatpush1.bf16.msra.mxu0 0
  %109 = vmatprep.subr.bf16.mxu0 0
  %110 = vmatpush1.bf16.msra.mxu0 0
  %111 = vmatprep.subr.bf16.mxu0 0
  %112 = vmatpush1.bf16.msra.mxu0 0
  %113 = vmatprep.mubr.bf16.mxu0 0
  %114 = vmatmul.mubr.bf16.gmra.mrb[0].mxu0 %v60
  %v115 = vpop.f32.mrb[0].mxu0
  %v116 = vadd.f32 %v31, %v115
  %v117 = vpop.f32.mrb[0].mxu0
  %v118 = vadd.f32 %v31, %v117
  %v119 = vpop.f32.mrb[0].mxu0
  %v120 = vadd.f32 %v36, %v119
  %v121 = vpop.f32.mrb[0].mxu0
  %v122 = vadd.f32 %v36, %v121
  %123 = vdwg.mxu0
  %124 = vmatprep.subr.bf16.mxu0 %v73
  %125 = vmatpush1.bf16.msra.mxu0 %v70
  %126 = vmatprep.subr.bf16.mxu0 0
  %127 = vmatpush1.bf16.msra.mxu0 0
  %128 = vmatprep.subr.bf16.mxu0 0
  %129 = vmatpush1.bf16.msra.mxu0 0
  %130 = vmatprep.subr.bf16.mxu0 0
  %131 = vmatpush1.bf16.msra.mxu0 0
  %132 = vmatprep.subr.bf16.mxu0 0
  %133 = vmatpush1.bf16.msra.mxu0 0
  %134 = vmatprep.subr.bf16.mxu0 0
  %135 = vmatpush1.bf16.msra.mxu0 0
  %136 = vmatprep.subr.bf16.mxu0 0
  %137 = vmatpush1.bf16.msra.mxu0 0
  %138 = vmatprep.subr.bf16.mxu0 0
  %139 = vmatpush1.bf16.msra.mxu0 0
  %140 = vmatprep.subr.bf16.mxu0 0
  %141 = vmatpush1.bf16.msra.mxu0 0
  %142 = vmatprep.subr.bf16.mxu0 0
  %143 = vmatpush1.bf16.msra.mxu0 0
  %144 = vmatprep.subr.bf16.mxu0 0
  %145 = vmatpush1.bf16.msra.mxu0 0
  %146 = vmatprep.subr.bf16.mxu0 0
  %147 = vmatpush1.bf16.msra.mxu0 0
  %148 = vmatprep.subr.bf16.mxu0 0
  %149 = vmatpush1.bf16.msra.mxu0 0
  %150 = vmatprep.subr.bf16.mxu0 0
  %151 = vmatpush1.bf16.msra.mxu0 0
  %152 = vmatprep.subr.bf16.mxu0 0
  %153 = vmatpush1.bf16.msra.mxu0 0
  %154 = vmatprep.subr.bf16.mxu0 0
  %155 = vmatpush1.bf16.msra.mxu0 0
  %156 = vmatprep.mubr.bf16.mxu0 0
  %157 = vmatmul.mubr.bf16.gmra.mrb[0].mxu0 %v60
  %v158 = vpop.f32.mrb[0].mxu0
  %v159 = vadd.f32 %v31, %v158
  %v160 = vpop.f32.mrb[0].mxu0
  %v161 = vadd.f32 %v31, %v160
  %v162 = vpop.f32.mrb[0].mxu0
  %v163 = vadd.f32 %v36, %v162
  %v164 = vpop.f32.mrb[0].mxu0
  %v165 = vadd.f32 %v36, %v164
  %166 = vdwg.mxu0
  %167 = vmatprep.subr.bf16.mxu0 %v79
  %168 = vmatpush1.bf16.msra.mxu0 %v76
  %169 = vmatprep.subr.bf16.mxu0 0
  %170 = vmatpush1.bf16.msra.mxu0 0
  %171 = vmatprep.subr.bf16.mxu0 0
  %172 = vmatpush1.bf16.msra.mxu0 0
  %173 = vmatprep.subr.bf16.mxu0 0
  %174 = vmatpush1.bf16.msra.mxu0 0
  %175 = vmatprep.subr.bf16.mxu0 0
  %176 = vmatpush1.bf16.msra.mxu0 0
  %177 = vmatprep.subr.bf16.mxu0 0
  %178 = vmatpush1.bf16.msra.mxu0 0
  %179 = vmatprep.subr.bf16.mxu0 0
  %180 = vmatpush1.bf16.msra.mxu0 0
  %181 = vmatprep.subr.bf16.mxu0 0
  %182 = vmatpush1.bf16.msra.mxu0 0
  %183 = vmatprep.subr.bf16.mxu0 0
  %184 = vmatpush1.bf16.msra.mxu0 0
  %185 = vmatprep.subr.bf16.mxu0 0
  %186 = vmatpush1.bf16.msra.mxu0 0
  %187 = vmatprep.subr.bf16.mxu0 0
  %188 = vmatpush1.bf16.msra.mxu0 0
  %189 = vmatprep.subr.bf16.mxu0 0
  %190 = vmatpush1.bf16.msra.mxu0 0
  %191 = vmatprep.subr.bf16.mxu0 0
  %192 = vmatpush1.bf16.msra.mxu0 0
  %193 = vmatprep.subr.bf16.mxu0 0
  %194 = vmatpush1.bf16.msra.mxu0 0
  %195 = vmatprep.subr.bf16.mxu0 0
  %196 = vmatpush1.bf16.msra.mxu0 0
  %197 = vmatprep.subr.bf16.mxu0 0
  %198 = vmatpush1.bf16.msra.mxu0 0
  %199 = vmatprep.mubr.bf16.mxu0 0
  %200 = vmatmul.mubr.bf16.gmra.mrb[0].mxu0 %v60
  %v201 = vpop.f32.mrb[0].mxu0
  %v202 = vadd.f32 %v31, %v201
  %v203 = vpop.f32.mrb[0].mxu0
  %v204 = vadd.f32 %v31, %v203
  %v205 = vpop.f32.mrb[0].mxu0
  %v206 = vadd.f32 %v36, %v205
  %v207 = vpop.f32.mrb[0].mxu0
  %v208 = vadd.f32 %v36, %v207
  %209 = vdwg.mxu0
  %v210 = vld [vmem:[%s0] sm:$0xff]
  %v211 = vld [vmem:[%s0 + $0x8] sm:$0xff]
  %v212 = vld [vmem:[%s0 + $0x10] sm:$0xff]
  %v213 = vld [vmem:[%s0 + $0x18] sm:$0xff]
  %v214 = vld [vmem:[%s0 + $0x20] sm:$0xff]
  %v215 = vld [vmem:[%s0 + $0x28] sm:$0xff]
  %v216 = vld [vmem:[%s2] sm:$0xf]
  %v217 = vld [vmem:[%s2 + $0x4] sm:$0xf]
  %v220 = vunpack.c.l.b16 %v216
  %v221 = vunpack.c.l.b16 %v217
  %v222 = vpack.c.b16 %v221, %v220
  %v229 = vunpack.c.l.b16 %v210
  %v230 = vunpack.c.h.b16 %v210
  %v231 = vunpack.c.l.b16 %v211
  %v232 = vunpack.c.h.b16 %v211
  %v233 = vunpack.c.l.b16 %v212
  %v234 = vunpack.c.h.b16 %v212
  %v235 = vunpack.c.l.b16 %v213
  %v236 = vunpack.c.h.b16 %v213
  %v237 = vunpack.c.l.b16 %v214
  %v238 = vunpack.c.h.b16 %v214
  %v239 = vunpack.c.l.b16 %v215
  %v240 = vunpack.c.h.b16 %v215
  %v241 = vpack.c.b16 %v235, %v229
  %v242 = vpack.c.b16 %v236, %v230
  %v243 = vpack.c.b16 %v237, %v231
  %v244 = vpack.c.b16 %v238, %v232
  %v245 = vpack.c.b16 %v239, %v233
  %v246 = vpack.c.b16 %v240, %v234
  %vm253 = vcmask 130048
  %v255 = vsel %vm253, %v222, 0
  %257 = vmatprep.subr.bf16.mxu0 %v242
  %258 = vmatpush1.bf16.msra.mxu0 %v241
  %259 = vmatprep.subr.bf16.mxu0 0
  %260 = vmatpush1.bf16.msra.mxu0 0
  %261 = vmatprep.subr.bf16.mxu0 0
  %262 = vmatpush1.bf16.msra.mxu0 0
  %263 = vmatprep.subr.bf16.mxu0 0
  %264 = vmatpush1.bf16.msra.mxu0 0
  %265 = vmatprep.subr.bf16.mxu0 0
  %266 = vmatpush1.bf16.msra.mxu0 0
  %267 = vmatprep.subr.bf16.mxu0 0
  %268 = vmatpush1.bf16.msra.mxu0 0
  %269 = vmatprep.subr.bf16.mxu0 0
  %270 = vmatpush1.bf16.msra.mxu0 0
  %271 = vmatprep.subr.bf16.mxu0 0
  %272 = vmatpush1.bf16.msra.mxu0 0
  %273 = vmatprep.subr.bf16.mxu0 0
  %274 = vmatpush1.bf16.msra.mxu0 0
  %275 = vmatprep.subr.bf16.mxu0 0
  %276 = vmatpush1.bf16.msra.mxu0 0
  %277 = vmatprep.subr.bf16.mxu0 0
  %278 = vmatpush1.bf16.msra.mxu0 0
  %279 = vmatprep.subr.bf16.mxu0 0
  %280 = vmatpush1.bf16.msra.mxu0 0
  %281 = vmatprep.subr.bf16.mxu0 0
  %282 = vmatpush1.bf16.msra.mxu0 0
  %283 = vmatprep.subr.bf16.mxu0 0
  %284 = vmatpush1.bf16.msra.mxu0 0
  %285 = vmatprep.subr.bf16.mxu0 0
  %286 = vmatpush1.bf16.msra.mxu0 0
  %287 = vmatprep.subr.bf16.mxu0 0
  %288 = vmatpush1.bf16.msra.mxu0 0
  %289 = vmatprep.mubr.bf16.mxu0 0
  %290 = vmatmul.mubr.bf16.gmra.mrb[0].mxu0 %v255
  %v291 = vpop.f32.mrb[0].mxu0
  %v292 = vadd.f32 0.0, %v291
  %v293 = vpop.f32.mrb[0].mxu0
  %v294 = vadd.f32 0.0, %v293
  %v295 = vpop.f32.mrb[0].mxu0
  %v296 = vadd.f32 0.0, %v295
  %v297 = vpop.f32.mrb[0].mxu0
  %v298 = vadd.f32 0.0, %v297
  %299 = vdwg.mxu0
  %300 = vmatprep.subr.bf16.mxu0 %v244
  %301 = vmatpush1.bf16.msra.mxu0 %v243
  %302 = vmatprep.subr.bf16.mxu0 0
  %303 = vmatpush1.bf16.msra.mxu0 0
  %304 = vmatprep.subr.bf16.mxu0 0
  %305 = vmatpush1.bf16.msra.mxu0 0
  %306 = vmatprep.subr.bf16.mxu0 0
  %307 = vmatpush1.bf16.msra.mxu0 0
  %308 = vmatprep.subr.bf16.mxu0 0
  %309 = vmatpush1.bf16.msra.mxu0 0
  %310 = vmatprep.subr.bf16.mxu0 0
  %311 = vmatpush1.bf16.msra.mxu0 0
  %312 = vmatprep.subr.bf16.mxu0 0
  %313 = vmatpush1.bf16.msra.mxu0 0
  %314 = vmatprep.subr.bf16.mxu0 0
  %315 = vmatpush1.bf16.msra.mxu0 0
  %316 = vmatprep.subr.bf16.mxu0 0
  %317 = vmatpush1.bf16.msra.mxu0 0
  %318 = vmatprep.subr.bf16.mxu0 0
  %319 = vmatpush1.bf16.msra.mxu0 0
  %320 = vmatprep.subr.bf16.mxu0 0
  %321 = vmatpush1.bf16.msra.mxu0 0
  %322 = vmatprep.subr.bf16.mxu0 0
  %323 = vmatpush1.bf16.msra.mxu0 0
  %324 = vmatprep.subr.bf16.mxu0 0
  %325 = vmatpush1.bf16.msra.mxu0 0
  %326 = vmatprep.subr.bf16.mxu0 0
  %327 = vmatpush1.bf16.msra.mxu0 0
  %328 = vmatprep.subr.bf16.mxu0 0
  %329 = vmatpush1.bf16.msra.mxu0 0
  %330 = vmatprep.subr.bf16.mxu0 0
  %331 = vmatpush1.bf16.msra.mxu0 0
  %332 = vmatprep.mubr.bf16.mxu0 0
  %333 = vmatmul.mubr.bf16.gmra.mrb[0].mxu0 %v255
  %v334 = vpop.f32.mrb[0].mxu0
  %v335 = vadd.f32 0.0, %v334
  %v336 = vpop.f32.mrb[0].mxu0
  %v337 = vadd.f32 0.0, %v336
  %v338 = vpop.f32.mrb[0].mxu0
  %v339 = vadd.f32 0.0, %v338
  %v340 = vpop.f32.mrb[0].mxu0
  %v341 = vadd.f32 0.0, %v340
  %342 = vdwg.mxu0
  %343 = vmatprep.subr.bf16.mxu0 %v246
  %344 = vmatpush1.bf16.msra.mxu0 %v245
  %345 = vmatprep.subr.bf16.mxu0 0
  %346 = vmatpush1.bf16.msra.mxu0 0
  %347 = vmatprep.subr.bf16.mxu0 0
  %348 = vmatpush1.bf16.msra.mxu0 0
  %349 = vmatprep.subr.bf16.mxu0 0
  %350 = vmatpush1.bf16.msra.mxu0 0
  %351 = vmatprep.subr.bf16.mxu0 0
  %352 = vmatpush1.bf16.msra.mxu0 0
  %353 = vmatprep.subr.bf16.mxu0 0
  %354 = vmatpush1.bf16.msra.mxu0 0
  %355 = vmatprep.subr.bf16.mxu0 0
  %356 = vmatpush1.bf16.msra.mxu0 0
  %357 = vmatprep.subr.bf16.mxu0 0
  %358 = vmatpush1.bf16.msra.mxu0 0
  %359 = vmatprep.subr.bf16.mxu0 0
  %360 = vmatpush1.bf16.msra.mxu0 0
  %361 = vmatprep.subr.bf16.mxu0 0
  %362 = vmatpush1.bf16.msra.mxu0 0
  %363 = vmatprep.subr.bf16.mxu0 0
  %364 = vmatpush1.bf16.msra.mxu0 0
  %365 = vmatprep.subr.bf16.mxu0 0
  %366 = vmatpush1.bf16.msra.mxu0 0
  %367 = vmatprep.subr.bf16.mxu0 0
  %368 = vmatpush1.bf16.msra.mxu0 0
  %369 = vmatprep.subr.bf16.mxu0 0
  %370 = vmatpush1.bf16.msra.mxu0 0
  %371 = vmatprep.subr.bf16.mxu0 0
  %372 = vmatpush1.bf16.msra.mxu0 0
  %373 = vmatprep.subr.bf16.mxu0 0
  %374 = vmatpush1.bf16.msra.mxu0 0
  %375 = vmatprep.mubr.bf16.mxu0 0
  %376 = vmatmul.mubr.bf16.gmra.mrb[0].mxu0 %v255
  %v377 = vpop.f32.mrb[0].mxu0
  %v378 = vadd.f32 0.0, %v377
  %v379 = vpop.f32.mrb[0].mxu0
  %v380 = vadd.f32 0.0, %v379
  %v381 = vpop.f32.mrb[0].mxu0
  %v382 = vadd.f32 0.0, %v381
  %v383 = vpop.f32.mrb[0].mxu0
  %v384 = vadd.f32 0.0, %v383
  %385 = vdwg.mxu0
  %v386 = vadd.f32 %v116, %v292
  %v387 = vadd.f32 %v118, %v294
  %v388 = vadd.f32 %v159, %v335
  %v389 = vadd.f32 %v161, %v337
  %v390 = vadd.f32 %v202, %v378
  %v391 = vadd.f32 %v204, %v380
  %v392 = vadd.f32 %v120, %v296
  %v393 = vadd.f32 %v122, %v298
  %v394 = vadd.f32 %v163, %v339
  %v395 = vadd.f32 %v165, %v341
  %v396 = vadd.f32 %v206, %v382
  %v397 = vadd.f32 %v208, %v384
  %s398 = scalar_lea.vmem %s2, 8
  %v399 = vld [vmem:[%s398] sm:$0xf]
  %v400 = vld [vmem:[%s398 + $0x4] sm:$0xf]
  %v403 = vunpack.c.l.b16 %v399
  %v404 = vunpack.c.l.b16 %v400
  %v405 = vpack.c.b16 %v404, %v403
  %406 = vrot.lane.b32.xlu0 %v241, 127
  %v407 = vpop.permute.xlu0 %406
  %408 = vrot.lane.b32.xlu0 %v242, 127
  %v409 = vpop.permute.xlu0 %408
  %410 = vrot.lane.b32.xlu0 %v243, 127
  %v411 = vpop.permute.xlu0 %410
  %412 = vrot.lane.b32.xlu0 %v244, 127
  %v413 = vpop.permute.xlu0 %412
  %414 = vrot.lane.b32.xlu0 %v245, 127
  %v415 = vpop.permute.xlu0 %414
  %416 = vrot.lane.b32.xlu0 %v246, 127
  %v417 = vpop.permute.xlu0 %416
  %vm418 = vcmask 1039360
  %v419 = vsel %vm418, %v407, %v409
  %v420 = vsel %vm418, %v409, %v411
  %v421 = vsel %vm418, %v411, %v413
  %v422 = vsel %vm418, %v413, %v415
  %v423 = vsel %vm418, %v415, %v417
  %v431 = vsel %vm253, %v405, 0
  %433 = vmatprep.subr.bf16.mxu0 %v420
  %434 = vmatpush1.bf16.msra.mxu0 %v419
  %435 = vmatprep.subr.bf16.mxu0 0
  %436 = vmatpush1.bf16.msra.mxu0 0
  %437 = vmatprep.subr.bf16.mxu0 0
  %438 = vmatpush1.bf16.msra.mxu0 0
  %439 = vmatprep.subr.bf16.mxu0 0
  %440 = vmatpush1.bf16.msra.mxu0 0
  %441 = vmatprep.subr.bf16.mxu0 0
  %442 = vmatpush1.bf16.msra.mxu0 0
  %443 = vmatprep.subr.bf16.mxu0 0
  %444 = vmatpush1.bf16.msra.mxu0 0
  %445 = vmatprep.subr.bf16.mxu0 0
  %446 = vmatpush1.bf16.msra.mxu0 0
  %447 = vmatprep.subr.bf16.mxu0 0
  %448 = vmatpush1.bf16.msra.mxu0 0
  %449 = vmatprep.subr.bf16.mxu0 0
  %450 = vmatpush1.bf16.msra.mxu0 0
  %451 = vmatprep.subr.bf16.mxu0 0
  %452 = vmatpush1.bf16.msra.mxu0 0
  %453 = vmatprep.subr.bf16.mxu0 0
  %454 = vmatpush1.bf16.msra.mxu0 0
  %455 = vmatprep.subr.bf16.mxu0 0
  %456 = vmatpush1.bf16.msra.mxu0 0
  %457 = vmatprep.subr.bf16.mxu0 0
  %458 = vmatpush1.bf16.msra.mxu0 0
  %459 = vmatprep.subr.bf16.mxu0 0
  %460 = vmatpush1.bf16.msra.mxu0 0
  %461 = vmatprep.subr.bf16.mxu0 0
  %462 = vmatpush1.bf16.msra.mxu0 0
  %463 = vmatprep.subr.bf16.mxu0 0
  %464 = vmatpush1.bf16.msra.mxu0 0
  %465 = vmatprep.mubr.bf16.mxu0 0
  %466 = vmatmul.mubr.bf16.gmra.mrb[0].mxu0 %v431
  %v467 = vpop.f32.mrb[0].mxu0
  %v468 = vadd.f32 0.0, %v467
  %v469 = vpop.f32.mrb[0].mxu0
  %v470 = vadd.f32 0.0, %v469
  %v471 = vpop.f32.mrb[0].mxu0
  %v472 = vadd.f32 0.0, %v471
  %v473 = vpop.f32.mrb[0].mxu0
  %v474 = vadd.f32 0.0, %v473
  %475 = vdwg.mxu0
  %476 = vmatprep.subr.bf16.mxu0 %v422
  %477 = vmatpush1.bf16.msra.mxu0 %v421
  %478 = vmatprep.subr.bf16.mxu0 0
  %479 = vmatpush1.bf16.msra.mxu0 0
  %480 = vmatprep.subr.bf16.mxu0 0
  %481 = vmatpush1.bf16.msra.mxu0 0
  %482 = vmatprep.subr.bf16.mxu0 0
  %483 = vmatpush1.bf16.msra.mxu0 0
  %484 = vmatprep.subr.bf16.mxu0 0
  %485 = vmatpush1.bf16.msra.mxu0 0
  %486 = vmatprep.subr.bf16.mxu0 0
  %487 = vmatpush1.bf16.msra.mxu0 0
  %488 = vmatprep.subr.bf16.mxu0 0
  %489 = vmatpush1.bf16.msra.mxu0 0
  %490 = vmatprep.subr.bf16.mxu0 0
  %491 = vmatpush1.bf16.msra.mxu0 0
  %492 = vmatprep.subr.bf16.mxu0 0
  %493 = vmatpush1.bf16.msra.mxu0 0
  %494 = vmatprep.subr.bf16.mxu0 0
  %495 = vmatpush1.bf16.msra.mxu0 0
  %496 = vmatprep.subr.bf16.mxu0 0
  %497 = vmatpush1.bf16.msra.mxu0 0
  %498 = vmatprep.subr.bf16.mxu0 0
  %499 = vmatpush1.bf16.msra.mxu0 0
  %500 = vmatprep.subr.bf16.mxu0 0
  %501 = vmatpush1.bf16.msra.mxu0 0
  %502 = vmatprep.subr.bf16.mxu0 0
  %503 = vmatpush1.bf16.msra.mxu0 0
  %504 = vmatprep.subr.bf16.mxu0 0
  %505 = vmatpush1.bf16.msra.mxu0 0
  %506 = vmatprep.subr.bf16.mxu0 0
  %507 = vmatpush1.bf16.msra.mxu0 0
  %508 = vmatprep.mubr.bf16.mxu0 0
  %509 = vmatmul.mubr.bf16.gmra.mrb[0].mxu0 %v431
  %v510 = vpop.f32.mrb[0].mxu0
  %v511 = vadd.f32 0.0, %v510
  %v512 = vpop.f32.mrb[0].mxu0
  %v513 = vadd.f32 0.0, %v512
  %v514 = vpop.f32.mrb[0].mxu0
  %v515 = vadd.f32 0.0, %v514
  %v516 = vpop.f32.mrb[0].mxu0
  %v517 = vadd.f32 0.0, %v516
  %518 = vdwg.mxu0
  %519 = vmatprep.subr.bf16.mxu0 %v417
  %520 = vmatpush1.bf16.msra.mxu0 %v423
  %521 = vmatprep.subr.bf16.mxu0 0
  %522 = vmatpush1.bf16.msra.mxu0 0
  %523 = vmatprep.subr.bf16.mxu0 0
  %524 = vmatpush1.bf16.msra.mxu0 0
  %525 = vmatprep.subr.bf16.mxu0 0
  %526 = vmatpush1.bf16.msra.mxu0 0
  %527 = vmatprep.subr.bf16.mxu0 0
  %528 = vmatpush1.bf16.msra.mxu0 0
  %529 = vmatprep.subr.bf16.mxu0 0
  %530 = vmatpush1.bf16.msra.mxu0 0
  %531 = vmatprep.subr.bf16.mxu0 0
  %532 = vmatpush1.bf16.msra.mxu0 0
  %533 = vmatprep.subr.bf16.mxu0 0
  %534 = vmatpush1.bf16.msra.mxu0 0
  %535 = vmatprep.subr.bf16.mxu0 0
  %536 = vmatpush1.bf16.msra.mxu0 0
  %537 = vmatprep.subr.bf16.mxu0 0
  %538 = vmatpush1.bf16.msra.mxu0 0
  %539 = vmatprep.subr.bf16.mxu0 0
  %540 = vmatpush1.bf16.msra.mxu0 0
  %541 = vmatprep.subr.bf16.mxu0 0
  %542 = vmatpush1.bf16.msra.mxu0 0
  %543 = vmatprep.subr.bf16.mxu0 0
  %544 = vmatpush1.bf16.msra.mxu0 0
  %545 = vmatprep.subr.bf16.mxu0 0
  %546 = vmatpush1.bf16.msra.mxu0 0
  %547 = vmatprep.subr.bf16.mxu0 0
  %548 = vmatpush1.bf16.msra.mxu0 0
  %549 = vmatprep.subr.bf16.mxu0 0
  %550 = vmatpush1.bf16.msra.mxu0 0
  %551 = vmatprep.mubr.bf16.mxu0 0
  %552 = vmatmul.mubr.bf16.gmra.mrb[0].mxu0 %v431
  %v553 = vpop.f32.mrb[0].mxu0
  %v554 = vadd.f32 0.0, %v553
  %v555 = vpop.f32.mrb[0].mxu0
  %v556 = vadd.f32 0.0, %v555
  %v557 = vpop.f32.mrb[0].mxu0
  %v558 = vadd.f32 0.0, %v557
  %v559 = vpop.f32.mrb[0].mxu0
  %v560 = vadd.f32 0.0, %v559
  %561 = vdwg.mxu0
  %v562 = vadd.f32 %v386, %v468
  %v563 = vadd.f32 %v387, %v470
  %v564 = vadd.f32 %v388, %v511
  %v565 = vadd.f32 %v389, %v513
  %v566 = vadd.f32 %v390, %v554
  %v567 = vadd.f32 %v391, %v556
  %v568 = vadd.f32 %v392, %v472
  %v569 = vadd.f32 %v393, %v474
  %v570 = vadd.f32 %v394, %v515
  %v571 = vadd.f32 %v395, %v517
  %v572 = vadd.f32 %v396, %v558
  %v573 = vadd.f32 %v397, %v560
  %s574 = scalar_lea.vmem %s2, 16
  %v575 = vld [vmem:[%s574] sm:$0xf]
  %v576 = vld [vmem:[%s574 + $0x4] sm:$0xf]
  %v579 = vunpack.c.l.b16 %v575
  %v580 = vunpack.c.l.b16 %v576
  %v581 = vpack.c.b16 %v580, %v579
  %582 = vrot.lane.b32.xlu0 %v241, 126
  %v583 = vpop.permute.xlu0 %582
  %584 = vrot.lane.b32.xlu0 %v242, 126
  %v585 = vpop.permute.xlu0 %584
  %586 = vrot.lane.b32.xlu0 %v243, 126
  %v587 = vpop.permute.xlu0 %586
  %588 = vrot.lane.b32.xlu0 %v244, 126
  %v589 = vpop.permute.xlu0 %588
  %590 = vrot.lane.b32.xlu0 %v245, 126
  %v591 = vpop.permute.xlu0 %590
  %592 = vrot.lane.b32.xlu0 %v246, 126
  %v593 = vpop.permute.xlu0 %592
  %vm594 = vcmask 1031168
  %v595 = vsel %vm594, %v583, %v585
  %v596 = vsel %vm594, %v585, %v587
  %v597 = vsel %vm594, %v587, %v589
  %v598 = vsel %vm594, %v589, %v591
  %v599 = vsel %vm594, %v591, %v593
  %v607 = vsel %vm253, %v581, 0
  %609 = vmatprep.subr.bf16.mxu0 %v596
  %610 = vmatpush1.bf16.msra.mxu0 %v595
  %611 = vmatprep.subr.bf16.mxu0 0
  %612 = vmatpush1.bf16.msra.mxu0 0
  %613 = vmatprep.subr.bf16.mxu0 0
  %614 = vmatpush1.bf16.msra.mxu0 0
  %615 = vmatprep.subr.bf16.mxu0 0
  %616 = vmatpush1.bf16.msra.mxu0 0
  %617 = vmatprep.subr.bf16.mxu0 0
  %618 = vmatpush1.bf16.msra.mxu0 0
  %619 = vmatprep.subr.bf16.mxu0 0
  %620 = vmatpush1.bf16.msra.mxu0 0
  %621 = vmatprep.subr.bf16.mxu0 0
  %622 = vmatpush1.bf16.msra.mxu0 0
  %623 = vmatprep.subr.bf16.mxu0 0
  %624 = vmatpush1.bf16.msra.mxu0 0
  %625 = vmatprep.subr.bf16.mxu0 0
  %626 = vmatpush1.bf16.msra.mxu0 0
  %627 = vmatprep.subr.bf16.mxu0 0
  %628 = vmatpush1.bf16.msra.mxu0 0
  %629 = vmatprep.subr.bf16.mxu0 0
  %630 = vmatpush1.bf16.msra.mxu0 0
  %631 = vmatprep.subr.bf16.mxu0 0
  %632 = vmatpush1.bf16.msra.mxu0 0
  %633 = vmatprep.subr.bf16.mxu0 0
  %634 = vmatpush1.bf16.msra.mxu0 0
  %635 = vmatprep.subr.bf16.mxu0 0
  %636 = vmatpush1.bf16.msra.mxu0 0
  %637 = vmatprep.subr.bf16.mxu0 0
  %638 = vmatpush1.bf16.msra.mxu0 0
  %639 = vmatprep.subr.bf16.mxu0 0
  %640 = vmatpush1.bf16.msra.mxu0 0
  %641 = vmatprep.mubr.bf16.mxu0 0
  %642 = vmatmul.mubr.bf16.gmra.mrb[0].mxu0 %v607
  %v643 = vpop.f32.mrb[0].mxu0
  %v644 = vadd.f32 0.0, %v643
  %v645 = vpop.f32.mrb[0].mxu0
  %v646 = vadd.f32 0.0, %v645
  %v647 = vpop.f32.mrb[0].mxu0
  %v648 = vadd.f32 0.0, %v647
  %v649 = vpop.f32.mrb[0].mxu0
  %v650 = vadd.f32 0.0, %v649
  %651 = vdwg.mxu0
  %652 = vmatprep.subr.bf16.mxu0 %v598
  %653 = vmatpush1.bf16.msra.mxu0 %v597
  %654 = vmatprep.subr.bf16.mxu0 0
  %655 = vmatpush1.bf16.msra.mxu0 0
  %656 = vmatprep.subr.bf16.mxu0 0
  %657 = vmatpush1.bf16.msra.mxu0 0
  %658 = vmatprep.subr.bf16.mxu0 0
  %659 = vmatpush1.bf16.msra.mxu0 0
  %660 = vmatprep.subr.bf16.mxu0 0
  %661 = vmatpush1.bf16.msra.mxu0 0
  %662 = vmatprep.subr.bf16.mxu0 0
  %663 = vmatpush1.bf16.msra.mxu0 0
  %664 = vmatprep.subr.bf16.mxu0 0
  %665 = vmatpush1.bf16.msra.mxu0 0
  %666 = vmatprep.subr.bf16.mxu0 0
  %667 = vmatpush1.bf16.msra.mxu0 0
  %668 = vmatprep.subr.bf16.mxu0 0
  %669 = vmatpush1.bf16.msra.mxu0 0
  %670 = vmatprep.subr.bf16.mxu0 0
  %671 = vmatpush1.bf16.msra.mxu0 0
  %672 = vmatprep.subr.bf16.mxu0 0
  %673 = vmatpush1.bf16.msra.mxu0 0
  %674 = vmatprep.subr.bf16.mxu0 0
  %675 = vmatpush1.bf16.msra.mxu0 0
  %676 = vmatprep.subr.bf16.mxu0 0
  %677 = vmatpush1.bf16.msra.mxu0 0
  %678 = vmatprep.subr.bf16.mxu0 0
  %679 = vmatpush1.bf16.msra.mxu0 0
  %680 = vmatprep.subr.bf16.mxu0 0
  %681 = vmatpush1.bf16.msra.mxu0 0
  %682 = vmatprep.subr.bf16.mxu0 0
  %683 = vmatpush1.bf16.msra.mxu0 0
  %684 = vmatprep.mubr.bf16.mxu0 0
  %685 = vmatmul.mubr.bf16.gmra.mrb[0].mxu0 %v607
  %v686 = vpop.f32.mrb[0].mxu0
  %v687 = vadd.f32 0.0, %v686
  %v688 = vpop.f32.mrb[0].mxu0
  %v689 = vadd.f32 0.0, %v688
  %v690 = vpop.f32.mrb[0].mxu0
  %v691 = vadd.f32 0.0, %v690
  %v692 = vpop.f32.mrb[0].mxu0
  %v693 = vadd.f32 0.0, %v692
  %694 = vdwg.mxu0
  %695 = vmatprep.subr.bf16.mxu0 %v593
  %696 = vmatpush1.bf16.msra.mxu0 %v599
  %697 = vmatprep.subr.bf16.mxu0 0
  %698 = vmatpush1.bf16.msra.mxu0 0
  %699 = vmatprep.subr.bf16.mxu0 0
  %700 = vmatpush1.bf16.msra.mxu0 0
  %701 = vmatprep.subr.bf16.mxu0 0
  %702 = vmatpush1.bf16.msra.mxu0 0
  %703 = vmatprep.subr.bf16.mxu0 0
  %704 = vmatpush1.bf16.msra.mxu0 0
  %705 = vmatprep.subr.bf16.mxu0 0
  %706 = vmatpush1.bf16.msra.mxu0 0
  %707 = vmatprep.subr.bf16.mxu0 0
  %708 = vmatpush1.bf16.msra.mxu0 0
  %709 = vmatprep.subr.bf16.mxu0 0
  %710 = vmatpush1.bf16.msra.mxu0 0
  %711 = vmatprep.subr.bf16.mxu0 0
  %712 = vmatpush1.bf16.msra.mxu0 0
  %713 = vmatprep.subr.bf16.mxu0 0
  %714 = vmatpush1.bf16.msra.mxu0 0
  %715 = vmatprep.subr.bf16.mxu0 0
  %716 = vmatpush1.bf16.msra.mxu0 0
  %717 = vmatprep.subr.bf16.mxu0 0
  %718 = vmatpush1.bf16.msra.mxu0 0
  %719 = vmatprep.subr.bf16.mxu0 0
  %720 = vmatpush1.bf16.msra.mxu0 0
  %721 = vmatprep.subr.bf16.mxu0 0
  %722 = vmatpush1.bf16.msra.mxu0 0
  %723 = vmatprep.subr.bf16.mxu0 0
  %724 = vmatpush1.bf16.msra.mxu0 0
  %725 = vmatprep.subr.bf16.mxu0 0
  %726 = vmatpush1.bf16.msra.mxu0 0
  %727 = vmatprep.mubr.bf16.mxu0 0
  %728 = vmatmul.mubr.bf16.gmra.mrb[0].mxu0 %v607
  %v729 = vpop.f32.mrb[0].mxu0
  %v730 = vadd.f32 0.0, %v729
  %v731 = vpop.f32.mrb[0].mxu0
  %v732 = vadd.f32 0.0, %v731
  %v733 = vpop.f32.mrb[0].mxu0
  %v734 = vadd.f32 0.0, %v733
  %v735 = vpop.f32.mrb[0].mxu0
  %v736 = vadd.f32 0.0, %v735
  %737 = vdwg.mxu0
  %v738 = vadd.f32 %v562, %v644
  %v739 = vadd.f32 %v563, %v646
  %v740 = vadd.f32 %v564, %v687
  %v741 = vadd.f32 %v565, %v689
  %v742 = vadd.f32 %v566, %v730
  %v743 = vadd.f32 %v567, %v732
  %v744 = vadd.f32 %v568, %v648
  %v745 = vadd.f32 %v569, %v650
  %v746 = vadd.f32 %v570, %v691
  %v747 = vadd.f32 %v571, %v693
  %v748 = vadd.f32 %v572, %v734
  %v749 = vadd.f32 %v573, %v736
  %s750 = scalar_lea.vmem %s2, 24
  %v751 = vld [vmem:[%s750] sm:$0xf]
  %v752 = vld [vmem:[%s750 + $0x4] sm:$0xf]
  %v755 = vunpack.c.l.b16 %v751
  %v756 = vunpack.c.l.b16 %v752
  %v757 = vpack.c.b16 %v756, %v755
  %758 = vrot.lane.b32.xlu0 %v241, 110
  %v759 = vpop.permute.xlu0 %758
  %760 = vrot.lane.b32.xlu0 %v242, 110
  %v761 = vpop.permute.xlu0 %760
  %762 = vrot.lane.b32.xlu0 %v243, 110
  %v763 = vpop.permute.xlu0 %762
  %764 = vrot.lane.b32.xlu0 %v244, 110
  %v765 = vpop.permute.xlu0 %764
  %766 = vrot.lane.b32.xlu0 %v245, 110
  %v767 = vpop.permute.xlu0 %766
  %768 = vrot.lane.b32.xlu0 %v246, 110
  %v769 = vpop.permute.xlu0 %768
  %vm770 = vcmask 900096
  %v771 = vsel %vm770, %v759, %v761
  %v772 = vsel %vm770, %v761, %v763
  %v773 = vsel %vm770, %v763, %v765
  %v774 = vsel %vm770, %v765, %v767
  %v775 = vsel %vm770, %v767, %v769
  %v783 = vsel %vm253, %v757, 0
  %785 = vmatprep.subr.bf16.mxu0 %v772
  %786 = vmatpush1.bf16.msra.mxu0 %v771
  %787 = vmatprep.subr.bf16.mxu0 0
  %788 = vmatpush1.bf16.msra.mxu0 0
  %789 = vmatprep.subr.bf16.mxu0 0
  %790 = vmatpush1.bf16.msra.mxu0 0
  %791 = vmatprep.subr.bf16.mxu0 0
  %792 = vmatpush1.bf16.msra.mxu0 0
  %793 = vmatprep.subr.bf16.mxu0 0
  %794 = vmatpush1.bf16.msra.mxu0 0
  %795 = vmatprep.subr.bf16.mxu0 0
  %796 = vmatpush1.bf16.msra.mxu0 0
  %797 = vmatprep.subr.bf16.mxu0 0
  %798 = vmatpush1.bf16.msra.mxu0 0
  %799 = vmatprep.subr.bf16.mxu0 0
  %800 = vmatpush1.bf16.msra.mxu0 0
  %801 = vmatprep.subr.bf16.mxu0 0
  %802 = vmatpush1.bf16.msra.mxu0 0
  %803 = vmatprep.subr.bf16.mxu0 0
  %804 = vmatpush1.bf16.msra.mxu0 0
  %805 = vmatprep.subr.bf16.mxu0 0
  %806 = vmatpush1.bf16.msra.mxu0 0
  %807 = vmatprep.subr.bf16.mxu0 0
  %808 = vmatpush1.bf16.msra.mxu0 0
  %809 = vmatprep.subr.bf16.mxu0 0
  %810 = vmatpush1.bf16.msra.mxu0 0
  %811 = vmatprep.subr.bf16.mxu0 0
  %812 = vmatpush1.bf16.msra.mxu0 0
  %813 = vmatprep.subr.bf16.mxu0 0
  %814 = vmatpush1.bf16.msra.mxu0 0
  %815 = vmatprep.subr.bf16.mxu0 0
  %816 = vmatpush1.bf16.msra.mxu0 0
  %817 = vmatprep.mubr.bf16.mxu0 0
  %818 = vmatmul.mubr.bf16.gmra.mrb[0].mxu0 %v783
  %v819 = vpop.f32.mrb[0].mxu0
  %v820 = vadd.f32 0.0, %v819
  %v821 = vpop.f32.mrb[0].mxu0
  %v822 = vadd.f32 0.0, %v821
  %v823 = vpop.f32.mrb[0].mxu0
  %v824 = vadd.f32 0.0, %v823
  %v825 = vpop.f32.mrb[0].mxu0
  %v826 = vadd.f32 0.0, %v825
  %827 = vdwg.mxu0
  %828 = vmatprep.subr.bf16.mxu0 %v774
  %829 = vmatpush1.bf16.msra.mxu0 %v773
  %830 = vmatprep.subr.bf16.mxu0 0
  %831 = vmatpush1.bf16.msra.mxu0 0
  %832 = vmatprep.subr.bf16.mxu0 0
  %833 = vmatpush1.bf16.msra.mxu0 0
  %834 = vmatprep.subr.bf16.mxu0 0
  %835 = vmatpush1.bf16.msra.mxu0 0
  %836 = vmatprep.subr.bf16.mxu0 0
  %837 = vmatpush1.bf16.msra.mxu0 0
  %838 = vmatprep.subr.bf16.mxu0 0
  %839 = vmatpush1.bf16.msra.mxu0 0
  %840 = vmatprep.subr.bf16.mxu0 0
  %841 = vmatpush1.bf16.msra.mxu0 0
  %842 = vmatprep.subr.bf16.mxu0 0
  %843 = vmatpush1.bf16.msra.mxu0 0
  %844 = vmatprep.subr.bf16.mxu0 0
  %845 = vmatpush1.bf16.msra.mxu0 0
  %846 = vmatprep.subr.bf16.mxu0 0
  %847 = vmatpush1.bf16.msra.mxu0 0
  %848 = vmatprep.subr.bf16.mxu0 0
  %849 = vmatpush1.bf16.msra.mxu0 0
  %850 = vmatprep.subr.bf16.mxu0 0
  %851 = vmatpush1.bf16.msra.mxu0 0
  %852 = vmatprep.subr.bf16.mxu0 0
  %853 = vmatpush1.bf16.msra.mxu0 0
  %854 = vmatprep.subr.bf16.mxu0 0
  %855 = vmatpush1.bf16.msra.mxu0 0
  %856 = vmatprep.subr.bf16.mxu0 0
  %857 = vmatpush1.bf16.msra.mxu0 0
  %858 = vmatprep.subr.bf16.mxu0 0
  %859 = vmatpush1.bf16.msra.mxu0 0
  %860 = vmatprep.mubr.bf16.mxu0 0
  %861 = vmatmul.mubr.bf16.gmra.mrb[0].mxu0 %v783
  %v862 = vpop.f32.mrb[0].mxu0
  %v863 = vadd.f32 0.0, %v862
  %v864 = vpop.f32.mrb[0].mxu0
  %v865 = vadd.f32 0.0, %v864
  %v866 = vpop.f32.mrb[0].mxu0
  %v867 = vadd.f32 0.0, %v866
  %v868 = vpop.f32.mrb[0].mxu0
  %v869 = vadd.f32 0.0, %v868
  %870 = vdwg.mxu0
  %871 = vmatprep.subr.bf16.mxu0 %v769
  %872 = vmatpush1.bf16.msra.mxu0 %v775
  %873 = vmatprep.subr.bf16.mxu0 0
  %874 = vmatpush1.bf16.msra.mxu0 0
  %875 = vmatprep.subr.bf16.mxu0 0
  %876 = vmatpush1.bf16.msra.mxu0 0
  %877 = vmatprep.subr.bf16.mxu0 0
  %878 = vmatpush1.bf16.msra.mxu0 0
  %879 = vmatprep.subr.bf16.mxu0 0
  %880 = vmatpush1.bf16.msra.mxu0 0
  %881 = vmatprep.subr.bf16.mxu0 0
  %882 = vmatpush1.bf16.msra.mxu0 0
  %883 = vmatprep.subr.bf16.mxu0 0
  %884 = vmatpush1.bf16.msra.mxu0 0
  %885 = vmatprep.subr.bf16.mxu0 0
  %886 = vmatpush1.bf16.msra.mxu0 0
  %887 = vmatprep.subr.bf16.mxu0 0
  %888 = vmatpush1.bf16.msra.mxu0 0
  %889 = vmatprep.subr.bf16.mxu0 0
  %890 = vmatpush1.bf16.msra.mxu0 0
  %891 = vmatprep.subr.bf16.mxu0 0
  %892 = vmatpush1.bf16.msra.mxu0 0
  %893 = vmatprep.subr.bf16.mxu0 0
  %894 = vmatpush1.bf16.msra.mxu0 0
  %895 = vmatprep.subr.bf16.mxu0 0
  %896 = vmatpush1.bf16.msra.mxu0 0
  %897 = vmatprep.subr.bf16.mxu0 0
  %898 = vmatpush1.bf16.msra.mxu0 0
  %899 = vmatprep.subr.bf16.mxu0 0
  %900 = vmatpush1.bf16.msra.mxu0 0
  %901 = vmatprep.subr.bf16.mxu0 0
  %902 = vmatpush1.bf16.msra.mxu0 0
  %903 = vmatprep.mubr.bf16.mxu0 0
  %904 = vmatmul.mubr.bf16.gmra.mrb[0].mxu0 %v783
  %v905 = vpop.f32.mrb[0].mxu0
  %v906 = vadd.f32 0.0, %v905
  %v907 = vpop.f32.mrb[0].mxu0
  %v908 = vadd.f32 0.0, %v907
  %v909 = vpop.f32.mrb[0].mxu0
  %v910 = vadd.f32 0.0, %v909
  %v911 = vpop.f32.mrb[0].mxu0
  %v912 = vadd.f32 0.0, %v911
  %913 = vdwg.mxu0
  %v914 = vadd.f32 %v738, %v820
  %v915 = vadd.f32 %v739, %v822
  %v916 = vadd.f32 %v740, %v863
  %v917 = vadd.f32 %v741, %v865
  %v918 = vadd.f32 %v742, %v906
  %v919 = vadd.f32 %v743, %v908
  %v920 = vadd.f32 %v744, %v824
  %v921 = vadd.f32 %v745, %v826
  %v922 = vadd.f32 %v746, %v867
  %v923 = vadd.f32 %v747, %v869
  %v924 = vadd.f32 %v748, %v910
  %v925 = vadd.f32 %v749, %v912
  %s926 = scalar_lea.vmem %s2, 32
  %v927 = vld [vmem:[%s926] sm:$0xf]
  %v928 = vld [vmem:[%s926 + $0x4] sm:$0xf]
  %v931 = vunpack.c.l.b16 %v927
  %v932 = vunpack.c.l.b16 %v928
  %v933 = vpack.c.b16 %v932, %v931
  %934 = vrot.lane.b32.xlu0 %v241, 109
  %v935 = vpop.permute.xlu0 %934
  %936 = vrot.lane.b32.xlu0 %v242, 109
  %v937 = vpop.permute.xlu0 %936
  %938 = vrot.lane.b32.xlu0 %v243, 109
  %v939 = vpop.permute.xlu0 %938
  %940 = vrot.lane.b32.xlu0 %v244, 109
  %v941 = vpop.permute.xlu0 %940
  %942 = vrot.lane.b32.xlu0 %v245, 109
  %v943 = vpop.permute.xlu0 %942
  %944 = vrot.lane.b32.xlu0 %v246, 109
  %v945 = vpop.permute.xlu0 %944
  %vm946 = vcmask 891904
  %v947 = vsel %vm946, %v935, %v937
  %v948 = vsel %vm946, %v937, %v939
  %v949 = vsel %vm946, %v939, %v941
  %v950 = vsel %vm946, %v941, %v943
  %v951 = vsel %vm946, %v943, %v945
  %v959 = vsel %vm253, %v933, 0
  %961 = vmatprep.subr.bf16.mxu0 %v948
  %962 = vmatpush1.bf16.msra.mxu0 %v947
  %963 = vmatprep.subr.bf16.mxu0 0
  %964 = vmatpush1.bf16.msra.mxu0 0
  %965 = vmatprep.subr.bf16.mxu0 0
  %966 = vmatpush1.bf16.msra.mxu0 0
  %967 = vmatprep.subr.bf16.mxu0 0
  %968 = vmatpush1.bf16.msra.mxu0 0
  %969 = vmatprep.subr.bf16.mxu0 0
  %970 = vmatpush1.bf16.msra.mxu0 0
  %971 = vmatprep.subr.bf16.mxu0 0
  %972 = vmatpush1.bf16.msra.mxu0 0
  %973 = vmatprep.subr.bf16.mxu0 0
  %974 = vmatpush1.bf16.msra.mxu0 0
  %975 = vmatprep.subr.bf16.mxu0 0
  %976 = vmatpush1.bf16.msra.mxu0 0
  %977 = vmatprep.subr.bf16.mxu0 0
  %978 = vmatpush1.bf16.msra.mxu0 0
  %979 = vmatprep.subr.bf16.mxu0 0
  %980 = vmatpush1.bf16.msra.mxu0 0
  %981 = vmatprep.subr.bf16.mxu0 0
  %982 = vmatpush1.bf16.msra.mxu0 0
  %983 = vmatprep.subr.bf16.mxu0 0
  %984 = vmatpush1.bf16.msra.mxu0 0
  %985 = vmatprep.subr.bf16.mxu0 0
  %986 = vmatpush1.bf16.msra.mxu0 0
  %987 = vmatprep.subr.bf16.mxu0 0
  %988 = vmatpush1.bf16.msra.mxu0 0
  %989 = vmatprep.subr.bf16.mxu0 0
  %990 = vmatpush1.bf16.msra.mxu0 0
  %991 = vmatprep.subr.bf16.mxu0 0
  %992 = vmatpush1.bf16.msra.mxu0 0
  %993 = vmatprep.mubr.bf16.mxu0 0
  %994 = vmatmul.mubr.bf16.gmra.mrb[0].mxu0 %v959
  %v995 = vpop.f32.mrb[0].mxu0
  %v996 = vadd.f32 0.0, %v995
  %v997 = vpop.f32.mrb[0].mxu0
  %v998 = vadd.f32 0.0, %v997
  %v999 = vpop.f32.mrb[0].mxu0
  %v1000 = vadd.f32 0.0, %v999
  %v1001 = vpop.f32.mrb[0].mxu0
  %v1002 = vadd.f32 0.0, %v1001
  %1003 = vdwg.mxu0
  %1004 = vmatprep.subr.bf16.mxu0 %v950
  %1005 = vmatpush1.bf16.msra.mxu0 %v949
  %1006 = vmatprep.subr.bf16.mxu0 0
  %1007 = vmatpush1.bf16.msra.mxu0 0
  %1008 = vmatprep.subr.bf16.mxu0 0
  %1009 = vmatpush1.bf16.msra.mxu0 0
  %1010 = vmatprep.subr.bf16.mxu0 0
  %1011 = vmatpush1.bf16.msra.mxu0 0
  %1012 = vmatprep.subr.bf16.mxu0 0
  %1013 = vmatpush1.bf16.msra.mxu0 0
  %1014 = vmatprep.subr.bf16.mxu0 0
  %1015 = vmatpush1.bf16.msra.mxu0 0
  %1016 = vmatprep.subr.bf16.mxu0 0
  %1017 = vmatpush1.bf16.msra.mxu0 0
  %1018 = vmatprep.subr.bf16.mxu0 0
  %1019 = vmatpush1.bf16.msra.mxu0 0
  %1020 = vmatprep.subr.bf16.mxu0 0
  %1021 = vmatpush1.bf16.msra.mxu0 0
  %1022 = vmatprep.subr.bf16.mxu0 0
  %1023 = vmatpush1.bf16.msra.mxu0 0
  %1024 = vmatprep.subr.bf16.mxu0 0
  %1025 = vmatpush1.bf16.msra.mxu0 0
  %1026 = vmatprep.subr.bf16.mxu0 0
  %1027 = vmatpush1.bf16.msra.mxu0 0
  %1028 = vmatprep.subr.bf16.mxu0 0
  %1029 = vmatpush1.bf16.msra.mxu0 0
  %1030 = vmatprep.subr.bf16.mxu0 0
  %1031 = vmatpush1.bf16.msra.mxu0 0
  %1032 = vmatprep.subr.bf16.mxu0 0
  %1033 = vmatpush1.bf16.msra.mxu0 0
  %1034 = vmatprep.subr.bf16.mxu0 0
  %1035 = vmatpush1.bf16.msra.mxu0 0
  %1036 = vmatprep.mubr.bf16.mxu0 0
  %1037 = vmatmul.mubr.bf16.gmra.mrb[0].mxu0 %v959
  %v1038 = vpop.f32.mrb[0].mxu0
  %v1039 = vadd.f32 0.0, %v1038
  %v1040 = vpop.f32.mrb[0].mxu0
  %v1041 = vadd.f32 0.0, %v1040
  %v1042 = vpop.f32.mrb[0].mxu0
  %v1043 = vadd.f32 0.0, %v1042
  %v1044 = vpop.f32.mrb[0].mxu0
  %v1045 = vadd.f32 0.0, %v1044
  %1046 = vdwg.mxu0
  %1047 = vmatprep.subr.bf16.mxu0 %v945
  %1048 = vmatpush1.bf16.msra.mxu0 %v951
  %1049 = vmatprep.subr.bf16.mxu0 0
  %1050 = vmatpush1.bf16.msra.mxu0 0
  %1051 = vmatprep.subr.bf16.mxu0 0
  %1052 = vmatpush1.bf16.msra.mxu0 0
  %1053 = vmatprep.subr.bf16.mxu0 0
  %1054 = vmatpush1.bf16.msra.mxu0 0
  %1055 = vmatprep.subr.bf16.mxu0 0
  %1056 = vmatpush1.bf16.msra.mxu0 0
  %1057 = vmatprep.subr.bf16.mxu0 0
  %1058 = vmatpush1.bf16.msra.mxu0 0
  %1059 = vmatprep.subr.bf16.mxu0 0
  %1060 = vmatpush1.bf16.msra.mxu0 0
  %1061 = vmatprep.subr.bf16.mxu0 0
  %1062 = vmatpush1.bf16.msra.mxu0 0
  %1063 = vmatprep.subr.bf16.mxu0 0
  %1064 = vmatpush1.bf16.msra.mxu0 0
  %1065 = vmatprep.subr.bf16.mxu0 0
  %1066 = vmatpush1.bf16.msra.mxu0 0
  %1067 = vmatprep.subr.bf16.mxu0 0
  %1068 = vmatpush1.bf16.msra.mxu0 0
  %1069 = vmatprep.subr.bf16.mxu0 0
  %1070 = vmatpush1.bf16.msra.mxu0 0
  %1071 = vmatprep.subr.bf16.mxu0 0
  %1072 = vmatpush1.bf16.msra.mxu0 0
  %1073 = vmatprep.subr.bf16.mxu0 0
  %1074 = vmatpush1.bf16.msra.mxu0 0
  %1075 = vmatprep.subr.bf16.mxu0 0
  %1076 = vmatpush1.bf16.msra.mxu0 0
  %1077 = vmatprep.subr.bf16.mxu0 0
  %1078 = vmatpush1.bf16.msra.mxu0 0
  %1079 = vmatprep.mubr.bf16.mxu0 0
  %1080 = vmatmul.mubr.bf16.gmra.mrb[0].mxu0 %v959
  %v1081 = vpop.f32.mrb[0].mxu0
  %v1082 = vadd.f32 0.0, %v1081
  %v1083 = vpop.f32.mrb[0].mxu0
  %v1084 = vadd.f32 0.0, %v1083
  %v1085 = vpop.f32.mrb[0].mxu0
  %v1086 = vadd.f32 0.0, %v1085
  %v1087 = vpop.f32.mrb[0].mxu0
  %v1088 = vadd.f32 0.0, %v1087
  %1089 = vdwg.mxu0
  %v1090 = vadd.f32 %v914, %v996
  %v1091 = vadd.f32 %v915, %v998
  %v1092 = vadd.f32 %v916, %v1039
  %v1093 = vadd.f32 %v917, %v1041
  %v1094 = vadd.f32 %v918, %v1082
  %v1095 = vadd.f32 %v919, %v1084
  %v1096 = vadd.f32 %v920, %v1000
  %v1097 = vadd.f32 %v921, %v1002
  %v1098 = vadd.f32 %v922, %v1043
  %v1099 = vadd.f32 %v923, %v1045
  %v1100 = vadd.f32 %v924, %v1086
  %v1101 = vadd.f32 %v925, %v1088
  %s1102 = scalar_lea.vmem %s2, 40
  %v1103 = vld [vmem:[%s1102] sm:$0xf]
  %v1104 = vld [vmem:[%s1102 + $0x4] sm:$0xf]
  %v1107 = vunpack.c.l.b16 %v1103
  %v1108 = vunpack.c.l.b16 %v1104
  %v1109 = vpack.c.b16 %v1108, %v1107
  %1110 = vrot.lane.b32.xlu0 %v241, 108
  %v1111 = vpop.permute.xlu0 %1110
  %1112 = vrot.lane.b32.xlu0 %v242, 108
  %v1113 = vpop.permute.xlu0 %1112
  %1114 = vrot.lane.b32.xlu0 %v243, 108
  %v1115 = vpop.permute.xlu0 %1114
  %1116 = vrot.lane.b32.xlu0 %v244, 108
  %v1117 = vpop.permute.xlu0 %1116
  %1118 = vrot.lane.b32.xlu0 %v245, 108
  %v1119 = vpop.permute.xlu0 %1118
  %1120 = vrot.lane.b32.xlu0 %v246, 108
  %v1121 = vpop.permute.xlu0 %1120
  %vm1122 = vcmask 883712
  %v1123 = vsel %vm1122, %v1111, %v1113
  %v1124 = vsel %vm1122, %v1113, %v1115
  %v1125 = vsel %vm1122, %v1115, %v1117
  %v1126 = vsel %vm1122, %v1117, %v1119
  %v1127 = vsel %vm1122, %v1119, %v1121
  %v1135 = vsel %vm253, %v1109, 0
  %1137 = vmatprep.subr.bf16.mxu0 %v1124
  %1138 = vmatpush1.bf16.msra.mxu0 %v1123
  %1139 = vmatprep.subr.bf16.mxu0 0
  %1140 = vmatpush1.bf16.msra.mxu0 0
  %1141 = vmatprep.subr.bf16.mxu0 0
  %1142 = vmatpush1.bf16.msra.mxu0 0
  %1143 = vmatprep.subr.bf16.mxu0 0
  %1144 = vmatpush1.bf16.msra.mxu0 0
  %1145 = vmatprep.subr.bf16.mxu0 0
  %1146 = vmatpush1.bf16.msra.mxu0 0
  %1147 = vmatprep.subr.bf16.mxu0 0
  %1148 = vmatpush1.bf16.msra.mxu0 0
  %1149 = vmatprep.subr.bf16.mxu0 0
  %1150 = vmatpush1.bf16.msra.mxu0 0
  %1151 = vmatprep.subr.bf16.mxu0 0
  %1152 = vmatpush1.bf16.msra.mxu0 0
  %1153 = vmatprep.subr.bf16.mxu0 0
  %1154 = vmatpush1.bf16.msra.mxu0 0
  %1155 = vmatprep.subr.bf16.mxu0 0
  %1156 = vmatpush1.bf16.msra.mxu0 0
  %1157 = vmatprep.subr.bf16.mxu0 0
  %1158 = vmatpush1.bf16.msra.mxu0 0
  %1159 = vmatprep.subr.bf16.mxu0 0
  %1160 = vmatpush1.bf16.msra.mxu0 0
  %1161 = vmatprep.subr.bf16.mxu0 0
  %1162 = vmatpush1.bf16.msra.mxu0 0
  %1163 = vmatprep.subr.bf16.mxu0 0
  %1164 = vmatpush1.bf16.msra.mxu0 0
  %1165 = vmatprep.subr.bf16.mxu0 0
  %1166 = vmatpush1.bf16.msra.mxu0 0
  %1167 = vmatprep.subr.bf16.mxu0 0
  %1168 = vmatpush1.bf16.msra.mxu0 0
  %1169 = vmatprep.mubr.bf16.mxu0 0
  %1170 = vmatmul.mubr.bf16.gmra.mrb[0].mxu0 %v1135
  %v1171 = vpop.f32.mrb[0].mxu0
  %v1172 = vadd.f32 0.0, %v1171
  %v1173 = vpop.f32.mrb[0].mxu0
  %v1174 = vadd.f32 0.0, %v1173
  %v1175 = vpop.f32.mrb[0].mxu0
  %v1176 = vadd.f32 0.0, %v1175
  %v1177 = vpop.f32.mrb[0].mxu0
  %v1178 = vadd.f32 0.0, %v1177
  %1179 = vdwg.mxu0
  %1180 = vmatprep.subr.bf16.mxu0 %v1126
  %1181 = vmatpush1.bf16.msra.mxu0 %v1125
  %1182 = vmatprep.subr.bf16.mxu0 0
  %1183 = vmatpush1.bf16.msra.mxu0 0
  %1184 = vmatprep.subr.bf16.mxu0 0
  %1185 = vmatpush1.bf16.msra.mxu0 0
  %1186 = vmatprep.subr.bf16.mxu0 0
  %1187 = vmatpush1.bf16.msra.mxu0 0
  %1188 = vmatprep.subr.bf16.mxu0 0
  %1189 = vmatpush1.bf16.msra.mxu0 0
  %1190 = vmatprep.subr.bf16.mxu0 0
  %1191 = vmatpush1.bf16.msra.mxu0 0
  %1192 = vmatprep.subr.bf16.mxu0 0
  %1193 = vmatpush1.bf16.msra.mxu0 0
  %1194 = vmatprep.subr.bf16.mxu0 0
  %1195 = vmatpush1.bf16.msra.mxu0 0
  %1196 = vmatprep.subr.bf16.mxu0 0
  %1197 = vmatpush1.bf16.msra.mxu0 0
  %1198 = vmatprep.subr.bf16.mxu0 0
  %1199 = vmatpush1.bf16.msra.mxu0 0
  %1200 = vmatprep.subr.bf16.mxu0 0
  %1201 = vmatpush1.bf16.msra.mxu0 0
  %1202 = vmatprep.subr.bf16.mxu0 0
  %1203 = vmatpush1.bf16.msra.mxu0 0
  %1204 = vmatprep.subr.bf16.mxu0 0
  %1205 = vmatpush1.bf16.msra.mxu0 0
  %1206 = vmatprep.subr.bf16.mxu0 0
  %1207 = vmatpush1.bf16.msra.mxu0 0
  %1208 = vmatprep.subr.bf16.mxu0 0
  %1209 = vmatpush1.bf16.msra.mxu0 0
  %1210 = vmatprep.subr.bf16.mxu0 0
  %1211 = vmatpush1.bf16.msra.mxu0 0
  %1212 = vmatprep.mubr.bf16.mxu0 0
  %1213 = vmatmul.mubr.bf16.gmra.mrb[0].mxu0 %v1135
  %v1214 = vpop.f32.mrb[0].mxu0
  %v1215 = vadd.f32 0.0, %v1214
  %v1216 = vpop.f32.mrb[0].mxu0
  %v1217 = vadd.f32 0.0, %v1216
  %v1218 = vpop.f32.mrb[0].mxu0
  %v1219 = vadd.f32 0.0, %v1218
  %v1220 = vpop.f32.mrb[0].mxu0
  %v1221 = vadd.f32 0.0, %v1220
  %1222 = vdwg.mxu0
  %1223 = vmatprep.subr.bf16.mxu0 %v1121
  %1224 = vmatpush1.bf16.msra.mxu0 %v1127
  %1225 = vmatprep.subr.bf16.mxu0 0
  %1226 = vmatpush1.bf16.msra.mxu0 0
  %1227 = vmatprep.subr.bf16.mxu0 0
  %1228 = vmatpush1.bf16.msra.mxu0 0
  %1229 = vmatprep.subr.bf16.mxu0 0
  %1230 = vmatpush1.bf16.msra.mxu0 0
  %1231 = vmatprep.subr.bf16.mxu0 0
  %1232 = vmatpush1.bf16.msra.mxu0 0
  %1233 = vmatprep.subr.bf16.mxu0 0
  %1234 = vmatpush1.bf16.msra.mxu0 0
  %1235 = vmatprep.subr.bf16.mxu0 0
  %1236 = vmatpush1.bf16.msra.mxu0 0
  %1237 = vmatprep.subr.bf16.mxu0 0
  %1238 = vmatpush1.bf16.msra.mxu0 0
  %1239 = vmatprep.subr.bf16.mxu0 0
  %1240 = vmatpush1.bf16.msra.mxu0 0
  %1241 = vmatprep.subr.bf16.mxu0 0
  %1242 = vmatpush1.bf16.msra.mxu0 0
  %1243 = vmatprep.subr.bf16.mxu0 0
  %1244 = vmatpush1.bf16.msra.mxu0 0
  %1245 = vmatprep.subr.bf16.mxu0 0
  %1246 = vmatpush1.bf16.msra.mxu0 0
  %1247 = vmatprep.subr.bf16.mxu0 0
  %1248 = vmatpush1.bf16.msra.mxu0 0
  %1249 = vmatprep.subr.bf16.mxu0 0
  %1250 = vmatpush1.bf16.msra.mxu0 0
  %1251 = vmatprep.subr.bf16.mxu0 0
  %1252 = vmatpush1.bf16.msra.mxu0 0
  %1253 = vmatprep.subr.bf16.mxu0 0
  %1254 = vmatpush1.bf16.msra.mxu0 0
  %1255 = vmatprep.mubr.bf16.mxu0 0
  %1256 = vmatmul.mubr.bf16.gmra.mrb[0].mxu0 %v1135
  %v1257 = vpop.f32.mrb[0].mxu0
  %v1258 = vadd.f32 0.0, %v1257
  %v1259 = vpop.f32.mrb[0].mxu0
  %v1260 = vadd.f32 0.0, %v1259
  %v1261 = vpop.f32.mrb[0].mxu0
  %v1262 = vadd.f32 0.0, %v1261
  %v1263 = vpop.f32.mrb[0].mxu0
  %v1264 = vadd.f32 0.0, %v1263
  %1265 = vdwg.mxu0
  %v1266 = vadd.f32 %v1090, %v1172
  %v1267 = vadd.f32 %v1091, %v1174
  %v1268 = vadd.f32 %v1092, %v1215
  %v1269 = vadd.f32 %v1093, %v1217
  %v1270 = vadd.f32 %v1094, %v1258
  %v1271 = vadd.f32 %v1095, %v1260
  %v1272 = vadd.f32 %v1096, %v1176
  %v1273 = vadd.f32 %v1097, %v1178
  %v1274 = vadd.f32 %v1098, %v1219
  %v1275 = vadd.f32 %v1099, %v1221
  %v1276 = vadd.f32 %v1100, %v1262
  %v1277 = vadd.f32 %v1101, %v1264
  %s1278 = scalar_lea.vmem %s2, 48
  %v1279 = vld [vmem:[%s1278] sm:$0xf]
  %v1280 = vld [vmem:[%s1278 + $0x4] sm:$0xf]
  %v1283 = vunpack.c.l.b16 %v1279
  %v1284 = vunpack.c.l.b16 %v1280
  %v1285 = vpack.c.b16 %v1284, %v1283
  %1286 = vrot.lane.b32.xlu0 %v241, 92
  %v1287 = vpop.permute.xlu0 %1286
  %1288 = vrot.lane.b32.xlu0 %v242, 92
  %v1289 = vpop.permute.xlu0 %1288
  %1290 = vrot.lane.b32.xlu0 %v243, 92
  %v1291 = vpop.permute.xlu0 %1290
  %1292 = vrot.lane.b32.xlu0 %v244, 92
  %v1293 = vpop.permute.xlu0 %1292
  %1294 = vrot.lane.b32.xlu0 %v245, 92
  %v1295 = vpop.permute.xlu0 %1294
  %1296 = vrot.lane.b32.xlu0 %v246, 92
  %v1297 = vpop.permute.xlu0 %1296
  %vm1298 = vcmask 752640
  %v1299 = vsel %vm1298, %v1287, %v1289
  %v1300 = vsel %vm1298, %v1289, %v1291
  %v1301 = vsel %vm1298, %v1291, %v1293
  %v1302 = vsel %vm1298, %v1293, %v1295
  %v1303 = vsel %vm1298, %v1295, %v1297
  %v1311 = vsel %vm253, %v1285, 0
  %1313 = vmatprep.subr.bf16.mxu0 %v1300
  %1314 = vmatpush1.bf16.msra.mxu0 %v1299
  %1315 = vmatprep.subr.bf16.mxu0 0
  %1316 = vmatpush1.bf16.msra.mxu0 0
  %1317 = vmatprep.subr.bf16.mxu0 0
  %1318 = vmatpush1.bf16.msra.mxu0 0
  %1319 = vmatprep.subr.bf16.mxu0 0
  %1320 = vmatpush1.bf16.msra.mxu0 0
  %1321 = vmatprep.subr.bf16.mxu0 0
  %1322 = vmatpush1.bf16.msra.mxu0 0
  %1323 = vmatprep.subr.bf16.mxu0 0
  %1324 = vmatpush1.bf16.msra.mxu0 0
  %1325 = vmatprep.subr.bf16.mxu0 0
  %1326 = vmatpush1.bf16.msra.mxu0 0
  %1327 = vmatprep.subr.bf16.mxu0 0
  %1328 = vmatpush1.bf16.msra.mxu0 0
  %1329 = vmatprep.subr.bf16.mxu0 0
  %1330 = vmatpush1.bf16.msra.mxu0 0
  %1331 = vmatprep.subr.bf16.mxu0 0
  %1332 = vmatpush1.bf16.msra.mxu0 0
  %1333 = vmatprep.subr.bf16.mxu0 0
  %1334 = vmatpush1.bf16.msra.mxu0 0
  %1335 = vmatprep.subr.bf16.mxu0 0
  %1336 = vmatpush1.bf16.msra.mxu0 0
  %1337 = vmatprep.subr.bf16.mxu0 0
  %1338 = vmatpush1.bf16.msra.mxu0 0
  %1339 = vmatprep.subr.bf16.mxu0 0
  %1340 = vmatpush1.bf16.msra.mxu0 0
  %1341 = vmatprep.subr.bf16.mxu0 0
  %1342 = vmatpush1.bf16.msra.mxu0 0
  %1343 = vmatprep.subr.bf16.mxu0 0
  %1344 = vmatpush1.bf16.msra.mxu0 0
  %1345 = vmatprep.mubr.bf16.mxu0 0
  %1346 = vmatmul.mubr.bf16.gmra.mrb[0].mxu0 %v1311
  %v1347 = vpop.f32.mrb[0].mxu0
  %v1348 = vadd.f32 0.0, %v1347
  %v1349 = vpop.f32.mrb[0].mxu0
  %v1350 = vadd.f32 0.0, %v1349
  %v1351 = vpop.f32.mrb[0].mxu0
  %v1352 = vadd.f32 0.0, %v1351
  %v1353 = vpop.f32.mrb[0].mxu0
  %v1354 = vadd.f32 0.0, %v1353
  %1355 = vdwg.mxu0
  %1356 = vmatprep.subr.bf16.mxu0 %v1302
  %1357 = vmatpush1.bf16.msra.mxu0 %v1301
  %1358 = vmatprep.subr.bf16.mxu0 0
  %1359 = vmatpush1.bf16.msra.mxu0 0
  %1360 = vmatprep.subr.bf16.mxu0 0
  %1361 = vmatpush1.bf16.msra.mxu0 0
  %1362 = vmatprep.subr.bf16.mxu0 0
  %1363 = vmatpush1.bf16.msra.mxu0 0
  %1364 = vmatprep.subr.bf16.mxu0 0
  %1365 = vmatpush1.bf16.msra.mxu0 0
  %1366 = vmatprep.subr.bf16.mxu0 0
  %1367 = vmatpush1.bf16.msra.mxu0 0
  %1368 = vmatprep.subr.bf16.mxu0 0
  %1369 = vmatpush1.bf16.msra.mxu0 0
  %1370 = vmatprep.subr.bf16.mxu0 0
  %1371 = vmatpush1.bf16.msra.mxu0 0
  %1372 = vmatprep.subr.bf16.mxu0 0
  %1373 = vmatpush1.bf16.msra.mxu0 0
  %1374 = vmatprep.subr.bf16.mxu0 0
  %1375 = vmatpush1.bf16.msra.mxu0 0
  %1376 = vmatprep.subr.bf16.mxu0 0
  %1377 = vmatpush1.bf16.msra.mxu0 0
  %1378 = vmatprep.subr.bf16.mxu0 0
  %1379 = vmatpush1.bf16.msra.mxu0 0
  %1380 = vmatprep.subr.bf16.mxu0 0
  %1381 = vmatpush1.bf16.msra.mxu0 0
  %1382 = vmatprep.subr.bf16.mxu0 0
  %1383 = vmatpush1.bf16.msra.mxu0 0
  %1384 = vmatprep.subr.bf16.mxu0 0
  %1385 = vmatpush1.bf16.msra.mxu0 0
  %1386 = vmatprep.subr.bf16.mxu0 0
  %1387 = vmatpush1.bf16.msra.mxu0 0
  %1388 = vmatprep.mubr.bf16.mxu0 0
  %1389 = vmatmul.mubr.bf16.gmra.mrb[0].mxu0 %v1311
  %v1390 = vpop.f32.mrb[0].mxu0
  %v1391 = vadd.f32 0.0, %v1390
  %v1392 = vpop.f32.mrb[0].mxu0
  %v1393 = vadd.f32 0.0, %v1392
  %v1394 = vpop.f32.mrb[0].mxu0
  %v1395 = vadd.f32 0.0, %v1394
  %v1396 = vpop.f32.mrb[0].mxu0
  %v1397 = vadd.f32 0.0, %v1396
  %1398 = vdwg.mxu0
  %1399 = vmatprep.subr.bf16.mxu0 %v1297
  %1400 = vmatpush1.bf16.msra.mxu0 %v1303
  %1401 = vmatprep.subr.bf16.mxu0 0
  %1402 = vmatpush1.bf16.msra.mxu0 0
  %1403 = vmatprep.subr.bf16.mxu0 0
  %1404 = vmatpush1.bf16.msra.mxu0 0
  %1405 = vmatprep.subr.bf16.mxu0 0
  %1406 = vmatpush1.bf16.msra.mxu0 0
  %1407 = vmatprep.subr.bf16.mxu0 0
  %1408 = vmatpush1.bf16.msra.mxu0 0
  %1409 = vmatprep.subr.bf16.mxu0 0
  %1410 = vmatpush1.bf16.msra.mxu0 0
  %1411 = vmatprep.subr.bf16.mxu0 0
  %1412 = vmatpush1.bf16.msra.mxu0 0
  %1413 = vmatprep.subr.bf16.mxu0 0
  %1414 = vmatpush1.bf16.msra.mxu0 0
  %1415 = vmatprep.subr.bf16.mxu0 0
  %1416 = vmatpush1.bf16.msra.mxu0 0
  %1417 = vmatprep.subr.bf16.mxu0 0
  %1418 = vmatpush1.bf16.msra.mxu0 0
  %1419 = vmatprep.subr.bf16.mxu0 0
  %1420 = vmatpush1.bf16.msra.mxu0 0
  %1421 = vmatprep.subr.bf16.mxu0 0
  %1422 = vmatpush1.bf16.msra.mxu0 0
  %1423 = vmatprep.subr.bf16.mxu0 0
  %1424 = vmatpush1.bf16.msra.mxu0 0
  %1425 = vmatprep.subr.bf16.mxu0 0
  %1426 = vmatpush1.bf16.msra.mxu0 0
  %1427 = vmatprep.subr.bf16.mxu0 0
  %1428 = vmatpush1.bf16.msra.mxu0 0
  %1429 = vmatprep.subr.bf16.mxu0 0
  %1430 = vmatpush1.bf16.msra.mxu0 0
  %1431 = vmatprep.mubr.bf16.mxu0 0
  %1432 = vmatmul.mubr.bf16.gmra.mrb[0].mxu0 %v1311
  %v1433 = vpop.f32.mrb[0].mxu0
  %v1434 = vadd.f32 0.0, %v1433
  %v1435 = vpop.f32.mrb[0].mxu0
  %v1436 = vadd.f32 0.0, %v1435
  %v1437 = vpop.f32.mrb[0].mxu0
  %v1438 = vadd.f32 0.0, %v1437
  %v1439 = vpop.f32.mrb[0].mxu0
  %v1440 = vadd.f32 0.0, %v1439
  %1441 = vdwg.mxu0
  %v1442 = vadd.f32 %v1266, %v1348
  %v1443 = vadd.f32 %v1267, %v1350
  %v1444 = vadd.f32 %v1268, %v1391
  %v1445 = vadd.f32 %v1269, %v1393
  %v1446 = vadd.f32 %v1270, %v1434
  %v1447 = vadd.f32 %v1271, %v1436
  %v1448 = vadd.f32 %v1272, %v1352
  %v1449 = vadd.f32 %v1273, %v1354
  %v1450 = vadd.f32 %v1274, %v1395
  %v1451 = vadd.f32 %v1275, %v1397
  %v1452 = vadd.f32 %v1276, %v1438
  %v1453 = vadd.f32 %v1277, %v1440
  %s1454 = scalar_lea.vmem %s2, 56
  %v1455 = vld [vmem:[%s1454] sm:$0xf]
  %v1456 = vld [vmem:[%s1454 + $0x4] sm:$0xf]
  %v1459 = vunpack.c.l.b16 %v1455
  %v1460 = vunpack.c.l.b16 %v1456
  %v1461 = vpack.c.b16 %v1460, %v1459
  %1462 = vrot.lane.b32.xlu0 %v241, 91
  %v1463 = vpop.permute.xlu0 %1462
  %1464 = vrot.lane.b32.xlu0 %v242, 91
  %v1465 = vpop.permute.xlu0 %1464
  %1466 = vrot.lane.b32.xlu0 %v243, 91
  %v1467 = vpop.permute.xlu0 %1466
  %1468 = vrot.lane.b32.xlu0 %v244, 91
  %v1469 = vpop.permute.xlu0 %1468
  %1470 = vrot.lane.b32.xlu0 %v245, 91
  %v1471 = vpop.permute.xlu0 %1470
  %1472 = vrot.lane.b32.xlu0 %v246, 91
  %v1473 = vpop.permute.xlu0 %1472
  %vm1474 = vcmask 744448
  %v1475 = vsel %vm1474, %v1463, %v1465
  %v1476 = vsel %vm1474, %v1465, %v1467
  %v1477 = vsel %vm1474, %v1467, %v1469
  %v1478 = vsel %vm1474, %v1469, %v1471
  %v1479 = vsel %vm1474, %v1471, %v1473
  %v1487 = vsel %vm253, %v1461, 0
  %1489 = vmatprep.subr.bf16.mxu0 %v1476
  %1490 = vmatpush1.bf16.msra.mxu0 %v1475
  %1491 = vmatprep.subr.bf16.mxu0 0
  %1492 = vmatpush1.bf16.msra.mxu0 0
  %1493 = vmatprep.subr.bf16.mxu0 0
  %1494 = vmatpush1.bf16.msra.mxu0 0
  %1495 = vmatprep.subr.bf16.mxu0 0
  %1496 = vmatpush1.bf16.msra.mxu0 0
  %1497 = vmatprep.subr.bf16.mxu0 0
  %1498 = vmatpush1.bf16.msra.mxu0 0
  %1499 = vmatprep.subr.bf16.mxu0 0
  %1500 = vmatpush1.bf16.msra.mxu0 0
  %1501 = vmatprep.subr.bf16.mxu0 0
  %1502 = vmatpush1.bf16.msra.mxu0 0
  %1503 = vmatprep.subr.bf16.mxu0 0
  %1504 = vmatpush1.bf16.msra.mxu0 0
  %1505 = vmatprep.subr.bf16.mxu0 0
  %1506 = vmatpush1.bf16.msra.mxu0 0
  %1507 = vmatprep.subr.bf16.mxu0 0
  %1508 = vmatpush1.bf16.msra.mxu0 0
  %1509 = vmatprep.subr.bf16.mxu0 0
  %1510 = vmatpush1.bf16.msra.mxu0 0
  %1511 = vmatprep.subr.bf16.mxu0 0
  %1512 = vmatpush1.bf16.msra.mxu0 0
  %1513 = vmatprep.subr.bf16.mxu0 0
  %1514 = vmatpush1.bf16.msra.mxu0 0
  %1515 = vmatprep.subr.bf16.mxu0 0
  %1516 = vmatpush1.bf16.msra.mxu0 0
  %1517 = vmatprep.subr.bf16.mxu0 0
  %1518 = vmatpush1.bf16.msra.mxu0 0
  %1519 = vmatprep.subr.bf16.mxu0 0
  %1520 = vmatpush1.bf16.msra.mxu0 0
  %1521 = vmatprep.mubr.bf16.mxu0 0
  %1522 = vmatmul.mubr.bf16.gmra.mrb[0].mxu0 %v1487
  %v1523 = vpop.f32.mrb[0].mxu0
  %v1524 = vadd.f32 0.0, %v1523
  %v1525 = vpop.f32.mrb[0].mxu0
  %v1526 = vadd.f32 0.0, %v1525
  %v1527 = vpop.f32.mrb[0].mxu0
  %v1528 = vadd.f32 0.0, %v1527
  %v1529 = vpop.f32.mrb[0].mxu0
  %v1530 = vadd.f32 0.0, %v1529
  %1531 = vdwg.mxu0
  %1532 = vmatprep.subr.bf16.mxu0 %v1478
  %1533 = vmatpush1.bf16.msra.mxu0 %v1477
  %1534 = vmatprep.subr.bf16.mxu0 0
  %1535 = vmatpush1.bf16.msra.mxu0 0
  %1536 = vmatprep.subr.bf16.mxu0 0
  %1537 = vmatpush1.bf16.msra.mxu0 0
  %1538 = vmatprep.subr.bf16.mxu0 0
  %1539 = vmatpush1.bf16.msra.mxu0 0
  %1540 = vmatprep.subr.bf16.mxu0 0
  %1541 = vmatpush1.bf16.msra.mxu0 0
  %1542 = vmatprep.subr.bf16.mxu0 0
  %1543 = vmatpush1.bf16.msra.mxu0 0
  %1544 = vmatprep.subr.bf16.mxu0 0
  %1545 = vmatpush1.bf16.msra.mxu0 0
  %1546 = vmatprep.subr.bf16.mxu0 0
  %1547 = vmatpush1.bf16.msra.mxu0 0
  %1548 = vmatprep.subr.bf16.mxu0 0
  %1549 = vmatpush1.bf16.msra.mxu0 0
  %1550 = vmatprep.subr.bf16.mxu0 0
  %1551 = vmatpush1.bf16.msra.mxu0 0
  %1552 = vmatprep.subr.bf16.mxu0 0
  %1553 = vmatpush1.bf16.msra.mxu0 0
  %1554 = vmatprep.subr.bf16.mxu0 0
  %1555 = vmatpush1.bf16.msra.mxu0 0
  %1556 = vmatprep.subr.bf16.mxu0 0
  %1557 = vmatpush1.bf16.msra.mxu0 0
  %1558 = vmatprep.subr.bf16.mxu0 0
  %1559 = vmatpush1.bf16.msra.mxu0 0
  %1560 = vmatprep.subr.bf16.mxu0 0
  %1561 = vmatpush1.bf16.msra.mxu0 0
  %1562 = vmatprep.subr.bf16.mxu0 0
  %1563 = vmatpush1.bf16.msra.mxu0 0
  %1564 = vmatprep.mubr.bf16.mxu0 0
  %1565 = vmatmul.mubr.bf16.gmra.mrb[0].mxu0 %v1487
  %v1566 = vpop.f32.mrb[0].mxu0
  %v1567 = vadd.f32 0.0, %v1566
  %v1568 = vpop.f32.mrb[0].mxu0
  %v1569 = vadd.f32 0.0, %v1568
  %v1570 = vpop.f32.mrb[0].mxu0
  %v1571 = vadd.f32 0.0, %v1570
  %v1572 = vpop.f32.mrb[0].mxu0
  %v1573 = vadd.f32 0.0, %v1572
  %1574 = vdwg.mxu0
  %1575 = vmatprep.subr.bf16.mxu0 %v1473
  %1576 = vmatpush1.bf16.msra.mxu0 %v1479
  %1577 = vmatprep.subr.bf16.mxu0 0
  %1578 = vmatpush1.bf16.msra.mxu0 0
  %1579 = vmatprep.subr.bf16.mxu0 0
  %1580 = vmatpush1.bf16.msra.mxu0 0
  %1581 = vmatprep.subr.bf16.mxu0 0
  %1582 = vmatpush1.bf16.msra.mxu0 0
  %1583 = vmatprep.subr.bf16.mxu0 0
  %1584 = vmatpush1.bf16.msra.mxu0 0
  %1585 = vmatprep.subr.bf16.mxu0 0
  %1586 = vmatpush1.bf16.msra.mxu0 0
  %1587 = vmatprep.subr.bf16.mxu0 0
  %1588 = vmatpush1.bf16.msra.mxu0 0
  %1589 = vmatprep.subr.bf16.mxu0 0
  %1590 = vmatpush1.bf16.msra.mxu0 0
  %1591 = vmatprep.subr.bf16.mxu0 0
  %1592 = vmatpush1.bf16.msra.mxu0 0
  %1593 = vmatprep.subr.bf16.mxu0 0
  %1594 = vmatpush1.bf16.msra.mxu0 0
  %1595 = vmatprep.subr.bf16.mxu0 0
  %1596 = vmatpush1.bf16.msra.mxu0 0
  %1597 = vmatprep.subr.bf16.mxu0 0
  %1598 = vmatpush1.bf16.msra.mxu0 0
  %1599 = vmatprep.subr.bf16.mxu0 0
  %1600 = vmatpush1.bf16.msra.mxu0 0
  %1601 = vmatprep.subr.bf16.mxu0 0
  %1602 = vmatpush1.bf16.msra.mxu0 0
  %1603 = vmatprep.subr.bf16.mxu0 0
  %1604 = vmatpush1.bf16.msra.mxu0 0
  %1605 = vmatprep.subr.bf16.mxu0 0
  %1606 = vmatpush1.bf16.msra.mxu0 0
  %1607 = vmatprep.mubr.bf16.mxu0 0
  %1608 = vmatmul.mubr.bf16.gmra.mrb[0].mxu0 %v1487
  %v1609 = vpop.f32.mrb[0].mxu0
  %v1610 = vadd.f32 0.0, %v1609
  %v1611 = vpop.f32.mrb[0].mxu0
  %v1612 = vadd.f32 0.0, %v1611
  %v1613 = vpop.f32.mrb[0].mxu0
  %v1614 = vadd.f32 0.0, %v1613
  %v1615 = vpop.f32.mrb[0].mxu0
  %v1616 = vadd.f32 0.0, %v1615
  %1617 = vdwg.mxu0
  %v1618 = vadd.f32 %v1442, %v1524
  %v1619 = vadd.f32 %v1443, %v1526
  %v1620 = vadd.f32 %v1444, %v1567
  %v1621 = vadd.f32 %v1445, %v1569
  %v1622 = vadd.f32 %v1446, %v1610
  %v1623 = vadd.f32 %v1447, %v1612
  %v1624 = vadd.f32 %v1448, %v1528
  %v1625 = vadd.f32 %v1449, %v1530
  %v1626 = vadd.f32 %v1450, %v1571
  %v1627 = vadd.f32 %v1451, %v1573
  %v1628 = vadd.f32 %v1452, %v1614
  %v1629 = vadd.f32 %v1453, %v1616
  %s1630 = scalar_lea.vmem %s2, 64
  %v1631 = vld [vmem:[%s1630] sm:$0xf]
  %v1632 = vld [vmem:[%s1630 + $0x4] sm:$0xf]
  %v1635 = vunpack.c.l.b16 %v1631
  %v1636 = vunpack.c.l.b16 %v1632
  %v1637 = vpack.c.b16 %v1636, %v1635
  %1638 = vrot.lane.b32.xlu0 %v241, 90
  %v1639 = vpop.permute.xlu0 %1638
  %1640 = vrot.lane.b32.xlu0 %v242, 90
  %v1641 = vpop.permute.xlu0 %1640
  %1642 = vrot.lane.b32.xlu0 %v243, 90
  %v1643 = vpop.permute.xlu0 %1642
  %1644 = vrot.lane.b32.xlu0 %v244, 90
  %v1645 = vpop.permute.xlu0 %1644
  %1646 = vrot.lane.b32.xlu0 %v245, 90
  %v1647 = vpop.permute.xlu0 %1646
  %1648 = vrot.lane.b32.xlu0 %v246, 90
  %v1649 = vpop.permute.xlu0 %1648
  %vm1650 = vcmask 736256
  %v1651 = vsel %vm1650, %v1639, %v1641
  %v1652 = vsel %vm1650, %v1641, %v1643
  %v1653 = vsel %vm1650, %v1643, %v1645
  %v1654 = vsel %vm1650, %v1645, %v1647
  %v1655 = vsel %vm1650, %v1647, %v1649
  %v1663 = vsel %vm253, %v1637, 0
  %1665 = vmatprep.subr.bf16.mxu0 %v1652
  %1666 = vmatpush1.bf16.msra.mxu0 %v1651
  %1667 = vmatprep.subr.bf16.mxu0 0
  %1668 = vmatpush1.bf16.msra.mxu0 0
  %1669 = vmatprep.subr.bf16.mxu0 0
  %1670 = vmatpush1.bf16.msra.mxu0 0
  %1671 = vmatprep.subr.bf16.mxu0 0
  %1672 = vmatpush1.bf16.msra.mxu0 0
  %1673 = vmatprep.subr.bf16.mxu0 0
  %1674 = vmatpush1.bf16.msra.mxu0 0
  %1675 = vmatprep.subr.bf16.mxu0 0
  %1676 = vmatpush1.bf16.msra.mxu0 0
  %1677 = vmatprep.subr.bf16.mxu0 0
  %1678 = vmatpush1.bf16.msra.mxu0 0
  %1679 = vmatprep.subr.bf16.mxu0 0
  %1680 = vmatpush1.bf16.msra.mxu0 0
  %1681 = vmatprep.subr.bf16.mxu0 0
  %1682 = vmatpush1.bf16.msra.mxu0 0
  %1683 = vmatprep.subr.bf16.mxu0 0
  %1684 = vmatpush1.bf16.msra.mxu0 0
  %1685 = vmatprep.subr.bf16.mxu0 0
  %1686 = vmatpush1.bf16.msra.mxu0 0
  %1687 = vmatprep.subr.bf16.mxu0 0
  %1688 = vmatpush1.bf16.msra.mxu0 0
  %1689 = vmatprep.subr.bf16.mxu0 0
  %1690 = vmatpush1.bf16.msra.mxu0 0
  %1691 = vmatprep.subr.bf16.mxu0 0
  %1692 = vmatpush1.bf16.msra.mxu0 0
  %1693 = vmatprep.subr.bf16.mxu0 0
  %1694 = vmatpush1.bf16.msra.mxu0 0
  %1695 = vmatprep.subr.bf16.mxu0 0
  %1696 = vmatpush1.bf16.msra.mxu0 0
  %1697 = vmatprep.mubr.bf16.mxu0 0
  %1698 = vmatmul.mubr.bf16.gmra.mrb[0].mxu0 %v1663
  %v1699 = vpop.f32.mrb[0].mxu0
  %v1700 = vadd.f32 0.0, %v1699
  %v1701 = vpop.f32.mrb[0].mxu0
  %v1702 = vadd.f32 0.0, %v1701
  %v1703 = vpop.f32.mrb[0].mxu0
  %v1704 = vadd.f32 0.0, %v1703
  %v1705 = vpop.f32.mrb[0].mxu0
  %v1706 = vadd.f32 0.0, %v1705
  %1707 = vdwg.mxu0
  %1708 = vmatprep.subr.bf16.mxu0 %v1654
  %1709 = vmatpush1.bf16.msra.mxu0 %v1653
  %1710 = vmatprep.subr.bf16.mxu0 0
  %1711 = vmatpush1.bf16.msra.mxu0 0
  %1712 = vmatprep.subr.bf16.mxu0 0
  %1713 = vmatpush1.bf16.msra.mxu0 0
  %1714 = vmatprep.subr.bf16.mxu0 0
  %1715 = vmatpush1.bf16.msra.mxu0 0
  %1716 = vmatprep.subr.bf16.mxu0 0
  %1717 = vmatpush1.bf16.msra.mxu0 0
  %1718 = vmatprep.subr.bf16.mxu0 0
  %1719 = vmatpush1.bf16.msra.mxu0 0
  %1720 = vmatprep.subr.bf16.mxu0 0
  %1721 = vmatpush1.bf16.msra.mxu0 0
  %1722 = vmatprep.subr.bf16.mxu0 0
  %1723 = vmatpush1.bf16.msra.mxu0 0
  %1724 = vmatprep.subr.bf16.mxu0 0
  %1725 = vmatpush1.bf16.msra.mxu0 0
  %1726 = vmatprep.subr.bf16.mxu0 0
  %1727 = vmatpush1.bf16.msra.mxu0 0
  %1728 = vmatprep.subr.bf16.mxu0 0
  %1729 = vmatpush1.bf16.msra.mxu0 0
  %1730 = vmatprep.subr.bf16.mxu0 0
  %1731 = vmatpush1.bf16.msra.mxu0 0
  %1732 = vmatprep.subr.bf16.mxu0 0
  %1733 = vmatpush1.bf16.msra.mxu0 0
  %1734 = vmatprep.subr.bf16.mxu0 0
  %1735 = vmatpush1.bf16.msra.mxu0 0
  %1736 = vmatprep.subr.bf16.mxu0 0
  %1737 = vmatpush1.bf16.msra.mxu0 0
  %1738 = vmatprep.subr.bf16.mxu0 0
  %1739 = vmatpush1.bf16.msra.mxu0 0
  %1740 = vmatprep.mubr.bf16.mxu0 0
  %1741 = vmatmul.mubr.bf16.gmra.mrb[0].mxu0 %v1663
  %v1742 = vpop.f32.mrb[0].mxu0
  %v1743 = vadd.f32 0.0, %v1742
  %v1744 = vpop.f32.mrb[0].mxu0
  %v1745 = vadd.f32 0.0, %v1744
  %v1746 = vpop.f32.mrb[0].mxu0
  %v1747 = vadd.f32 0.0, %v1746
  %v1748 = vpop.f32.mrb[0].mxu0
  %v1749 = vadd.f32 0.0, %v1748
  %1750 = vdwg.mxu0
  %1751 = vmatprep.subr.bf16.mxu0 %v1649
  %1752 = vmatpush1.bf16.msra.mxu0 %v1655
  %1753 = vmatprep.subr.bf16.mxu0 0
  %1754 = vmatpush1.bf16.msra.mxu0 0
  %1755 = vmatprep.subr.bf16.mxu0 0
  %1756 = vmatpush1.bf16.msra.mxu0 0
  %1757 = vmatprep.subr.bf16.mxu0 0
  %1758 = vmatpush1.bf16.msra.mxu0 0
  %1759 = vmatprep.subr.bf16.mxu0 0
  %1760 = vmatpush1.bf16.msra.mxu0 0
  %1761 = vmatprep.subr.bf16.mxu0 0
  %1762 = vmatpush1.bf16.msra.mxu0 0
  %1763 = vmatprep.subr.bf16.mxu0 0
  %1764 = vmatpush1.bf16.msra.mxu0 0
  %1765 = vmatprep.subr.bf16.mxu0 0
  %1766 = vmatpush1.bf16.msra.mxu0 0
  %1767 = vmatprep.subr.bf16.mxu0 0
  %1768 = vmatpush1.bf16.msra.mxu0 0
  %1769 = vmatprep.subr.bf16.mxu0 0
  %1770 = vmatpush1.bf16.msra.mxu0 0
  %1771 = vmatprep.subr.bf16.mxu0 0
  %1772 = vmatpush1.bf16.msra.mxu0 0
  %1773 = vmatprep.subr.bf16.mxu0 0
  %1774 = vmatpush1.bf16.msra.mxu0 0
  %1775 = vmatprep.subr.bf16.mxu0 0
  %1776 = vmatpush1.bf16.msra.mxu0 0
  %1777 = vmatprep.subr.bf16.mxu0 0
  %1778 = vmatpush1.bf16.msra.mxu0 0
  %1779 = vmatprep.subr.bf16.mxu0 0
  %1780 = vmatpush1.bf16.msra.mxu0 0
  %1781 = vmatprep.subr.bf16.mxu0 0
  %1782 = vmatpush1.bf16.msra.mxu0 0
  %1783 = vmatprep.mubr.bf16.mxu0 0
  %1784 = vmatmul.mubr.bf16.gmra.mrb[0].mxu0 %v1663
  %v1785 = vpop.f32.mrb[0].mxu0
  %v1786 = vadd.f32 0.0, %v1785
  %v1787 = vpop.f32.mrb[0].mxu0
  %v1788 = vadd.f32 0.0, %v1787
  %v1789 = vpop.f32.mrb[0].mxu0
  %v1790 = vadd.f32 0.0, %v1789
  %v1791 = vpop.f32.mrb[0].mxu0
  %v1792 = vadd.f32 0.0, %v1791
  %1793 = vdwg.mxu0
  %v1794 = vadd.f32 %v1618, %v1700
  %v1795 = vadd.f32 %v1619, %v1702
  %v1796 = vadd.f32 %v1620, %v1743
  %v1797 = vadd.f32 %v1621, %v1745
  %v1798 = vadd.f32 %v1622, %v1786
  %v1799 = vadd.f32 %v1623, %v1788
  %v1800 = vadd.f32 %v1624, %v1704
  %v1801 = vadd.f32 %v1625, %v1706
  %v1802 = vadd.f32 %v1626, %v1747
  %v1803 = vadd.f32 %v1627, %v1749
  %v1804 = vadd.f32 %v1628, %v1790
  %v1805 = vadd.f32 %v1629, %v1792
  %v1806 = vpack.c.bf16 %v1800, %v1794
  %v1807 = vpack.c.bf16 %v1801, %v1795
  %v1808 = vpack.c.bf16 %v1802, %v1796
  %v1809 = vpack.c.bf16 %v1803, %v1797
  %v1810 = vpack.c.bf16 %v1804, %v1798
  %v1811 = vpack.c.bf16 %v1805, %v1799
  %v1818 = vunpack.c.l.b16 %v1806
  %v1819 = vunpack.c.l.b16 %v1807
  %v1820 = vunpack.c.l.b16 %v1808
  %v1821 = vunpack.c.l.b16 %v1809
  %v1822 = vunpack.c.l.b16 %v1810
  %v1823 = vunpack.c.l.b16 %v1811
  %v1824 = vunpack.c.h.b16 %v1806
  %v1825 = vunpack.c.h.b16 %v1807
  %v1826 = vunpack.c.h.b16 %v1808
  %v1827 = vunpack.c.h.b16 %v1809
  %v1828 = vunpack.c.h.b16 %v1810
  %v1829 = vunpack.c.h.b16 %v1811
  %v1830 = vpack.c.b16 %v1819, %v1818
  %v1831 = vpack.c.b16 %v1821, %v1820
  %v1832 = vpack.c.b16 %v1823, %v1822
  %v1833 = vpack.c.b16 %v1825, %v1824
  %v1834 = vpack.c.b16 %v1827, %v1826
  %v1835 = vpack.c.b16 %v1829, %v1828
  %1842 = vst [vmem:[%s5] sm:$0xff] %v1830
  %1843 = vst [vmem:[%s5 + $0x8] sm:$0xff] %v1831
  %vm1844 = vcmask 64516
  %vm1845 = vmor %vm1844, %vm62
  %1846 = vst.msk [vmem:[%s5 + $0x10] sm:$0xff] %vm1845, %v1832
  %1847 = vst [vmem:[%s5 + $0x18] sm:$0xff] %v1833
  %1848 = vst [vmem:[%s5 + $0x20] sm:$0xff] %v1834
  %1849 = vst.msk [vmem:[%s5 + $0x28] sm:$0xff] %vm1845, %v1835
  // Predicated region
  $region22: #{resnet_block_forward.4} parent=0 // pred_check
    _
  $region23: #{resnet_block_forward.4} parent=0 // pred_check_branch
    %1851 = sbr.rel (0) target = $region25
  $region24: #{resnet_block_forward.4} parent=0 // pred_region
    _
  $region25: #{resnet_block_forward.4} parent=0 // pred_fallthru
    _
  // Predicated region
  $region26: #{resnet_block_forward.4} parent=0 // pred_check
    _
  $region27: #{resnet_block_forward.4} parent=0 // pred_check_branch
    %1853 = sbr.rel (0) target = $region29
  $region28: #{resnet_block_forward.4} parent=0 // pred_region
    _
  $region29: #{resnet_block_forward.4} parent=0 // pred_fallthru
    _

</llo_original>
